<compile_context>
chip_gen: v6e
topology: v6e:2x2x1
jax: 0.10.0
libtpu: 0.0.40
codegen_flags: <defaults>
</compile_context>

<pallas_src>
import math

import jax
import jax.numpy as jnp
from jax.experimental import pallas as pl
from jax.experimental.pallas import tpu as pltpu


# ---------------------------------------------------------------------------
# Small helpers
# ---------------------------------------------------------------------------

def _round_up(x, m):
    return ((x + m - 1) // m) * m


def _pad_rows(x, n_rows):
    pad = n_rows - x.shape[0]
    if pad == 0:
        return x
    return jnp.pad(x, ((0, pad), (0, 0)))


def _vmem_limit_bytes():
    """Portable scoped-VMEM limit: query the chip, never exceed v7x's 64 MiB."""
    phys = 64 * 1024 * 1024  # conservative default = v7x per-TensorCore VMEM
    try:
        info = pltpu.get_tpu_info()
        phys = int(getattr(info, "vmem_capacity_bytes", phys))
    except Exception:
        pass
    return max(32 << 20, min(int(phys * 0.8), 56 << 20))


# ---------------------------------------------------------------------------
# One-time parameter preparation (padding / transposes / casts hoisted here)
# ---------------------------------------------------------------------------

def _prep_gate_weight_t(w, D, Dp, cd):
    """w: (3D, D) stacked [r; z; n] (torch GRUCell). Returns (Dp, 3Dp) =
    [W_r^T | W_z^T | W_n^T], zero-padded so padded lanes contribute exactly 0."""
    blocks = []
    for g in range(3):
        wg_t = w[g * D:(g + 1) * D, :].T                      # (D_in, D_out)
        blocks.append(jnp.pad(wg_t, ((0, Dp - D), (0, Dp - D))))
    return jnp.concatenate(blocks, axis=1).astype(cd)


def _prep_gate_bias(b, D, Dp):
    b = b.reshape(3, D).astype(jnp.float32)
    b = jnp.pad(b, ((0, 0), (0, Dp - D)))
    return b.reshape(1, 3 * Dp)


def prepare_params(Wy, By, weight_ih, weight_hh, bias_ih, bias_hh,
                   *, compute_dtype=jnp.bfloat16):
    """One-time prep: persistent padded+cast Wy copy, transposed gate weights."""
    n_items, D = Wy.shape
    Dp = _round_up(D, 128)
    cd = compute_dtype
    return dict(
        Wy_cd=jnp.pad(Wy, ((0, 0), (0, Dp - D))).astype(cd),   # (n_items, Dp)
        By=By.reshape(-1).astype(jnp.float32),                 # (n_items,)
        wih_t=_prep_gate_weight_t(weight_ih, D, Dp, cd),        # (Dp, 3Dp)
        whh_t=_prep_gate_weight_t(weight_hh, D, Dp, cd),        # (Dp, 3Dp)
        bih=_prep_gate_bias(bias_ih, D, Dp),                    # (1, 3Dp) f32
        bhh=_prep_gate_bias(bias_hh, D, Dp),                    # (1, 3Dp) f32
        D=D, Dp=Dp, n_items=n_items, compute_dtype=cd,
    )


# ---------------------------------------------------------------------------
# Kernels
# ---------------------------------------------------------------------------

def gru_cell_kernel(e_ref, h_prev_ref, wih_t_ref, whh_t_ref, bih_ref, bhh_ref,
                    h_out_ref):
    """torch.nn.GRUCell (gate order r, z, n). Single whole-array invocation.

    e_ref:      (Bp, Dp)  input embeddings (compute dtype)
    h_prev_ref: (Bp, Dp)  previous hidden state (float32 -- kept f32 for the blend)
    wih_t_ref:  (Dp, 3Dp) weight_ih^T   (compute dtype)
    whh_t_ref:  (Dp, 3Dp) weight_hh^T   (compute dtype)
    bih_ref:    (1, 3Dp)  bias_ih (f32)
    bhh_ref:    (1, 3Dp)  bias_hh (f32)
    h_out_ref:  (Bp, Dp)  new hidden state (f32)
    """
    d = h_out_ref.shape[1]
    cd = wih_t_ref.dtype
    prec = jax.lax.Precision.HIGHEST if cd == jnp.float32 else None

    e = e_ref[...]
    h_prev = h_prev_ref[...]                                   # f32
    gi = jnp.dot(e, wih_t_ref[...], precision=prec,
                 preferred_element_type=jnp.float32) + bih_ref[...]
    gh = jnp.dot(h_prev.astype(cd), whh_t_ref[...], precision=prec,
                 preferred_element_type=jnp.float32) + bhh_ref[...]
    i_r, i_z, i_n = gi[:, 0:d], gi[:, d:2 * d], gi[:, 2 * d:3 * d]
    h_r, h_z, h_n = gh[:, 0:d], gh[:, d:2 * d], gh[:, 2 * d:3 * d]
    r = jax.nn.sigmoid(i_r + h_r)
    z = jax.nn.sigmoid(i_z + h_z)
    n = jnp.tanh(i_n + r * h_n)
    # Elementwise blend stays fully f32 (no bf16 drift if called recurrently).
    h_out_ref[...] = (1.0 - z) * n + z * h_prev


def score_items_kernel(h_ref, o_ref, by_ref, r_ref):
    """One lane-dense score tile:  R_tile = h' @ O_tile^T + By_tile.

    h_ref:  (Bp, Dp)  new hidden state (compute dtype, grid-invariant block)
    o_ref:  (TN, Dp)  output-embedding row tile (streamed / double-buffered)
    by_ref: (1, TN)   output-bias tile (f32)
    r_ref:  (Bp, TN)  score tile
    """
    prec = jax.lax.Precision.HIGHEST if o_ref.dtype == jnp.float32 else None
    # Contract last dims of both operands (A @ B^T): no transposed copy of O is
    # ever materialized host- or kernel-side.
    s = jax.lax.dot_general(h_ref[...], o_ref[...],
                            dimension_numbers=(((1,), (1,)), ((), ())),
                            precision=prec,
                            preferred_element_type=jnp.float32)
    r_ref[...] = (s + by_ref[...]).astype(r_ref.dtype)


# ---------------------------------------------------------------------------
# Forward wrapper
# ---------------------------------------------------------------------------

def gru4rec_forward(params, X, Y, H0, *, max_tile_n=16384, score_dtype=None,
                    o_buffer_count=2):
    """Returns (scores (B, Ny) in `score_dtype`, new_hidden (B, D) f32)."""
    cd = params["compute_dtype"]
    if score_dtype is None:
        score_dtype = jnp.bfloat16 if cd == jnp.bfloat16 else jnp.float32
    D, Dp = params["D"], params["Dp"]
    B = X.shape[0]
    Ny = Y.shape[0]
    Bp = _round_up(B, 16 if cd == jnp.bfloat16 else 8)   # native bf16 (16,128) tile
    Nyp = _round_up(Ny, 128)                              # decoupled from TN

    # --- embedding gathers: single pass out of the persistent padded+cast Wy ---
    E = params["Wy_cd"][X]                                # (B, Dp) compute dtype
    Y_pad = jnp.pad(Y, (0, Nyp - Ny))                     # pad with item 0 (sliced off)
    O = params["Wy_cd"][Y_pad]                            # (Nyp, Dp) compute dtype
    By_row = params["By"][Y_pad].reshape(1, Nyp)          # (1, Nyp) f32

    Ep = _pad_rows(E, Bp)
    H0p = jnp.pad(H0.astype(jnp.float32), ((0, Bp - B), (0, Dp - D)))

    # --- GRU cell: tiny separate Pallas call, whole-array blocks, f32 carry ---
    h_new_f32 = pl.pallas_call(
        gru_cell_kernel,
        out_shape=jax.ShapeDtypeStruct((Bp, Dp), jnp.float32),
    )(Ep, H0p, params["wih_t"], params["whh_t"], params["bih"], params["bhh"])

    h_cd = h_new_f32.astype(cd)       # cast hoisted out of the scoring grid

    # --- VMEM-budgeted Ny tile for the streamed scoring kernel ---
    o_bytes = jnp.dtype(cd).itemsize
    s_bytes = jnp.dtype(score_dtype).itemsize
    vmem_limit = _vmem_limit_bytes()
    const_bytes = Bp * Dp * o_bytes + (4 << 20)           # h' block + headroom
    stream_budget = max(1 << 20, int((vmem_limit - const_bytes) * 0.75))
    per_col = o_buffer_count * Dp * o_bytes + 2 * (Bp * s_bytes + 4)
    TN = min(stream_budget // per_col, max_tile_n, Nyp)
    TN = int(max(128, (TN // 128) * 128))
    grid_n = pl.cdiv(Nyp, TN)                             # ragged last tile is fine

    if o_buffer_count > 2:
        # Optional sweep (perf review): deeper pipelining of the O stream.
        o_spec = pl.BlockSpec((TN, Dp), lambda j: (j, 0),
                              pipeline_mode=pl.Buffered(o_buffer_count))
    else:
        o_spec = pl.BlockSpec((TN, Dp), lambda j: (j, 0))

    scores = pl.pallas_call(
        score_items_kernel,
        out_shape=jax.ShapeDtypeStruct((Bp, Nyp), score_dtype),
        grid=(grid_n,),
        in_specs=[
            pl.BlockSpec((Bp, Dp), lambda j: (0, 0)),     # h' (grid-invariant)
            o_spec,                                       # O row tiles (streamed)
            pl.BlockSpec((1, TN), lambda j: (0, j)),      # By tiles
        ],
        out_specs=pl.BlockSpec((Bp, TN), lambda j: (0, j)),
        compiler_params=pltpu.CompilerParams(
            # No scratch carry / revisited block -> safe to shard across v7x's 2 TCs.
            dimension_semantics=("parallel",),
            vmem_limit_bytes=vmem_limit),
        cost_estimate=pl.CostEstimate(
            flops=2 * Bp * Nyp * Dp,
            transcendentals=0,
            bytes_accessed=int(Nyp * Dp * o_bytes + Bp * Nyp * s_bytes
                               + Bp * Dp * o_bytes + Nyp * 4)),
    )(h_cd, O, By_row)

    return scores[:B, :Ny], h_new_f32[:B, :D]


# ---------------------------------------------------------------------------
# Deterministic init + pure-JAX reference
# ---------------------------------------------------------------------------

def init_matrix(key, shape, dim0_scale=1, dim1_scale=1):
    """Analogue of init_parameter_matrix (uniform in [-sigma, sigma])."""
    sigma = math.sqrt(6.0 / (shape[0] / dim0_scale + shape[1] / dim1_scale))
    return jax.random.uniform(key, shape, dtype=jnp.float32,
                              minval=-sigma, maxval=sigma)


def reference_forward(E, H0, weight_ih, weight_hh, bias_ih, bias_hh, O, By_y):
    """Pure-JAX f32 reference matching torch.nn.GRUCell + score_items."""
    hp = jax.lax.Precision.HIGHEST
    gi = jnp.dot(E, weight_ih.T, precision=hp) + bias_ih
    gh = jnp.dot(H0, weight_hh.T, precision=hp) + bias_hh
    d = H0.shape[1]
    i_r, i_z, i_n = gi[:, :d], gi[:, d:2 * d], gi[:, 2 * d:]
    h_r, h_z, h_n = gh[:, :d], gh[:, d:2 * d], gh[:, 2 * d:]
    r = jax.nn.sigmoid(i_r + h_r)
    z = jax.nn.sigmoid(i_z + h_z)
    n = jnp.tanh(i_n + r * h_n)
    h_new = (1.0 - z) * n + z * H0
    scores = jnp.dot(h_new, O.T, precision=hp) + By_y.reshape(1, -1)
    return scores, h_new


# ---------------------------------------------------------------------------
# Demo / self-test
# ---------------------------------------------------------------------------

if __name__ == "__main__":
    # Small shapes consistent with GRU4RecModel defaults
    # (constrained_embedding=True, single GRU layer layers=[100], inference).
    n_items = 2048     # item vocabulary size
    hidden = 100       # layers[-1] -> exercises D zero-padding to 128
    batch = 5          # sessions in the minibatch -> exercises batch padding
    n_targets = 1000   # target items Y -> exercises Ny padding + ragged tiles

    key = jax.random.PRNGKey(0)
    k_wy, k_by, k_wih, k_whh, k_bih, k_bhh, k_x, k_y, k_h = jax.random.split(key, 9)

    # Parameters (shapes from GRU4RecModel.__init__; small nonzero biases so the
    # bias wiring is actually exercised).
    Wy = init_matrix(k_wy, (n_items, hidden))                            # Wy.weight
    By = 0.01 * jax.random.normal(k_by, (n_items, 1), dtype=jnp.float32)  # By.weight
    weight_ih = init_matrix(k_wih, (3 * hidden, hidden), dim0_scale=3)   # GRUCell.weight_ih
    weight_hh = init_matrix(k_whh, (3 * hidden, hidden), dim0_scale=3)   # GRUCell.weight_hh
    bias_ih = 0.01 * jax.random.normal(k_bih, (3 * hidden,), dtype=jnp.float32)
    bias_hh = 0.01 * jax.random.normal(k_bhh, (3 * hidden,), dtype=jnp.float32)

    # Inputs.
    X = jax.random.randint(k_x, (batch,), 0, n_items)                    # in_idxs
    Y = jax.random.randint(k_y, (n_targets,), 0, n_items)                # out_idxs
    H0 = 0.1 * jax.random.normal(k_h, (batch, hidden), dtype=jnp.float32)

    # Pure-JAX reference (f32).
    ref_scores, ref_h = reference_forward(
        Wy[X], H0, weight_ih, weight_hh, bias_ih, bias_hh, Wy[Y], By[Y])

    # 1) Exact-semantics path: f32 operands, evenly dividing Ny tiles (1024 / 512).
    p32 = prepare_params(Wy, By, weight_ih, weight_hh, bias_ih, bias_hh,
                         compute_dtype=jnp.float32)
    s32, h32 = gru4rec_forward(p32, X, Y, H0, max_tile_n=512,
                               score_dtype=jnp.float32)
    jax.block_until_ready(s32)
    assert s32.shape == (batch, n_targets) and h32.shape == (batch, hidden)
    assert jnp.allclose(s32, ref_scores, atol=2e-3, rtol=2e-3)
    assert jnp.allclose(h32, ref_h, atol=2e-3, rtol=2e-3)

    # 2) Exact-semantics path with a ragged final Ny tile (1024 cols, TN=384).
    s32r, h32r = gru4rec_forward(p32, X, Y, H0, max_tile_n=384,
                                 score_dtype=jnp.float32)
    jax.block_until_ready(s32r)
    assert jnp.allclose(s32r, ref_scores, atol=2e-3, rtol=2e-3)
    assert jnp.allclose(h32r, ref_h, atol=2e-3, rtol=2e-3)

    # 3) Performance path: bf16 operands, f32 accumulation & f32 hidden blend,
    #    bf16 score writeback, VMEM-budgeted large tile (clamps to Nyp here).
    pbf = prepare_params(Wy, By, weight_ih, weight_hh, bias_ih, bias_hh,
                         compute_dtype=jnp.bfloat16)
    sbf, hbf = gru4rec_forward(pbf, X, Y, H0)
    jax.block_until_ready(sbf)
    jax.block_until_ready(hbf)
    assert sbf.shape == (batch, n_targets) and sbf.dtype == jnp.bfloat16
    assert hbf.shape == (batch, hidden) and hbf.dtype == jnp.float32
    assert jnp.allclose(sbf.astype(jnp.float32), ref_scores, atol=2e-2, rtol=2e-2)
    assert jnp.allclose(hbf, ref_h, atol=2e-2, rtol=2e-2)

    print("KERNEL_OK")
</pallas_src>

<mosaic_0001>
module attributes {stable_mosaic.version = 11 : i64} {
  func.func @gru_cell_kernel(%arg0: memref<8x128xf32, #tpu.memory_space<vmem>>, %arg1: memref<8x128xf32, #tpu.memory_space<vmem>>, %arg2: memref<128x384xf32, #tpu.memory_space<vmem>>, %arg3: memref<128x384xf32, #tpu.memory_space<vmem>>, %arg4: memref<1x384xf32, #tpu.memory_space<vmem>>, %arg5: memref<1x384xf32, #tpu.memory_space<vmem>>, %arg6: memref<8x128xf32, #tpu.memory_space<vmem>>) attributes {dimension_semantics = [], scalar_prefetch = 0 : i64, scratch_operands = 0 : i64, tpu.core_type = #tpu.core_type<tc>} {
    %c0 = arith.constant 0 : index
    %c0_0 = arith.constant 0 : index
    %0 = vector.load %arg0[%c0, %c0_0] : memref<8x128xf32, #tpu.memory_space<vmem>>, vector<8x128xf32>
    %c0_1 = arith.constant 0 : index
    %c0_2 = arith.constant 0 : index
    %1 = vector.load %arg1[%c0_1, %c0_2] : memref<8x128xf32, #tpu.memory_space<vmem>>, vector<8x128xf32>
    %c0_3 = arith.constant 0 : index
    %c0_4 = arith.constant 0 : index
    %2 = vector.load %arg2[%c0_3, %c0_4] : memref<128x384xf32, #tpu.memory_space<vmem>>, vector<128x384xf32>
    %cst = arith.constant dense<0.000000e+00> : vector<8x384xf32>
    %3 = tpu.matmul %0, %2, %cst {dimension_numbers = #tpu.dot_dimension_numbers<[1], [0], [0], [1], [0, 0, 1, 1], [], []>, precision = #tpu.contract_precision<fp32>} : vector<8x128xf32>, vector<128x384xf32>, vector<8x384xf32> -> vector<8x384xf32>
    %c0_5 = arith.constant 0 : index
    %c0_6 = arith.constant 0 : index
    %4 = vector.load %arg4[%c0_5, %c0_6] : memref<1x384xf32, #tpu.memory_space<vmem>>, vector<1x384xf32>
    %5 = vector.broadcast %4 : vector<1x384xf32> to vector<8x384xf32>
    %6 = arith.addf %3, %5 : vector<8x384xf32>
    %c0_7 = arith.constant 0 : index
    %c0_8 = arith.constant 0 : index
    %7 = vector.load %arg3[%c0_7, %c0_8] : memref<128x384xf32, #tpu.memory_space<vmem>>, vector<128x384xf32>
    %cst_9 = arith.constant dense<0.000000e+00> : vector<8x384xf32>
    %8 = tpu.matmul %1, %7, %cst_9 {dimension_numbers = #tpu.dot_dimension_numbers<[1], [0], [0], [1], [0, 0, 1, 1], [], []>, precision = #tpu.contract_precision<fp32>} : vector<8x128xf32>, vector<128x384xf32>, vector<8x384xf32> -> vector<8x384xf32>
    %c0_10 = arith.constant 0 : index
    %c0_11 = arith.constant 0 : index
    %9 = vector.load %arg5[%c0_10, %c0_11] : memref<1x384xf32, #tpu.memory_space<vmem>>, vector<1x384xf32>
    %10 = vector.broadcast %9 : vector<1x384xf32> to vector<8x384xf32>
    %11 = arith.addf %8, %10 : vector<8x384xf32>
    %12 = vector.extract_strided_slice %6 {offsets = [0, 0], sizes = [8, 128], strides = [1, 1]} : vector<8x384xf32> to vector<8x128xf32>
    %13 = vector.extract_strided_slice %6 {offsets = [0, 128], sizes = [8, 128], strides = [1, 1]} : vector<8x384xf32> to vector<8x128xf32>
    %14 = vector.extract_strided_slice %6 {offsets = [0, 256], sizes = [8, 128], strides = [1, 1]} : vector<8x384xf32> to vector<8x128xf32>
    %15 = vector.extract_strided_slice %11 {offsets = [0, 0], sizes = [8, 128], strides = [1, 1]} : vector<8x384xf32> to vector<8x128xf32>
    %16 = vector.extract_strided_slice %11 {offsets = [0, 128], sizes = [8, 128], strides = [1, 1]} : vector<8x384xf32> to vector<8x128xf32>
    %17 = vector.extract_strided_slice %11 {offsets = [0, 256], sizes = [8, 128], strides = [1, 1]} : vector<8x384xf32> to vector<8x128xf32>
    %18 = arith.addf %12, %15 : vector<8x128xf32>
    %19 = arith.negf %18 : vector<8x128xf32>
    %20 = math.exp %19 : vector<8x128xf32>
    %cst_12 = arith.constant 1.000000e+00 : f32
    %21 = vector.broadcast %cst_12 : f32 to vector<8x128xf32>
    %22 = arith.addf %21, %20 : vector<8x128xf32>
    %23 = arith.divf %21, %22 : vector<8x128xf32>
    %24 = arith.addf %13, %16 : vector<8x128xf32>
    %25 = arith.negf %24 : vector<8x128xf32>
    %26 = math.exp %25 : vector<8x128xf32>
    %cst_13 = arith.constant 1.000000e+00 : f32
    %27 = vector.broadcast %cst_13 : f32 to vector<8x128xf32>
    %28 = arith.addf %27, %26 : vector<8x128xf32>
    %29 = arith.divf %27, %28 : vector<8x128xf32>
    %30 = arith.mulf %23, %17 : vector<8x128xf32>
    %31 = arith.addf %14, %30 : vector<8x128xf32>
    %32 = math.tanh %31 : vector<8x128xf32>
    %cst_14 = arith.constant 1.000000e+00 : f32
    %33 = vector.broadcast %cst_14 : f32 to vector<8x128xf32>
    %34 = arith.subf %33, %29 : vector<8x128xf32>
    %35 = arith.mulf %34, %32 : vector<8x128xf32>
    %36 = arith.mulf %29, %1 : vector<8x128xf32>
    %37 = arith.addf %35, %36 : vector<8x128xf32>
    %c0_15 = arith.constant 0 : index
    %c0_16 = arith.constant 0 : index
    %38 = vector.load %arg6[%c0_15, %c0_16] : memref<8x128xf32, #tpu.memory_space<vmem>>, vector<8x128xf32>
    tpu.vector_store %arg6[%c0_15, %c0_16], %37 {strides = array<i32>} : memref<8x128xf32, #tpu.memory_space<vmem>>, vector<8x128xf32>,
    return
  }
}

</mosaic_0001>

<llo_original>
// kernel: tpu_custom_call.1
$region0: #{tpu_custom_call.1}
  #allocation0 [shape = 'u32[]', space=smem, size = 0x4, offset = 0x4, fixed_abs, tag = 'smem constant byte address 0x4 - core index']
  #allocation1 [shape = 'u32[144,128]{1,0:T(1,128)}', space=vmem, size = 0x12000, scoped, tag = 'internal scratch']
  %s0 = inlined_call_operand.hbm [shape: f32[8,128], index: 0, kind: input, shape index: {}]
  %s1 = inlined_call_operand.hbm [shape: f32[8,128], index: 1, kind: input, shape index: {}]
  %s2 = inlined_call_operand.hbm [shape: f32[128,384], index: 2, kind: input, shape index: {}]
  %s3 = inlined_call_operand.hbm [shape: f32[128,384], index: 3, kind: input, shape index: {}]
  %s4 = inlined_call_operand.vmem [shape: f32[1,384], index: 4, kind: input, shape index: {}]
  %s5 = inlined_call_operand.vmem [shape: f32[1,384], index: 5, kind: input, shape index: {}]
  %s6 = inlined_call_operand.hbm [shape: f32[8,128], index: 6, kind: output, shape index: {}]
  %s7 = sld [smem:[#allocation0]]
  $region50: #{tpu_custom_call.1} parent=0
    _
  %s9 = ssub.s32 1, %s7
  %s10 = scalar_select 0, %s9, %s7
  $region1: #{tpu_custom_call.1} parent=0
    #allocation2 [shape = 'u8[4096]{0}', space=vmem, size = 0x1000, scoped, tag = 'input window, operand 0, single buffered']
    #allocation3 [shape = 's32[1]{0}', space=sflag, size = 0x4, scoped, tag = 'scoped memory for tpu_custom_call.1']
    #allocation4 [shape = 's32[1]{0}', space=sflag, size = 0x4, scoped, tag = 'scoped memory for tpu_custom_call.1']
    #allocation5 [shape = 'u8[4096]{0}', space=vmem, size = 0x1000, scoped, tag = 'input window, operand 1, single buffered']
    #allocation6 [shape = 's32[1]{0}', space=sflag, size = 0x4, scoped, tag = 'scoped memory for tpu_custom_call.1']
    #allocation7 [shape = 'u8[196608]{0}', space=vmem, size = 0x30000, scoped, tag = 'input window, operand 2, single buffered']
    #allocation8 [shape = 'u8[196608]{0}', space=vmem, size = 0x30000, scoped, tag = 'input window, operand 3, single buffered']
    #allocation9 [shape = 's32[1]{0}', space=sflag, size = 0x4, scoped, tag = 'scoped memory for tpu_custom_call.1']
    #allocation10 [shape = 'u8[4096]{0}', space=vmem, size = 0x1000, scoped, tag = 'output window, operand 0, single buffered']
    %11 = vsyncpa [#allocation3], 0
    %12 = vsyncpa [#allocation6], 0
    %13 = vsyncpa [#allocation9], 0
    %14 = vsyncpa [#allocation4], 0
    // Predicated region
    $region2: #{tpu_custom_call.1} parent=1 // pred_check
      _
    $region3: #{tpu_custom_call.1} parent=1 // pred_check_branch
      %16 = sbr.rel (0) target = $region5
    $region4: #{tpu_custom_call.1} parent=1 // pred_region
      %s18 = ssub.s32 128, 128
      %19 = vsyncadd [#allocation3], %s18
      %s21 = sshll.u32 [#allocation2], 4
      %s22 = int_to_ptr.vmem [resolvable:$true] %s21
      %24 = dma.hbm_to_vmem [thread:$0]  %s0, 128, %s22, [#allocation3]
    $region5: #{tpu_custom_call.1} parent=1 // pred_fallthru
      _
    // Predicated region
    $region6: #{tpu_custom_call.1} parent=1 // pred_check
      _
    $region7: #{tpu_custom_call.1} parent=1 // pred_check_branch
      %26 = sbr.rel (0) target = $region9
    $region8: #{tpu_custom_call.1} parent=1 // pred_region
      %s28 = ssub.s32 128, 128
      %29 = vsyncadd [#allocation6], %s28
      %s31 = sshll.u32 [#allocation5], 4
      %s32 = int_to_ptr.vmem [resolvable:$true] %s31
      %34 = dma.hbm_to_vmem [thread:$0]  %s1, 128, %s32, [#allocation6]
    $region9: #{tpu_custom_call.1} parent=1 // pred_fallthru
      _
    // Predicated region
    $region10: #{tpu_custom_call.1} parent=1 // pred_check
      _
    $region11: #{tpu_custom_call.1} parent=1 // pred_check_branch
      %36 = sbr.rel (0) target = $region13
    $region12: #{tpu_custom_call.1} parent=1 // pred_region
      %s38 = ssub.s32 6144, 6144
      %39 = vsyncadd [#allocation6], %s38
      %s40 = sshll.u32 [#allocation7], 4
      %s41 = int_to_ptr.vmem [resolvable:$true] %s40
      %46 = dma.hbm_to_vmem [thread:$0]  %s2, 6144, %s41, [#allocation6], 384, 384, 24
    $region13: #{tpu_custom_call.1} parent=1 // pred_fallthru
      _
    // Predicated region
    $region14: #{tpu_custom_call.1} parent=1 // pred_check
      _
    $region15: #{tpu_custom_call.1} parent=1 // pred_check_branch
      %48 = sbr.rel (0) target = $region17
    $region16: #{tpu_custom_call.1} parent=1 // pred_region
      %s50 = ssub.s32 6144, 6144
      %51 = vsyncadd [#allocation9], %s50
      %s52 = sshll.u32 [#allocation8], 4
      %s53 = int_to_ptr.vmem [resolvable:$true] %s52
      %58 = dma.hbm_to_vmem [thread:$0]  %s3, 6144, %s53, [#allocation9], 384, 384, 24
    $region17: #{tpu_custom_call.1} parent=1 // pred_fallthru
      _
    // Predicated region
    $region18: #{tpu_custom_call.1} parent=1 // pred_check
      _
    $region19: #{tpu_custom_call.1} parent=1 // pred_check_branch
      %60 = sbr.rel (0) target = $region21
    $region20: #{tpu_custom_call.1} parent=1 // pred_region
      _
    $region21: #{tpu_custom_call.1} parent=1 // pred_fallthru
      _
    // Predicated region
    $region22: #{tpu_custom_call.1} parent=1 // pred_check
      _
    $region23: #{tpu_custom_call.1} parent=1 // pred_check_branch
      %62 = sbr.rel (0) target = $region25
    $region24: #{tpu_custom_call.1} parent=1 // pred_region
      _
    $region25: #{tpu_custom_call.1} parent=1 // pred_fallthru
      _
    // Predicated region
    $region26: #{tpu_custom_call.1} parent=1 // pred_check
      _
    $region27: #{tpu_custom_call.1} parent=1 // pred_check_branch
      %64 = sbr.rel (0) target = $region29
    $region28: #{tpu_custom_call.1} parent=1 // pred_region
      %65 = dma.done [#allocation3], 128
    $region29: #{tpu_custom_call.1} parent=1 // pred_fallthru
      _
    // Predicated region
    $region30: #{tpu_custom_call.1} parent=1 // pred_check
      _
    $region31: #{tpu_custom_call.1} parent=1 // pred_check_branch
      %67 = sbr.rel (0) target = $region33
    $region32: #{tpu_custom_call.1} parent=1 // pred_region
      %68 = dma.done [#allocation6], 128
    $region33: #{tpu_custom_call.1} parent=1 // pred_fallthru
      _
    // Predicated region
    $region34: #{tpu_custom_call.1} parent=1 // pred_check
      _
    $region35: #{tpu_custom_call.1} parent=1 // pred_check_branch
      %70 = sbr.rel (0) target = $region37
    $region36: #{tpu_custom_call.1} parent=1 // pred_region
      %71 = dma.done [#allocation6], 6144
    $region37: #{tpu_custom_call.1} parent=1 // pred_fallthru
      _
    // Predicated region
    $region38: #{tpu_custom_call.1} parent=1 // pred_check
      _
    $region39: #{tpu_custom_call.1} parent=1 // pred_check_branch
      %73 = sbr.rel (0) target = $region41
    $region40: #{tpu_custom_call.1} parent=1 // pred_region
      %74 = dma.done [#allocation9], 6144
    $region41: #{tpu_custom_call.1} parent=1 // pred_fallthru
      _
    %v75 = vld [vmem:[#allocation2] sm:$0xff]
    %v76 = vld [vmem:[#allocation5] sm:$0xff]
    %v77 = vld [vmem:[#allocation7] sm:$0xff]
    %v78 = vld [vmem:[#allocation7 + $0x8] sm:$0xff]
    %v79 = vld [vmem:[#allocation7 + $0x10] sm:$0xff]
    %v80 = vld [vmem:[#allocation7 + $0x18] sm:$0xff]
    %v81 = vld [vmem:[#allocation7 + $0x20] sm:$0xff]
    %v82 = vld [vmem:[#allocation7 + $0x28] sm:$0xff]
    %v83 = vld [vmem:[#allocation7 + $0x30] sm:$0xff]
    %v84 = vld [vmem:[#allocation7 + $0x38] sm:$0xff]
    %v85 = vld [vmem:[#allocation7 + $0x40] sm:$0xff]
    %v86 = vld [vmem:[#allocation7 + $0x48] sm:$0xff]
    %v87 = vld [vmem:[#allocation7 + $0x50] sm:$0xff]
    %v88 = vld [vmem:[#allocation7 + $0x58] sm:$0xff]
    %v89 = vld [vmem:[#allocation7 + $0x60] sm:$0xff]
    %v90 = vld [vmem:[#allocation7 + $0x68] sm:$0xff]
    %v91 = vld [vmem:[#allocation7 + $0x70] sm:$0xff]
    %v92 = vld [vmem:[#allocation7 + $0x78] sm:$0xff]
    %v93 = vld [vmem:[#allocation7 + $0x80] sm:$0xff]
    %v94 = vld [vmem:[#allocation7 + $0x88] sm:$0xff]
    %v95 = vld [vmem:[#allocation7 + $0x90] sm:$0xff]
    %v96 = vld [vmem:[#allocation7 + $0x98] sm:$0xff]
    %v97 = vld [vmem:[#allocation7 + $0xa0] sm:$0xff]
    %v98 = vld [vmem:[#allocation7 + $0xa8] sm:$0xff]
    %v99 = vld [vmem:[#allocation7 + $0xb0] sm:$0xff]
    %v100 = vld [vmem:[#allocation7 + $0xb8] sm:$0xff]
    %v101 = vld [vmem:[#allocation7 + $0xc0] sm:$0xff]
    %v102 = vld [vmem:[#allocation7 + $0xc8] sm:$0xff]
    %v103 = vld [vmem:[#allocation7 + $0xd0] sm:$0xff]
    %v104 = vld [vmem:[#allocation7 + $0xd8] sm:$0xff]
    %v105 = vld [vmem:[#allocation7 + $0xe0] sm:$0xff]
    %v106 = vld [vmem:[#allocation7 + $0xe8] sm:$0xff]
    %v107 = vld [vmem:[#allocation7 + $0xf0] sm:$0xff]
    %v108 = vld [vmem:[#allocation7 + $0xf8] sm:$0xff]
    %v109 = vld [vmem:[#allocation7 + $0x100] sm:$0xff]
    %v110 = vld [vmem:[#allocation7 + $0x108] sm:$0xff]
    %v111 = vld [vmem:[#allocation7 + $0x110] sm:$0xff]
    %v112 = vld [vmem:[#allocation7 + $0x118] sm:$0xff]
    %v113 = vld [vmem:[#allocation7 + $0x120] sm:$0xff]
    %v114 = vld [vmem:[#allocation7 + $0x128] sm:$0xff]
    %v115 = vld [vmem:[#allocation7 + $0x130] sm:$0xff]
    %v116 = vld [vmem:[#allocation7 + $0x138] sm:$0xff]
    %v117 = vld [vmem:[#allocation7 + $0x140] sm:$0xff]
    %v118 = vld [vmem:[#allocation7 + $0x148] sm:$0xff]
    %v119 = vld [vmem:[#allocation7 + $0x150] sm:$0xff]
    %v120 = vld [vmem:[#allocation7 + $0x158] sm:$0xff]
    %v121 = vld [vmem:[#allocation7 + $0x160] sm:$0xff]
    %v122 = vld [vmem:[#allocation7 + $0x168] sm:$0xff]
    %v123 = vld [vmem:[#allocation7 + $0x170] sm:$0xff]
    %v124 = vld [vmem:[#allocation7 + $0x178] sm:$0xff]
    %v125 = vld [vmem:[%s4] sm:$0x7]
    %v127 = vlaneseq
    %v128 = vshrl.u32 %v127, 7
    %v129 = vsub.s32 0, %v128
    %v130 = vrot.slane %v125, %v129
    %v131 = vlaneseq
    %v132 = vshrl.u32 %v131, 7
    %v133 = vsub.s32 1, %v132
    %v134 = vrot.slane %v125, %v133
    %v135 = vlaneseq
    %v136 = vshrl.u32 %v135, 7
    %v137 = vsub.s32 2, %v136
    %v138 = vrot.slane %v125, %v137
    %v142 = vand.u32 %v123, 4294901760
    %143 = vmatprep.subr.mxu0 %v142
    %v144 = vand.u32 %v122, 4294901760
    %145 = vmatpush1.msra.mxu0 %v144
    %v146 = vand.u32 %v120, 4294901760
    %147 = vmatprep.subr.mxu0 %v146
    %v148 = vand.u32 %v119, 4294901760
    %149 = vmatpush1.msra.mxu0 %v148
    %v150 = vand.u32 %v117, 4294901760
    %151 = vmatprep.subr.mxu0 %v150
    %v152 = vand.u32 %v116, 4294901760
    %153 = vmatpush1.msra.mxu0 %v152
    %v154 = vand.u32 %v114, 4294901760
    %155 = vmatprep.subr.mxu0 %v154
    %v156 = vand.u32 %v113, 4294901760
    %157 = vmatpush1.msra.mxu0 %v156
    %v158 = vand.u32 %v111, 4294901760
    %159 = vmatprep.subr.mxu0 %v158
    %v160 = vand.u32 %v110, 4294901760
    %161 = vmatpush1.msra.mxu0 %v160
    %v162 = vand.u32 %v108, 4294901760
    %163 = vmatprep.subr.mxu0 %v162
    %v164 = vand.u32 %v107, 4294901760
    %165 = vmatpush1.msra.mxu0 %v164
    %v166 = vand.u32 %v105, 4294901760
    %167 = vmatprep.subr.mxu0 %v166
    %v168 = vand.u32 %v104, 4294901760
    %169 = vmatpush1.msra.mxu0 %v168
    %v170 = vand.u32 %v102, 4294901760
    %171 = vmatprep.subr.mxu0 %v170
    %v172 = vand.u32 %v101, 4294901760
    %173 = vmatpush1.msra.mxu0 %v172
    %v174 = vand.u32 %v99, 4294901760
    %175 = vmatprep.subr.mxu0 %v174
    %v176 = vand.u32 %v98, 4294901760
    %177 = vmatpush1.msra.mxu0 %v176
    %v178 = vand.u32 %v96, 4294901760
    %179 = vmatprep.subr.mxu0 %v178
    %v180 = vand.u32 %v95, 4294901760
    %181 = vmatpush1.msra.mxu0 %v180
    %v182 = vand.u32 %v93, 4294901760
    %183 = vmatprep.subr.mxu0 %v182
    %v184 = vand.u32 %v92, 4294901760
    %185 = vmatpush1.msra.mxu0 %v184
    %v186 = vand.u32 %v90, 4294901760
    %187 = vmatprep.subr.mxu0 %v186
    %v188 = vand.u32 %v89, 4294901760
    %189 = vmatpush1.msra.mxu0 %v188
    %v190 = vand.u32 %v87, 4294901760
    %191 = vmatprep.subr.mxu0 %v190
    %v192 = vand.u32 %v86, 4294901760
    %193 = vmatpush1.msra.mxu0 %v192
    %v194 = vand.u32 %v84, 4294901760
    %195 = vmatprep.subr.mxu0 %v194
    %v196 = vand.u32 %v83, 4294901760
    %197 = vmatpush1.msra.mxu0 %v196
    %v198 = vand.u32 %v81, 4294901760
    %199 = vmatprep.subr.mxu0 %v198
    %v200 = vand.u32 %v80, 4294901760
    %201 = vmatpush1.msra.mxu0 %v200
    %v202 = vand.u32 %v78, 4294901760
    %203 = vmatprep.subr.mxu0 %v202
    %v204 = vand.u32 %v77, 4294901760
    %205 = vmatpush1.msra.mxu0 %v204
    %206 = vmatprep.subr.mxu0 0.0
    %207 = vmatpush2.msra.mxu0 0.0
    %208 = vmatprep.subr.mxu0 0.0
    %209 = vmatpush2.msra.mxu0 0.0
    %210 = vmatprep.subr.mxu0 0.0
    %211 = vmatpush2.msra.mxu0 0.0
    %212 = vmatprep.subr.mxu0 0.0
    %213 = vmatpush2.msra.mxu0 0.0
    %214 = vmatprep.subr.mxu0 0.0
    %215 = vmatpush2.msra.mxu0 0.0
    %216 = vmatprep.subr.mxu0 0.0
    %217 = vmatpush2.msra.mxu0 0.0
    %218 = vmatprep.subr.mxu0 0.0
    %219 = vmatpush2.msra.mxu0 0.0
    %220 = vmatprep.subr.mxu0 0.0
    %221 = vmatpush2.msra.mxu0 0.0
    %222 = vmatprep.subr.mxu0 0.0
    %223 = vmatpush2.msra.mxu0 0.0
    %224 = vmatprep.subr.mxu0 0.0
    %225 = vmatpush2.msra.mxu0 0.0
    %226 = vmatprep.subr.mxu0 0.0
    %227 = vmatpush2.msra.mxu0 0.0
    %228 = vmatprep.subr.mxu0 0.0
    %229 = vmatpush2.msra.mxu0 0.0
    %230 = vmatprep.subr.mxu0 0.0
    %231 = vmatpush2.msra.mxu0 0.0
    %232 = vmatprep.subr.mxu0 0.0
    %233 = vmatpush2.msra.mxu0 0.0
    %234 = vmatprep.subr.mxu0 0.0
    %235 = vmatpush2.msra.mxu0 0.0
    %236 = vmatprep.subr.mxu0 0.0
    %237 = vmatpush2.msra.mxu0 0.0
    %238 = vmatprep.mubr.f32.mxu0 0.0
    %v239 = vand.u32 %v75, 4294901760
    %v240 = vsub.f32 %v75, %v239
    %v241 = vand.u32 %v240, 4294901760
    %v242 = vsub.f32 %v240, %v241
    %v243 = vand.u32 %v242, 4294901760
    %244 = vmatmul.mubr.f32.gmra.mxu0 %v243
    %v245 = vpop.f32.mrf.mxu0
    %v246 = vadd.f32 %v130, %v245
    %v247 = vpop.f32.mrf.mxu0
    %v248 = vadd.f32 %v134, %v247
    %249 = vdwg.mxu0
    %v250 = vand.u32 %v123, 4294901760
    %v251 = vsub.f32 %v123, %v250
    %v252 = vand.u32 %v251, 4294901760
    %v253 = vsub.f32 %v251, %v252
    %v254 = vand.u32 %v253, 4294901760
    %255 = vmatprep.subr.mxu0 %v254
    %v256 = vand.u32 %v122, 4294901760
    %v257 = vsub.f32 %v122, %v256
    %v258 = vand.u32 %v257, 4294901760
    %v259 = vsub.f32 %v257, %v258
    %v260 = vand.u32 %v259, 4294901760
    %261 = vmatpush1.msra.mxu0 %v260
    %v262 = vand.u32 %v120, 4294901760
    %v263 = vsub.f32 %v120, %v262
    %v264 = vand.u32 %v263, 4294901760
    %v265 = vsub.f32 %v263, %v264
    %v266 = vand.u32 %v265, 4294901760
    %267 = vmatprep.subr.mxu0 %v266
    %v268 = vand.u32 %v119, 4294901760
    %v269 = vsub.f32 %v119, %v268
    %v270 = vand.u32 %v269, 4294901760
    %v271 = vsub.f32 %v269, %v270
    %v272 = vand.u32 %v271, 4294901760
    %273 = vmatpush1.msra.mxu0 %v272
    %v274 = vand.u32 %v117, 4294901760
    %v275 = vsub.f32 %v117, %v274
    %v276 = vand.u32 %v275, 4294901760
    %v277 = vsub.f32 %v275, %v276
    %v278 = vand.u32 %v277, 4294901760
    %279 = vmatprep.subr.mxu0 %v278
    %v280 = vand.u32 %v116, 4294901760
    %v281 = vsub.f32 %v116, %v280
    %v282 = vand.u32 %v281, 4294901760
    %v283 = vsub.f32 %v281, %v282
    %v284 = vand.u32 %v283, 4294901760
    %285 = vmatpush1.msra.mxu0 %v284
    %v286 = vand.u32 %v114, 4294901760
    %v287 = vsub.f32 %v114, %v286
    %v288 = vand.u32 %v287, 4294901760
    %v289 = vsub.f32 %v287, %v288
    %v290 = vand.u32 %v289, 4294901760
    %291 = vmatprep.subr.mxu0 %v290
    %v292 = vand.u32 %v113, 4294901760
    %v293 = vsub.f32 %v113, %v292
    %v294 = vand.u32 %v293, 4294901760
    %v295 = vsub.f32 %v293, %v294
    %v296 = vand.u32 %v295, 4294901760
    %297 = vmatpush1.msra.mxu0 %v296
    %v298 = vand.u32 %v111, 4294901760
    %v299 = vsub.f32 %v111, %v298
    %v300 = vand.u32 %v299, 4294901760
    %v301 = vsub.f32 %v299, %v300
    %v302 = vand.u32 %v301, 4294901760
    %303 = vmatprep.subr.mxu0 %v302
    %v304 = vand.u32 %v110, 4294901760
    %v305 = vsub.f32 %v110, %v304
    %v306 = vand.u32 %v305, 4294901760
    %v307 = vsub.f32 %v305, %v306
    %v308 = vand.u32 %v307, 4294901760
    %309 = vmatpush1.msra.mxu0 %v308
    %v310 = vand.u32 %v108, 4294901760
    %v311 = vsub.f32 %v108, %v310
    %v312 = vand.u32 %v311, 4294901760
    %v313 = vsub.f32 %v311, %v312
    %v314 = vand.u32 %v313, 4294901760
    %315 = vmatprep.subr.mxu0 %v314
    %v316 = vand.u32 %v107, 4294901760
    %v317 = vsub.f32 %v107, %v316
    %v318 = vand.u32 %v317, 4294901760
    %v319 = vsub.f32 %v317, %v318
    %v320 = vand.u32 %v319, 4294901760
    %321 = vmatpush1.msra.mxu0 %v320
    %v322 = vand.u32 %v105, 4294901760
    %v323 = vsub.f32 %v105, %v322
    %v324 = vand.u32 %v323, 4294901760
    %v325 = vsub.f32 %v323, %v324
    %v326 = vand.u32 %v325, 4294901760
    %327 = vmatprep.subr.mxu0 %v326
    %v328 = vand.u32 %v104, 4294901760
    %v329 = vsub.f32 %v104, %v328
    %v330 = vand.u32 %v329, 4294901760
    %v331 = vsub.f32 %v329, %v330
    %v332 = vand.u32 %v331, 4294901760
    %333 = vmatpush1.msra.mxu0 %v332
    %v334 = vand.u32 %v102, 4294901760
    %v335 = vsub.f32 %v102, %v334
    %v336 = vand.u32 %v335, 4294901760
    %v337 = vsub.f32 %v335, %v336
    %v338 = vand.u32 %v337, 4294901760
    %339 = vmatprep.subr.mxu0 %v338
    %v340 = vand.u32 %v101, 4294901760
    %v341 = vsub.f32 %v101, %v340
    %v342 = vand.u32 %v341, 4294901760
    %v343 = vsub.f32 %v341, %v342
    %v344 = vand.u32 %v343, 4294901760
    %345 = vmatpush1.msra.mxu0 %v344
    %v346 = vand.u32 %v99, 4294901760
    %v347 = vsub.f32 %v99, %v346
    %v348 = vand.u32 %v347, 4294901760
    %v349 = vsub.f32 %v347, %v348
    %v350 = vand.u32 %v349, 4294901760
    %351 = vmatprep.subr.mxu0 %v350
    %v352 = vand.u32 %v98, 4294901760
    %v353 = vsub.f32 %v98, %v352
    %v354 = vand.u32 %v353, 4294901760
    %v355 = vsub.f32 %v353, %v354
    %v356 = vand.u32 %v355, 4294901760
    %357 = vmatpush1.msra.mxu0 %v356
    %v358 = vand.u32 %v96, 4294901760
    %v359 = vsub.f32 %v96, %v358
    %v360 = vand.u32 %v359, 4294901760
    %v361 = vsub.f32 %v359, %v360
    %v362 = vand.u32 %v361, 4294901760
    %363 = vmatprep.subr.mxu0 %v362
    %v364 = vand.u32 %v95, 4294901760
    %v365 = vsub.f32 %v95, %v364
    %v366 = vand.u32 %v365, 4294901760
    %v367 = vsub.f32 %v365, %v366
    %v368 = vand.u32 %v367, 4294901760
    %369 = vmatpush1.msra.mxu0 %v368
    %v370 = vand.u32 %v93, 4294901760
    %v371 = vsub.f32 %v93, %v370
    %v372 = vand.u32 %v371, 4294901760
    %v373 = vsub.f32 %v371, %v372
    %v374 = vand.u32 %v373, 4294901760
    %375 = vmatprep.subr.mxu0 %v374
    %v376 = vand.u32 %v92, 4294901760
    %v377 = vsub.f32 %v92, %v376
    %v378 = vand.u32 %v377, 4294901760
    %v379 = vsub.f32 %v377, %v378
    %v380 = vand.u32 %v379, 4294901760
    %381 = vmatpush1.msra.mxu0 %v380
    %v382 = vand.u32 %v90, 4294901760
    %v383 = vsub.f32 %v90, %v382
    %v384 = vand.u32 %v383, 4294901760
    %v385 = vsub.f32 %v383, %v384
    %v386 = vand.u32 %v385, 4294901760
    %387 = vmatprep.subr.mxu0 %v386
    %v388 = vand.u32 %v89, 4294901760
    %v389 = vsub.f32 %v89, %v388
    %v390 = vand.u32 %v389, 4294901760
    %v391 = vsub.f32 %v389, %v390
    %v392 = vand.u32 %v391, 4294901760
    %393 = vmatpush1.msra.mxu0 %v392
    %v394 = vand.u32 %v87, 4294901760
    %v395 = vsub.f32 %v87, %v394
    %v396 = vand.u32 %v395, 4294901760
    %v397 = vsub.f32 %v395, %v396
    %v398 = vand.u32 %v397, 4294901760
    %399 = vmatprep.subr.mxu0 %v398
    %v400 = vand.u32 %v86, 4294901760
    %v401 = vsub.f32 %v86, %v400
    %v402 = vand.u32 %v401, 4294901760
    %v403 = vsub.f32 %v401, %v402
    %v404 = vand.u32 %v403, 4294901760
    %405 = vmatpush1.msra.mxu0 %v404
    %v406 = vand.u32 %v84, 4294901760
    %v407 = vsub.f32 %v84, %v406
    %v408 = vand.u32 %v407, 4294901760
    %v409 = vsub.f32 %v407, %v408
    %v410 = vand.u32 %v409, 4294901760
    %411 = vmatprep.subr.mxu0 %v410
    %v412 = vand.u32 %v83, 4294901760
    %v413 = vsub.f32 %v83, %v412
    %v414 = vand.u32 %v413, 4294901760
    %v415 = vsub.f32 %v413, %v414
    %v416 = vand.u32 %v415, 4294901760
    %417 = vmatpush1.msra.mxu0 %v416
    %v418 = vand.u32 %v81, 4294901760
    %v419 = vsub.f32 %v81, %v418
    %v420 = vand.u32 %v419, 4294901760
    %v421 = vsub.f32 %v419, %v420
    %v422 = vand.u32 %v421, 4294901760
    %423 = vmatprep.subr.mxu0 %v422
    %v424 = vand.u32 %v80, 4294901760
    %v425 = vsub.f32 %v80, %v424
    %v426 = vand.u32 %v425, 4294901760
    %v427 = vsub.f32 %v425, %v426
    %v428 = vand.u32 %v427, 4294901760
    %429 = vmatpush1.msra.mxu0 %v428
    %v430 = vand.u32 %v78, 4294901760
    %v431 = vsub.f32 %v78, %v430
    %v432 = vand.u32 %v431, 4294901760
    %v433 = vsub.f32 %v431, %v432
    %v434 = vand.u32 %v433, 4294901760
    %435 = vmatprep.subr.mxu0 %v434
    %v436 = vand.u32 %v77, 4294901760
    %v437 = vsub.f32 %v77, %v436
    %v438 = vand.u32 %v437, 4294901760
    %v439 = vsub.f32 %v437, %v438
    %v440 = vand.u32 %v439, 4294901760
    %441 = vmatpush1.msra.mxu0 %v440
    %442 = vmatprep.subr.mxu0 0.0
    %443 = vmatpush2.msra.mxu0 0.0
    %444 = vmatprep.subr.mxu0 0.0
    %445 = vmatpush2.msra.mxu0 0.0
    %446 = vmatprep.subr.mxu0 0.0
    %447 = vmatpush2.msra.mxu0 0.0
    %448 = vmatprep.subr.mxu0 0.0
    %449 = vmatpush2.msra.mxu0 0.0
    %450 = vmatprep.subr.mxu0 0.0
    %451 = vmatpush2.msra.mxu0 0.0
    %452 = vmatprep.subr.mxu0 0.0
    %453 = vmatpush2.msra.mxu0 0.0
    %454 = vmatprep.subr.mxu0 0.0
    %455 = vmatpush2.msra.mxu0 0.0
    %456 = vmatprep.subr.mxu0 0.0
    %457 = vmatpush2.msra.mxu0 0.0
    %458 = vmatprep.subr.mxu0 0.0
    %459 = vmatpush2.msra.mxu0 0.0
    %460 = vmatprep.subr.mxu0 0.0
    %461 = vmatpush2.msra.mxu0 0.0
    %462 = vmatprep.subr.mxu0 0.0
    %463 = vmatpush2.msra.mxu0 0.0
    %464 = vmatprep.subr.mxu0 0.0
    %465 = vmatpush2.msra.mxu0 0.0
    %466 = vmatprep.subr.mxu0 0.0
    %467 = vmatpush2.msra.mxu0 0.0
    %468 = vmatprep.subr.mxu0 0.0
    %469 = vmatpush2.msra.mxu0 0.0
    %470 = vmatprep.subr.mxu0 0.0
    %471 = vmatpush2.msra.mxu0 0.0
    %472 = vmatprep.subr.mxu0 0.0
    %473 = vmatpush2.msra.mxu0 0.0
    %474 = vmatprep.mubr.f32.mxu0 0.0
    %v475 = vand.u32 %v75, 4294901760
    %476 = vmatmul.mubr.f32.gmra.mxu0 %v475
    %v477 = vpop.f32.mrf.mxu0
    %v478 = vadd.f32 %v246, %v477
    %v479 = vpop.f32.mrf.mxu0
    %v480 = vadd.f32 %v248, %v479
    %481 = vdwg.mxu0
    %v482 = vand.u32 %v123, 4294901760
    %v483 = vsub.f32 %v123, %v482
    %484 = vmatprep.subr.mxu0 %v483
    %v485 = vand.u32 %v122, 4294901760
    %v486 = vsub.f32 %v122, %v485
    %487 = vmatpush1.msra.mxu0 %v486
    %v488 = vand.u32 %v120, 4294901760
    %v489 = vsub.f32 %v120, %v488
    %490 = vmatprep.subr.mxu0 %v489
    %v491 = vand.u32 %v119, 4294901760
    %v492 = vsub.f32 %v119, %v491
    %493 = vmatpush1.msra.mxu0 %v492
    %v494 = vand.u32 %v117, 4294901760
    %v495 = vsub.f32 %v117, %v494
    %496 = vmatprep.subr.mxu0 %v495
    %v497 = vand.u32 %v116, 4294901760
    %v498 = vsub.f32 %v116, %v497
    %499 = vmatpush1.msra.mxu0 %v498
    %v500 = vand.u32 %v114, 4294901760
    %v501 = vsub.f32 %v114, %v500
    %502 = vmatprep.subr.mxu0 %v501
    %v503 = vand.u32 %v113, 4294901760
    %v504 = vsub.f32 %v113, %v503
    %505 = vmatpush1.msra.mxu0 %v504
    %v506 = vand.u32 %v111, 4294901760
    %v507 = vsub.f32 %v111, %v506
    %508 = vmatprep.subr.mxu0 %v507
    %v509 = vand.u32 %v110, 4294901760
    %v510 = vsub.f32 %v110, %v509
    %511 = vmatpush1.msra.mxu0 %v510
    %v512 = vand.u32 %v108, 4294901760
    %v513 = vsub.f32 %v108, %v512
    %514 = vmatprep.subr.mxu0 %v513
    %v515 = vand.u32 %v107, 4294901760
    %v516 = vsub.f32 %v107, %v515
    %517 = vmatpush1.msra.mxu0 %v516
    %v518 = vand.u32 %v105, 4294901760
    %v519 = vsub.f32 %v105, %v518
    %520 = vmatprep.subr.mxu0 %v519
    %v521 = vand.u32 %v104, 4294901760
    %v522 = vsub.f32 %v104, %v521
    %523 = vmatpush1.msra.mxu0 %v522
    %v524 = vand.u32 %v102, 4294901760
    %v525 = vsub.f32 %v102, %v524
    %526 = vmatprep.subr.mxu0 %v525
    %v527 = vand.u32 %v101, 4294901760
    %v528 = vsub.f32 %v101, %v527
    %529 = vmatpush1.msra.mxu0 %v528
    %v530 = vand.u32 %v99, 4294901760
    %v531 = vsub.f32 %v99, %v530
    %532 = vmatprep.subr.mxu0 %v531
    %v533 = vand.u32 %v98, 4294901760
    %v534 = vsub.f32 %v98, %v533
    %535 = vmatpush1.msra.mxu0 %v534
    %v536 = vand.u32 %v96, 4294901760
    %v537 = vsub.f32 %v96, %v536
    %538 = vmatprep.subr.mxu0 %v537
    %v539 = vand.u32 %v95, 4294901760
    %v540 = vsub.f32 %v95, %v539
    %541 = vmatpush1.msra.mxu0 %v540
    %v542 = vand.u32 %v93, 4294901760
    %v543 = vsub.f32 %v93, %v542
    %544 = vmatprep.subr.mxu0 %v543
    %v545 = vand.u32 %v92, 4294901760
    %v546 = vsub.f32 %v92, %v545
    %547 = vmatpush1.msra.mxu0 %v546
    %v548 = vand.u32 %v90, 4294901760
    %v549 = vsub.f32 %v90, %v548
    %550 = vmatprep.subr.mxu0 %v549
    %v551 = vand.u32 %v89, 4294901760
    %v552 = vsub.f32 %v89, %v551
    %553 = vmatpush1.msra.mxu0 %v552
    %v554 = vand.u32 %v87, 4294901760
    %v555 = vsub.f32 %v87, %v554
    %556 = vmatprep.subr.mxu0 %v555
    %v557 = vand.u32 %v86, 4294901760
    %v558 = vsub.f32 %v86, %v557
    %559 = vmatpush1.msra.mxu0 %v558
    %v560 = vand.u32 %v84, 4294901760
    %v561 = vsub.f32 %v84, %v560
    %562 = vmatprep.subr.mxu0 %v561
    %v563 = vand.u32 %v83, 4294901760
    %v564 = vsub.f32 %v83, %v563
    %565 = vmatpush1.msra.mxu0 %v564
    %v566 = vand.u32 %v81, 4294901760
    %v567 = vsub.f32 %v81, %v566
    %568 = vmatprep.subr.mxu0 %v567
    %v569 = vand.u32 %v80, 4294901760
    %v570 = vsub.f32 %v80, %v569
    %571 = vmatpush1.msra.mxu0 %v570
    %v572 = vand.u32 %v78, 4294901760
    %v573 = vsub.f32 %v78, %v572
    %574 = vmatprep.subr.mxu0 %v573
    %v575 = vand.u32 %v77, 4294901760
    %v576 = vsub.f32 %v77, %v575
    %577 = vmatpush1.msra.mxu0 %v576
    %578 = vmatprep.subr.mxu0 0.0
    %579 = vmatpush2.msra.mxu0 0.0
    %580 = vmatprep.subr.mxu0 0.0
    %581 = vmatpush2.msra.mxu0 0.0
    %582 = vmatprep.subr.mxu0 0.0
    %583 = vmatpush2.msra.mxu0 0.0
    %584 = vmatprep.subr.mxu0 0.0
    %585 = vmatpush2.msra.mxu0 0.0
    %586 = vmatprep.subr.mxu0 0.0
    %587 = vmatpush2.msra.mxu0 0.0
    %588 = vmatprep.subr.mxu0 0.0
    %589 = vmatpush2.msra.mxu0 0.0
    %590 = vmatprep.subr.mxu0 0.0
    %591 = vmatpush2.msra.mxu0 0.0
    %592 = vmatprep.subr.mxu0 0.0
    %593 = vmatpush2.msra.mxu0 0.0
    %594 = vmatprep.subr.mxu0 0.0
    %595 = vmatpush2.msra.mxu0 0.0
    %596 = vmatprep.subr.mxu0 0.0
    %597 = vmatpush2.msra.mxu0 0.0
    %598 = vmatprep.subr.mxu0 0.0
    %599 = vmatpush2.msra.mxu0 0.0
    %600 = vmatprep.subr.mxu0 0.0
    %601 = vmatpush2.msra.mxu0 0.0
    %602 = vmatprep.subr.mxu0 0.0
    %603 = vmatpush2.msra.mxu0 0.0
    %604 = vmatprep.subr.mxu0 0.0
    %605 = vmatpush2.msra.mxu0 0.0
    %606 = vmatprep.subr.mxu0 0.0
    %607 = vmatpush2.msra.mxu0 0.0
    %608 = vmatprep.subr.mxu0 0.0
    %609 = vmatpush2.msra.mxu0 0.0
    %610 = vmatprep.mubr.f32.mxu0 0.0
    %v611 = vand.u32 %v75, 4294901760
    %v612 = vsub.f32 %v75, %v611
    %613 = vmatmul.mubr.f32.gmra.mxu0 %v612
    %v614 = vpop.f32.mrf.mxu0
    %v615 = vadd.f32 %v478, %v614
    %v616 = vpop.f32.mrf.mxu0
    %v617 = vadd.f32 %v480, %v616
    %618 = vdwg.mxu0
    %v619 = vand.u32 %v123, 4294901760
    %620 = vmatprep.subr.mxu0 %v619
    %v621 = vand.u32 %v122, 4294901760
    %622 = vmatpush1.msra.mxu0 %v621
    %v623 = vand.u32 %v120, 4294901760
    %624 = vmatprep.subr.mxu0 %v623
    %v625 = vand.u32 %v119, 4294901760
    %626 = vmatpush1.msra.mxu0 %v625
    %v627 = vand.u32 %v117, 4294901760
    %628 = vmatprep.subr.mxu0 %v627
    %v629 = vand.u32 %v116, 4294901760
    %630 = vmatpush1.msra.mxu0 %v629
    %v631 = vand.u32 %v114, 4294901760
    %632 = vmatprep.subr.mxu0 %v631
    %v633 = vand.u32 %v113, 4294901760
    %634 = vmatpush1.msra.mxu0 %v633
    %v635 = vand.u32 %v111, 4294901760
    %636 = vmatprep.subr.mxu0 %v635
    %v637 = vand.u32 %v110, 4294901760
    %638 = vmatpush1.msra.mxu0 %v637
    %v639 = vand.u32 %v108, 4294901760
    %640 = vmatprep.subr.mxu0 %v639
    %v641 = vand.u32 %v107, 4294901760
    %642 = vmatpush1.msra.mxu0 %v641
    %v643 = vand.u32 %v105, 4294901760
    %644 = vmatprep.subr.mxu0 %v643
    %v645 = vand.u32 %v104, 4294901760
    %646 = vmatpush1.msra.mxu0 %v645
    %v647 = vand.u32 %v102, 4294901760
    %648 = vmatprep.subr.mxu0 %v647
    %v649 = vand.u32 %v101, 4294901760
    %650 = vmatpush1.msra.mxu0 %v649
    %v651 = vand.u32 %v99, 4294901760
    %652 = vmatprep.subr.mxu0 %v651
    %v653 = vand.u32 %v98, 4294901760
    %654 = vmatpush1.msra.mxu0 %v653
    %v655 = vand.u32 %v96, 4294901760
    %656 = vmatprep.subr.mxu0 %v655
    %v657 = vand.u32 %v95, 4294901760
    %658 = vmatpush1.msra.mxu0 %v657
    %v659 = vand.u32 %v93, 4294901760
    %660 = vmatprep.subr.mxu0 %v659
    %v661 = vand.u32 %v92, 4294901760
    %662 = vmatpush1.msra.mxu0 %v661
    %v663 = vand.u32 %v90, 4294901760
    %664 = vmatprep.subr.mxu0 %v663
    %v665 = vand.u32 %v89, 4294901760
    %666 = vmatpush1.msra.mxu0 %v665
    %v667 = vand.u32 %v87, 4294901760
    %668 = vmatprep.subr.mxu0 %v667
    %v669 = vand.u32 %v86, 4294901760
    %670 = vmatpush1.msra.mxu0 %v669
    %v671 = vand.u32 %v84, 4294901760
    %672 = vmatprep.subr.mxu0 %v671
    %v673 = vand.u32 %v83, 4294901760
    %674 = vmatpush1.msra.mxu0 %v673
    %v675 = vand.u32 %v81, 4294901760
    %676 = vmatprep.subr.mxu0 %v675
    %v677 = vand.u32 %v80, 4294901760
    %678 = vmatpush1.msra.mxu0 %v677
    %v679 = vand.u32 %v78, 4294901760
    %680 = vmatprep.subr.mxu0 %v679
    %v681 = vand.u32 %v77, 4294901760
    %682 = vmatpush1.msra.mxu0 %v681
    %683 = vmatprep.subr.mxu0 0.0
    %684 = vmatpush2.msra.mxu0 0.0
    %685 = vmatprep.subr.mxu0 0.0
    %686 = vmatpush2.msra.mxu0 0.0
    %687 = vmatprep.subr.mxu0 0.0
    %688 = vmatpush2.msra.mxu0 0.0
    %689 = vmatprep.subr.mxu0 0.0
    %690 = vmatpush2.msra.mxu0 0.0
    %691 = vmatprep.subr.mxu0 0.0
    %692 = vmatpush2.msra.mxu0 0.0
    %693 = vmatprep.subr.mxu0 0.0
    %694 = vmatpush2.msra.mxu0 0.0
    %695 = vmatprep.subr.mxu0 0.0
    %696 = vmatpush2.msra.mxu0 0.0
    %697 = vmatprep.subr.mxu0 0.0
    %698 = vmatpush2.msra.mxu0 0.0
    %699 = vmatprep.subr.mxu0 0.0
    %700 = vmatpush2.msra.mxu0 0.0
    %701 = vmatprep.subr.mxu0 0.0
    %702 = vmatpush2.msra.mxu0 0.0
    %703 = vmatprep.subr.mxu0 0.0
    %704 = vmatpush2.msra.mxu0 0.0
    %705 = vmatprep.subr.mxu0 0.0
    %706 = vmatpush2.msra.mxu0 0.0
    %707 = vmatprep.subr.mxu0 0.0
    %708 = vmatpush2.msra.mxu0 0.0
    %709 = vmatprep.subr.mxu0 0.0
    %710 = vmatpush2.msra.mxu0 0.0
    %711 = vmatprep.subr.mxu0 0.0
    %712 = vmatpush2.msra.mxu0 0.0
    %713 = vmatprep.subr.mxu0 0.0
    %714 = vmatpush2.msra.mxu0 0.0
    %715 = vmatprep.mubr.f32.mxu0 0.0
    %v716 = vand.u32 %v75, 4294901760
    %v717 = vsub.f32 %v75, %v716
    %v718 = vand.u32 %v717, 4294901760
    %719 = vmatmul.mubr.f32.gmra.mxu0 %v718
    %v720 = vpop.f32.mrf.mxu0
    %v721 = vadd.f32 %v615, %v720
    %v722 = vpop.f32.mrf.mxu0
    %v723 = vadd.f32 %v617, %v722
    %724 = vdwg.mxu0
    %v725 = vand.u32 %v123, 4294901760
    %v726 = vsub.f32 %v123, %v725
    %v727 = vand.u32 %v726, 4294901760
    %728 = vmatprep.subr.mxu0 %v727
    %v729 = vand.u32 %v122, 4294901760
    %v730 = vsub.f32 %v122, %v729
    %v731 = vand.u32 %v730, 4294901760
    %732 = vmatpush1.msra.mxu0 %v731
    %v733 = vand.u32 %v120, 4294901760
    %v734 = vsub.f32 %v120, %v733
    %v735 = vand.u32 %v734, 4294901760
    %736 = vmatprep.subr.mxu0 %v735
    %v737 = vand.u32 %v119, 4294901760
    %v738 = vsub.f32 %v119, %v737
    %v739 = vand.u32 %v738, 4294901760
    %740 = vmatpush1.msra.mxu0 %v739
    %v741 = vand.u32 %v117, 4294901760
    %v742 = vsub.f32 %v117, %v741
    %v743 = vand.u32 %v742, 4294901760
    %744 = vmatprep.subr.mxu0 %v743
    %v745 = vand.u32 %v116, 4294901760
    %v746 = vsub.f32 %v116, %v745
    %v747 = vand.u32 %v746, 4294901760
    %748 = vmatpush1.msra.mxu0 %v747
    %v749 = vand.u32 %v114, 4294901760
    %v750 = vsub.f32 %v114, %v749
    %v751 = vand.u32 %v750, 4294901760
    %752 = vmatprep.subr.mxu0 %v751
    %v753 = vand.u32 %v113, 4294901760
    %v754 = vsub.f32 %v113, %v753
    %v755 = vand.u32 %v754, 4294901760
    %756 = vmatpush1.msra.mxu0 %v755
    %v757 = vand.u32 %v111, 4294901760
    %v758 = vsub.f32 %v111, %v757
    %v759 = vand.u32 %v758, 4294901760
    %760 = vmatprep.subr.mxu0 %v759
    %v761 = vand.u32 %v110, 4294901760
    %v762 = vsub.f32 %v110, %v761
    %v763 = vand.u32 %v762, 4294901760
    %764 = vmatpush1.msra.mxu0 %v763
    %v765 = vand.u32 %v108, 4294901760
    %v766 = vsub.f32 %v108, %v765
    %v767 = vand.u32 %v766, 4294901760
    %768 = vmatprep.subr.mxu0 %v767
    %v769 = vand.u32 %v107, 4294901760
    %v770 = vsub.f32 %v107, %v769
    %v771 = vand.u32 %v770, 4294901760
    %772 = vmatpush1.msra.mxu0 %v771
    %v773 = vand.u32 %v105, 4294901760
    %v774 = vsub.f32 %v105, %v773
    %v775 = vand.u32 %v774, 4294901760
    %776 = vmatprep.subr.mxu0 %v775
    %v777 = vand.u32 %v104, 4294901760
    %v778 = vsub.f32 %v104, %v777
    %v779 = vand.u32 %v778, 4294901760
    %780 = vmatpush1.msra.mxu0 %v779
    %v781 = vand.u32 %v102, 4294901760
    %v782 = vsub.f32 %v102, %v781
    %v783 = vand.u32 %v782, 4294901760
    %784 = vmatprep.subr.mxu0 %v783
    %v785 = vand.u32 %v101, 4294901760
    %v786 = vsub.f32 %v101, %v785
    %v787 = vand.u32 %v786, 4294901760
    %788 = vmatpush1.msra.mxu0 %v787
    %v789 = vand.u32 %v99, 4294901760
    %v790 = vsub.f32 %v99, %v789
    %v791 = vand.u32 %v790, 4294901760
    %792 = vmatprep.subr.mxu0 %v791
    %v793 = vand.u32 %v98, 4294901760
    %v794 = vsub.f32 %v98, %v793
    %v795 = vand.u32 %v794, 4294901760
    %796 = vmatpush1.msra.mxu0 %v795
    %v797 = vand.u32 %v96, 4294901760
    %v798 = vsub.f32 %v96, %v797
    %v799 = vand.u32 %v798, 4294901760
    %800 = vmatprep.subr.mxu0 %v799
    %v801 = vand.u32 %v95, 4294901760
    %v802 = vsub.f32 %v95, %v801
    %v803 = vand.u32 %v802, 4294901760
    %804 = vmatpush1.msra.mxu0 %v803
    %v805 = vand.u32 %v93, 4294901760
    %v806 = vsub.f32 %v93, %v805
    %v807 = vand.u32 %v806, 4294901760
    %808 = vmatprep.subr.mxu0 %v807
    %v809 = vand.u32 %v92, 4294901760
    %v810 = vsub.f32 %v92, %v809
    %v811 = vand.u32 %v810, 4294901760
    %812 = vmatpush1.msra.mxu0 %v811
    %v813 = vand.u32 %v90, 4294901760
    %v814 = vsub.f32 %v90, %v813
    %v815 = vand.u32 %v814, 4294901760
    %816 = vmatprep.subr.mxu0 %v815
    %v817 = vand.u32 %v89, 4294901760
    %v818 = vsub.f32 %v89, %v817
    %v819 = vand.u32 %v818, 4294901760
    %820 = vmatpush1.msra.mxu0 %v819
    %v821 = vand.u32 %v87, 4294901760
    %v822 = vsub.f32 %v87, %v821
    %v823 = vand.u32 %v822, 4294901760
    %824 = vmatprep.subr.mxu0 %v823
    %v825 = vand.u32 %v86, 4294901760
    %v826 = vsub.f32 %v86, %v825
    %v827 = vand.u32 %v826, 4294901760
    %828 = vmatpush1.msra.mxu0 %v827
    %v829 = vand.u32 %v84, 4294901760
    %v830 = vsub.f32 %v84, %v829
    %v831 = vand.u32 %v830, 4294901760
    %832 = vmatprep.subr.mxu0 %v831
    %v833 = vand.u32 %v83, 4294901760
    %v834 = vsub.f32 %v83, %v833
    %v835 = vand.u32 %v834, 4294901760
    %836 = vmatpush1.msra.mxu0 %v835
    %v837 = vand.u32 %v81, 4294901760
    %v838 = vsub.f32 %v81, %v837
    %v839 = vand.u32 %v838, 4294901760
    %840 = vmatprep.subr.mxu0 %v839
    %v841 = vand.u32 %v80, 4294901760
    %v842 = vsub.f32 %v80, %v841
    %v843 = vand.u32 %v842, 4294901760
    %844 = vmatpush1.msra.mxu0 %v843
    %v845 = vand.u32 %v78, 4294901760
    %v846 = vsub.f32 %v78, %v845
    %v847 = vand.u32 %v846, 4294901760
    %848 = vmatprep.subr.mxu0 %v847
    %v849 = vand.u32 %v77, 4294901760
    %v850 = vsub.f32 %v77, %v849
    %v851 = vand.u32 %v850, 4294901760
    %852 = vmatpush1.msra.mxu0 %v851
    %853 = vmatprep.subr.mxu0 0.0
    %854 = vmatpush2.msra.mxu0 0.0
    %855 = vmatprep.subr.mxu0 0.0
    %856 = vmatpush2.msra.mxu0 0.0
    %857 = vmatprep.subr.mxu0 0.0
    %858 = vmatpush2.msra.mxu0 0.0
    %859 = vmatprep.subr.mxu0 0.0
    %860 = vmatpush2.msra.mxu0 0.0
    %861 = vmatprep.subr.mxu0 0.0
    %862 = vmatpush2.msra.mxu0 0.0
    %863 = vmatprep.subr.mxu0 0.0
    %864 = vmatpush2.msra.mxu0 0.0
    %865 = vmatprep.subr.mxu0 0.0
    %866 = vmatpush2.msra.mxu0 0.0
    %867 = vmatprep.subr.mxu0 0.0
    %868 = vmatpush2.msra.mxu0 0.0
    %869 = vmatprep.subr.mxu0 0.0
    %870 = vmatpush2.msra.mxu0 0.0
    %871 = vmatprep.subr.mxu0 0.0
    %872 = vmatpush2.msra.mxu0 0.0
    %873 = vmatprep.subr.mxu0 0.0
    %874 = vmatpush2.msra.mxu0 0.0
    %875 = vmatprep.subr.mxu0 0.0
    %876 = vmatpush2.msra.mxu0 0.0
    %877 = vmatprep.subr.mxu0 0.0
    %878 = vmatpush2.msra.mxu0 0.0
    %879 = vmatprep.subr.mxu0 0.0
    %880 = vmatpush2.msra.mxu0 0.0
    %881 = vmatprep.subr.mxu0 0.0
    %882 = vmatpush2.msra.mxu0 0.0
    %883 = vmatprep.subr.mxu0 0.0
    %884 = vmatpush2.msra.mxu0 0.0
    %885 = vmatprep.mubr.f32.mxu0 0.0
    %v886 = vand.u32 %v75, 4294901760
    %887 = vmatmul.mubr.f32.gmra.mxu0 %v886
    %v888 = vpop.f32.mrf.mxu0
    %v889 = vadd.f32 %v721, %v888
    %v890 = vpop.f32.mrf.mxu0
    %v891 = vadd.f32 %v723, %v890
    %892 = vdwg.mxu0
    %v893 = vand.u32 %v123, 4294901760
    %894 = vmatprep.subr.mxu0 %v893
    %v895 = vand.u32 %v122, 4294901760
    %896 = vmatpush1.msra.mxu0 %v895
    %v897 = vand.u32 %v120, 4294901760
    %898 = vmatprep.subr.mxu0 %v897
    %v899 = vand.u32 %v119, 4294901760
    %900 = vmatpush1.msra.mxu0 %v899
    %v901 = vand.u32 %v117, 4294901760
    %902 = vmatprep.subr.mxu0 %v901
    %v903 = vand.u32 %v116, 4294901760
    %904 = vmatpush1.msra.mxu0 %v903
    %v905 = vand.u32 %v114, 4294901760
    %906 = vmatprep.subr.mxu0 %v905
    %v907 = vand.u32 %v113, 4294901760
    %908 = vmatpush1.msra.mxu0 %v907
    %v909 = vand.u32 %v111, 4294901760
    %910 = vmatprep.subr.mxu0 %v909
    %v911 = vand.u32 %v110, 4294901760
    %912 = vmatpush1.msra.mxu0 %v911
    %v913 = vand.u32 %v108, 4294901760
    %914 = vmatprep.subr.mxu0 %v913
    %v915 = vand.u32 %v107, 4294901760
    %916 = vmatpush1.msra.mxu0 %v915
    %v917 = vand.u32 %v105, 4294901760
    %918 = vmatprep.subr.mxu0 %v917
    %v919 = vand.u32 %v104, 4294901760
    %920 = vmatpush1.msra.mxu0 %v919
    %v921 = vand.u32 %v102, 4294901760
    %922 = vmatprep.subr.mxu0 %v921
    %v923 = vand.u32 %v101, 4294901760
    %924 = vmatpush1.msra.mxu0 %v923
    %v925 = vand.u32 %v99, 4294901760
    %926 = vmatprep.subr.mxu0 %v925
    %v927 = vand.u32 %v98, 4294901760
    %928 = vmatpush1.msra.mxu0 %v927
    %v929 = vand.u32 %v96, 4294901760
    %930 = vmatprep.subr.mxu0 %v929
    %v931 = vand.u32 %v95, 4294901760
    %932 = vmatpush1.msra.mxu0 %v931
    %v933 = vand.u32 %v93, 4294901760
    %934 = vmatprep.subr.mxu0 %v933
    %v935 = vand.u32 %v92, 4294901760
    %936 = vmatpush1.msra.mxu0 %v935
    %v937 = vand.u32 %v90, 4294901760
    %938 = vmatprep.subr.mxu0 %v937
    %v939 = vand.u32 %v89, 4294901760
    %940 = vmatpush1.msra.mxu0 %v939
    %v941 = vand.u32 %v87, 4294901760
    %942 = vmatprep.subr.mxu0 %v941
    %v943 = vand.u32 %v86, 4294901760
    %944 = vmatpush1.msra.mxu0 %v943
    %v945 = vand.u32 %v84, 4294901760
    %946 = vmatprep.subr.mxu0 %v945
    %v947 = vand.u32 %v83, 4294901760
    %948 = vmatpush1.msra.mxu0 %v947
    %v949 = vand.u32 %v81, 4294901760
    %950 = vmatprep.subr.mxu0 %v949
    %v951 = vand.u32 %v80, 4294901760
    %952 = vmatpush1.msra.mxu0 %v951
    %v953 = vand.u32 %v78, 4294901760
    %954 = vmatprep.subr.mxu0 %v953
    %v955 = vand.u32 %v77, 4294901760
    %956 = vmatpush1.msra.mxu0 %v955
    %957 = vmatprep.subr.mxu0 0.0
    %958 = vmatpush2.msra.mxu0 0.0
    %959 = vmatprep.subr.mxu0 0.0
    %960 = vmatpush2.msra.mxu0 0.0
    %961 = vmatprep.subr.mxu0 0.0
    %962 = vmatpush2.msra.mxu0 0.0
    %963 = vmatprep.subr.mxu0 0.0
    %964 = vmatpush2.msra.mxu0 0.0
    %965 = vmatprep.subr.mxu0 0.0
    %966 = vmatpush2.msra.mxu0 0.0
    %967 = vmatprep.subr.mxu0 0.0
    %968 = vmatpush2.msra.mxu0 0.0
    %969 = vmatprep.subr.mxu0 0.0
    %970 = vmatpush2.msra.mxu0 0.0
    %971 = vmatprep.subr.mxu0 0.0
    %972 = vmatpush2.msra.mxu0 0.0
    %973 = vmatprep.subr.mxu0 0.0
    %974 = vmatpush2.msra.mxu0 0.0
    %975 = vmatprep.subr.mxu0 0.0
    %976 = vmatpush2.msra.mxu0 0.0
    %977 = vmatprep.subr.mxu0 0.0
    %978 = vmatpush2.msra.mxu0 0.0
    %979 = vmatprep.subr.mxu0 0.0
    %980 = vmatpush2.msra.mxu0 0.0
    %981 = vmatprep.subr.mxu0 0.0
    %982 = vmatpush2.msra.mxu0 0.0
    %983 = vmatprep.subr.mxu0 0.0
    %984 = vmatpush2.msra.mxu0 0.0
    %985 = vmatprep.subr.mxu0 0.0
    %986 = vmatpush2.msra.mxu0 0.0
    %987 = vmatprep.subr.mxu0 0.0
    %988 = vmatpush2.msra.mxu0 0.0
    %989 = vmatprep.mubr.f32.mxu0 0.0
    %v990 = vand.u32 %v75, 4294901760
    %991 = vmatmul.mubr.f32.gmra.mxu0 %v990
    %v992 = vpop.f32.mrf.mxu0
    %v993 = vadd.f32 %v889, %v992
    %v994 = vpop.f32.mrf.mxu0
    %v995 = vadd.f32 %v891, %v994
    %996 = vdwg.mxu0
    %997 = vmatprep.subr.mxu0 0.0
    %v998 = vand.u32 %v124, 4294901760
    %999 = vmatpush1.msra.mxu0 %v998
    %1000 = vmatprep.subr.mxu0 0.0
    %v1001 = vand.u32 %v121, 4294901760
    %1002 = vmatpush1.msra.mxu0 %v1001
    %1003 = vmatprep.subr.mxu0 0.0
    %v1004 = vand.u32 %v118, 4294901760
    %1005 = vmatpush1.msra.mxu0 %v1004
    %1006 = vmatprep.subr.mxu0 0.0
    %v1007 = vand.u32 %v115, 4294901760
    %1008 = vmatpush1.msra.mxu0 %v1007
    %1009 = vmatprep.subr.mxu0 0.0
    %v1010 = vand.u32 %v112, 4294901760
    %1011 = vmatpush1.msra.mxu0 %v1010
    %1012 = vmatprep.subr.mxu0 0.0
    %v1013 = vand.u32 %v109, 4294901760
    %1014 = vmatpush1.msra.mxu0 %v1013
    %1015 = vmatprep.subr.mxu0 0.0
    %v1016 = vand.u32 %v106, 4294901760
    %1017 = vmatpush1.msra.mxu0 %v1016
    %1018 = vmatprep.subr.mxu0 0.0
    %v1019 = vand.u32 %v103, 4294901760
    %1020 = vmatpush1.msra.mxu0 %v1019
    %1021 = vmatprep.subr.mxu0 0.0
    %v1022 = vand.u32 %v100, 4294901760
    %1023 = vmatpush1.msra.mxu0 %v1022
    %1024 = vmatprep.subr.mxu0 0.0
    %v1025 = vand.u32 %v97, 4294901760
    %1026 = vmatpush1.msra.mxu0 %v1025
    %1027 = vmatprep.subr.mxu0 0.0
    %v1028 = vand.u32 %v94, 4294901760
    %1029 = vmatpush1.msra.mxu0 %v1028
    %1030 = vmatprep.subr.mxu0 0.0
    %v1031 = vand.u32 %v91, 4294901760
    %1032 = vmatpush1.msra.mxu0 %v1031
    %1033 = vmatprep.subr.mxu0 0.0
    %v1034 = vand.u32 %v88, 4294901760
    %1035 = vmatpush1.msra.mxu0 %v1034
    %1036 = vmatprep.subr.mxu0 0.0
    %v1037 = vand.u32 %v85, 4294901760
    %1038 = vmatpush1.msra.mxu0 %v1037
    %1039 = vmatprep.subr.mxu0 0.0
    %v1040 = vand.u32 %v82, 4294901760
    %1041 = vmatpush1.msra.mxu0 %v1040
    %1042 = vmatprep.subr.mxu0 0.0
    %v1043 = vand.u32 %v79, 4294901760
    %1044 = vmatpush1.msra.mxu0 %v1043
    %1045 = vmatprep.subr.mxu0 0.0
    %1046 = vmatpush2.msra.mxu0 0.0
    %1047 = vmatprep.subr.mxu0 0.0
    %1048 = vmatpush2.msra.mxu0 0.0
    %1049 = vmatprep.subr.mxu0 0.0
    %1050 = vmatpush2.msra.mxu0 0.0
    %1051 = vmatprep.subr.mxu0 0.0
    %1052 = vmatpush2.msra.mxu0 0.0
    %1053 = vmatprep.subr.mxu0 0.0
    %1054 = vmatpush2.msra.mxu0 0.0
    %1055 = vmatprep.subr.mxu0 0.0
    %1056 = vmatpush2.msra.mxu0 0.0
    %1057 = vmatprep.subr.mxu0 0.0
    %1058 = vmatpush2.msra.mxu0 0.0
    %1059 = vmatprep.subr.mxu0 0.0
    %1060 = vmatpush2.msra.mxu0 0.0
    %1061 = vmatprep.subr.mxu0 0.0
    %1062 = vmatpush2.msra.mxu0 0.0
    %1063 = vmatprep.subr.mxu0 0.0
    %1064 = vmatpush2.msra.mxu0 0.0
    %1065 = vmatprep.subr.mxu0 0.0
    %1066 = vmatpush2.msra.mxu0 0.0
    %1067 = vmatprep.subr.mxu0 0.0
    %1068 = vmatpush2.msra.mxu0 0.0
    %1069 = vmatprep.subr.mxu0 0.0
    %1070 = vmatpush2.msra.mxu0 0.0
    %1071 = vmatprep.subr.mxu0 0.0
    %1072 = vmatpush2.msra.mxu0 0.0
    %1073 = vmatprep.subr.mxu0 0.0
    %1074 = vmatpush2.msra.mxu0 0.0
    %1075 = vmatprep.subr.mxu0 0.0
    %1076 = vmatpush2.msra.mxu0 0.0
    %1077 = vmatprep.mubr.f32.mxu0 0.0
    %v1078 = vand.u32 %v75, 4294901760
    %v1079 = vsub.f32 %v75, %v1078
    %v1080 = vand.u32 %v1079, 4294901760
    %v1081 = vsub.f32 %v1079, %v1080
    %v1082 = vand.u32 %v1081, 4294901760
    %1083 = vmatmul.mubr.f32.gmra.mxu0 %v1082
    %v1084 = vpop.f32.mrf.mxu0
    %v1085 = vadd.f32 %v138, %v1084
    %v1086 = vpop.f32.mrf.mxu0
    %1087 = vdwg.mxu0
    %1088 = vmatprep.subr.mxu0 0.0
    %v1089 = vand.u32 %v124, 4294901760
    %v1090 = vsub.f32 %v124, %v1089
    %v1091 = vand.u32 %v1090, 4294901760
    %v1092 = vsub.f32 %v1090, %v1091
    %v1093 = vand.u32 %v1092, 4294901760
    %1094 = vmatpush1.msra.mxu0 %v1093
    %1095 = vmatprep.subr.mxu0 0.0
    %v1096 = vand.u32 %v121, 4294901760
    %v1097 = vsub.f32 %v121, %v1096
    %v1098 = vand.u32 %v1097, 4294901760
    %v1099 = vsub.f32 %v1097, %v1098
    %v1100 = vand.u32 %v1099, 4294901760
    %1101 = vmatpush1.msra.mxu0 %v1100
    %1102 = vmatprep.subr.mxu0 0.0
    %v1103 = vand.u32 %v118, 4294901760
    %v1104 = vsub.f32 %v118, %v1103
    %v1105 = vand.u32 %v1104, 4294901760
    %v1106 = vsub.f32 %v1104, %v1105
    %v1107 = vand.u32 %v1106, 4294901760
    %1108 = vmatpush1.msra.mxu0 %v1107
    %1109 = vmatprep.subr.mxu0 0.0
    %v1110 = vand.u32 %v115, 4294901760
    %v1111 = vsub.f32 %v115, %v1110
    %v1112 = vand.u32 %v1111, 4294901760
    %v1113 = vsub.f32 %v1111, %v1112
    %v1114 = vand.u32 %v1113, 4294901760
    %1115 = vmatpush1.msra.mxu0 %v1114
    %1116 = vmatprep.subr.mxu0 0.0
    %v1117 = vand.u32 %v112, 4294901760
    %v1118 = vsub.f32 %v112, %v1117
    %v1119 = vand.u32 %v1118, 4294901760
    %v1120 = vsub.f32 %v1118, %v1119
    %v1121 = vand.u32 %v1120, 4294901760
    %1122 = vmatpush1.msra.mxu0 %v1121
    %1123 = vmatprep.subr.mxu0 0.0
    %v1124 = vand.u32 %v109, 4294901760
    %v1125 = vsub.f32 %v109, %v1124
    %v1126 = vand.u32 %v1125, 4294901760
    %v1127 = vsub.f32 %v1125, %v1126
    %v1128 = vand.u32 %v1127, 4294901760
    %1129 = vmatpush1.msra.mxu0 %v1128
    %1130 = vmatprep.subr.mxu0 0.0
    %v1131 = vand.u32 %v106, 4294901760
    %v1132 = vsub.f32 %v106, %v1131
    %v1133 = vand.u32 %v1132, 4294901760
    %v1134 = vsub.f32 %v1132, %v1133
    %v1135 = vand.u32 %v1134, 4294901760
    %1136 = vmatpush1.msra.mxu0 %v1135
    %1137 = vmatprep.subr.mxu0 0.0
    %v1138 = vand.u32 %v103, 4294901760
    %v1139 = vsub.f32 %v103, %v1138
    %v1140 = vand.u32 %v1139, 4294901760
    %v1141 = vsub.f32 %v1139, %v1140
    %v1142 = vand.u32 %v1141, 4294901760
    %1143 = vmatpush1.msra.mxu0 %v1142
    %1144 = vmatprep.subr.mxu0 0.0
    %v1145 = vand.u32 %v100, 4294901760
    %v1146 = vsub.f32 %v100, %v1145
    %v1147 = vand.u32 %v1146, 4294901760
    %v1148 = vsub.f32 %v1146, %v1147
    %v1149 = vand.u32 %v1148, 4294901760
    %1150 = vmatpush1.msra.mxu0 %v1149
    %1151 = vmatprep.subr.mxu0 0.0
    %v1152 = vand.u32 %v97, 4294901760
    %v1153 = vsub.f32 %v97, %v1152
    %v1154 = vand.u32 %v1153, 4294901760
    %v1155 = vsub.f32 %v1153, %v1154
    %v1156 = vand.u32 %v1155, 4294901760
    %1157 = vmatpush1.msra.mxu0 %v1156
    %1158 = vmatprep.subr.mxu0 0.0
    %v1159 = vand.u32 %v94, 4294901760
    %v1160 = vsub.f32 %v94, %v1159
    %v1161 = vand.u32 %v1160, 4294901760
    %v1162 = vsub.f32 %v1160, %v1161
    %v1163 = vand.u32 %v1162, 4294901760
    %1164 = vmatpush1.msra.mxu0 %v1163
    %1165 = vmatprep.subr.mxu0 0.0
    %v1166 = vand.u32 %v91, 4294901760
    %v1167 = vsub.f32 %v91, %v1166
    %v1168 = vand.u32 %v1167, 4294901760
    %v1169 = vsub.f32 %v1167, %v1168
    %v1170 = vand.u32 %v1169, 4294901760
    %1171 = vmatpush1.msra.mxu0 %v1170
    %1172 = vmatprep.subr.mxu0 0.0
    %v1173 = vand.u32 %v88, 4294901760
    %v1174 = vsub.f32 %v88, %v1173
    %v1175 = vand.u32 %v1174, 4294901760
    %v1176 = vsub.f32 %v1174, %v1175
    %v1177 = vand.u32 %v1176, 4294901760
    %1178 = vmatpush1.msra.mxu0 %v1177
    %1179 = vmatprep.subr.mxu0 0.0
    %v1180 = vand.u32 %v85, 4294901760
    %v1181 = vsub.f32 %v85, %v1180
    %v1182 = vand.u32 %v1181, 4294901760
    %v1183 = vsub.f32 %v1181, %v1182
    %v1184 = vand.u32 %v1183, 4294901760
    %1185 = vmatpush1.msra.mxu0 %v1184
    %1186 = vmatprep.subr.mxu0 0.0
    %v1187 = vand.u32 %v82, 4294901760
    %v1188 = vsub.f32 %v82, %v1187
    %v1189 = vand.u32 %v1188, 4294901760
    %v1190 = vsub.f32 %v1188, %v1189
    %v1191 = vand.u32 %v1190, 4294901760
    %1192 = vmatpush1.msra.mxu0 %v1191
    %1193 = vmatprep.subr.mxu0 0.0
    %v1194 = vand.u32 %v79, 4294901760
    %v1195 = vsub.f32 %v79, %v1194
    %v1196 = vand.u32 %v1195, 4294901760
    %v1197 = vsub.f32 %v1195, %v1196
    %v1198 = vand.u32 %v1197, 4294901760
    %1199 = vmatpush1.msra.mxu0 %v1198
    %1200 = vmatprep.subr.mxu0 0.0
    %1201 = vmatpush2.msra.mxu0 0.0
    %1202 = vmatprep.subr.mxu0 0.0
    %1203 = vmatpush2.msra.mxu0 0.0
    %1204 = vmatprep.subr.mxu0 0.0
    %1205 = vmatpush2.msra.mxu0 0.0
    %1206 = vmatprep.subr.mxu0 0.0
    %1207 = vmatpush2.msra.mxu0 0.0
    %1208 = vmatprep.subr.mxu0 0.0
    %1209 = vmatpush2.msra.mxu0 0.0
    %1210 = vmatprep.subr.mxu0 0.0
    %1211 = vmatpush2.msra.mxu0 0.0
    %1212 = vmatprep.subr.mxu0 0.0
    %1213 = vmatpush2.msra.mxu0 0.0
    %1214 = vmatprep.subr.mxu0 0.0
    %1215 = vmatpush2.msra.mxu0 0.0
    %1216 = vmatprep.subr.mxu0 0.0
    %1217 = vmatpush2.msra.mxu0 0.0
    %1218 = vmatprep.subr.mxu0 0.0
    %1219 = vmatpush2.msra.mxu0 0.0
    %1220 = vmatprep.subr.mxu0 0.0
    %1221 = vmatpush2.msra.mxu0 0.0
    %1222 = vmatprep.subr.mxu0 0.0
    %1223 = vmatpush2.msra.mxu0 0.0
    %1224 = vmatprep.subr.mxu0 0.0
    %1225 = vmatpush2.msra.mxu0 0.0
    %1226 = vmatprep.subr.mxu0 0.0
    %1227 = vmatpush2.msra.mxu0 0.0
    %1228 = vmatprep.subr.mxu0 0.0
    %1229 = vmatpush2.msra.mxu0 0.0
    %1230 = vmatprep.subr.mxu0 0.0
    %1231 = vmatpush2.msra.mxu0 0.0
    %1232 = vmatprep.mubr.f32.mxu0 0.0
    %v1233 = vand.u32 %v75, 4294901760
    %1234 = vmatmul.mubr.f32.gmra.mxu0 %v1233
    %v1235 = vpop.f32.mrf.mxu0
    %v1236 = vadd.f32 %v1085, %v1235
    %v1237 = vpop.f32.mrf.mxu0
    %1238 = vdwg.mxu0
    %1239 = vmatprep.subr.mxu0 0.0
    %v1240 = vand.u32 %v124, 4294901760
    %v1241 = vsub.f32 %v124, %v1240
    %1242 = vmatpush1.msra.mxu0 %v1241
    %1243 = vmatprep.subr.mxu0 0.0
    %v1244 = vand.u32 %v121, 4294901760
    %v1245 = vsub.f32 %v121, %v1244
    %1246 = vmatpush1.msra.mxu0 %v1245
    %1247 = vmatprep.subr.mxu0 0.0
    %v1248 = vand.u32 %v118, 4294901760
    %v1249 = vsub.f32 %v118, %v1248
    %1250 = vmatpush1.msra.mxu0 %v1249
    %1251 = vmatprep.subr.mxu0 0.0
    %v1252 = vand.u32 %v115, 4294901760
    %v1253 = vsub.f32 %v115, %v1252
    %1254 = vmatpush1.msra.mxu0 %v1253
    %1255 = vmatprep.subr.mxu0 0.0
    %v1256 = vand.u32 %v112, 4294901760
    %v1257 = vsub.f32 %v112, %v1256
    %1258 = vmatpush1.msra.mxu0 %v1257
    %1259 = vmatprep.subr.mxu0 0.0
    %v1260 = vand.u32 %v109, 4294901760
    %v1261 = vsub.f32 %v109, %v1260
    %1262 = vmatpush1.msra.mxu0 %v1261
    %1263 = vmatprep.subr.mxu0 0.0
    %v1264 = vand.u32 %v106, 4294901760
    %v1265 = vsub.f32 %v106, %v1264
    %1266 = vmatpush1.msra.mxu0 %v1265
    %1267 = vmatprep.subr.mxu0 0.0
    %v1268 = vand.u32 %v103, 4294901760
    %v1269 = vsub.f32 %v103, %v1268
    %1270 = vmatpush1.msra.mxu0 %v1269
    %1271 = vmatprep.subr.mxu0 0.0
    %v1272 = vand.u32 %v100, 4294901760
    %v1273 = vsub.f32 %v100, %v1272
    %1274 = vmatpush1.msra.mxu0 %v1273
    %1275 = vmatprep.subr.mxu0 0.0
    %v1276 = vand.u32 %v97, 4294901760
    %v1277 = vsub.f32 %v97, %v1276
    %1278 = vmatpush1.msra.mxu0 %v1277
    %1279 = vmatprep.subr.mxu0 0.0
    %v1280 = vand.u32 %v94, 4294901760
    %v1281 = vsub.f32 %v94, %v1280
    %1282 = vmatpush1.msra.mxu0 %v1281
    %1283 = vmatprep.subr.mxu0 0.0
    %v1284 = vand.u32 %v91, 4294901760
    %v1285 = vsub.f32 %v91, %v1284
    %1286 = vmatpush1.msra.mxu0 %v1285
    %1287 = vmatprep.subr.mxu0 0.0
    %v1288 = vand.u32 %v88, 4294901760
    %v1289 = vsub.f32 %v88, %v1288
    %1290 = vmatpush1.msra.mxu0 %v1289
    %1291 = vmatprep.subr.mxu0 0.0
    %v1292 = vand.u32 %v85, 4294901760
    %v1293 = vsub.f32 %v85, %v1292
    %1294 = vmatpush1.msra.mxu0 %v1293
    %1295 = vmatprep.subr.mxu0 0.0
    %v1296 = vand.u32 %v82, 4294901760
    %v1297 = vsub.f32 %v82, %v1296
    %1298 = vmatpush1.msra.mxu0 %v1297
    %1299 = vmatprep.subr.mxu0 0.0
    %v1300 = vand.u32 %v79, 4294901760
    %v1301 = vsub.f32 %v79, %v1300
    %1302 = vmatpush1.msra.mxu0 %v1301
    %1303 = vmatprep.subr.mxu0 0.0
    %1304 = vmatpush2.msra.mxu0 0.0
    %1305 = vmatprep.subr.mxu0 0.0
    %1306 = vmatpush2.msra.mxu0 0.0
    %1307 = vmatprep.subr.mxu0 0.0
    %1308 = vmatpush2.msra.mxu0 0.0
    %1309 = vmatprep.subr.mxu0 0.0
    %1310 = vmatpush2.msra.mxu0 0.0
    %1311 = vmatprep.subr.mxu0 0.0
    %1312 = vmatpush2.msra.mxu0 0.0
    %1313 = vmatprep.subr.mxu0 0.0
    %1314 = vmatpush2.msra.mxu0 0.0
    %1315 = vmatprep.subr.mxu0 0.0
    %1316 = vmatpush2.msra.mxu0 0.0
    %1317 = vmatprep.subr.mxu0 0.0
    %1318 = vmatpush2.msra.mxu0 0.0
    %1319 = vmatprep.subr.mxu0 0.0
    %1320 = vmatpush2.msra.mxu0 0.0
    %1321 = vmatprep.subr.mxu0 0.0
    %1322 = vmatpush2.msra.mxu0 0.0
    %1323 = vmatprep.subr.mxu0 0.0
    %1324 = vmatpush2.msra.mxu0 0.0
    %1325 = vmatprep.subr.mxu0 0.0
    %1326 = vmatpush2.msra.mxu0 0.0
    %1327 = vmatprep.subr.mxu0 0.0
    %1328 = vmatpush2.msra.mxu0 0.0
    %1329 = vmatprep.subr.mxu0 0.0
    %1330 = vmatpush2.msra.mxu0 0.0
    %1331 = vmatprep.subr.mxu0 0.0
    %1332 = vmatpush2.msra.mxu0 0.0
    %1333 = vmatprep.subr.mxu0 0.0
    %1334 = vmatpush2.msra.mxu0 0.0
    %1335 = vmatprep.mubr.f32.mxu0 0.0
    %v1336 = vand.u32 %v75, 4294901760
    %v1337 = vsub.f32 %v75, %v1336
    %1338 = vmatmul.mubr.f32.gmra.mxu0 %v1337
    %v1339 = vpop.f32.mrf.mxu0
    %v1340 = vadd.f32 %v1236, %v1339
    %v1341 = vpop.f32.mrf.mxu0
    %1342 = vdwg.mxu0
    %1343 = vmatprep.subr.mxu0 0.0
    %v1344 = vand.u32 %v124, 4294901760
    %1345 = vmatpush1.msra.mxu0 %v1344
    %1346 = vmatprep.subr.mxu0 0.0
    %v1347 = vand.u32 %v121, 4294901760
    %1348 = vmatpush1.msra.mxu0 %v1347
    %1349 = vmatprep.subr.mxu0 0.0
    %v1350 = vand.u32 %v118, 4294901760
    %1351 = vmatpush1.msra.mxu0 %v1350
    %1352 = vmatprep.subr.mxu0 0.0
    %v1353 = vand.u32 %v115, 4294901760
    %1354 = vmatpush1.msra.mxu0 %v1353
    %1355 = vmatprep.subr.mxu0 0.0
    %v1356 = vand.u32 %v112, 4294901760
    %1357 = vmatpush1.msra.mxu0 %v1356
    %1358 = vmatprep.subr.mxu0 0.0
    %v1359 = vand.u32 %v109, 4294901760
    %1360 = vmatpush1.msra.mxu0 %v1359
    %1361 = vmatprep.subr.mxu0 0.0
    %v1362 = vand.u32 %v106, 4294901760
    %1363 = vmatpush1.msra.mxu0 %v1362
    %1364 = vmatprep.subr.mxu0 0.0
    %v1365 = vand.u32 %v103, 4294901760
    %1366 = vmatpush1.msra.mxu0 %v1365
    %1367 = vmatprep.subr.mxu0 0.0
    %v1368 = vand.u32 %v100, 4294901760
    %1369 = vmatpush1.msra.mxu0 %v1368
    %1370 = vmatprep.subr.mxu0 0.0
    %v1371 = vand.u32 %v97, 4294901760
    %1372 = vmatpush1.msra.mxu0 %v1371
    %1373 = vmatprep.subr.mxu0 0.0
    %v1374 = vand.u32 %v94, 4294901760
    %1375 = vmatpush1.msra.mxu0 %v1374
    %1376 = vmatprep.subr.mxu0 0.0
    %v1377 = vand.u32 %v91, 4294901760
    %1378 = vmatpush1.msra.mxu0 %v1377
    %1379 = vmatprep.subr.mxu0 0.0
    %v1380 = vand.u32 %v88, 4294901760
    %1381 = vmatpush1.msra.mxu0 %v1380
    %1382 = vmatprep.subr.mxu0 0.0
    %v1383 = vand.u32 %v85, 4294901760
    %1384 = vmatpush1.msra.mxu0 %v1383
    %1385 = vmatprep.subr.mxu0 0.0
    %v1386 = vand.u32 %v82, 4294901760
    %1387 = vmatpush1.msra.mxu0 %v1386
    %1388 = vmatprep.subr.mxu0 0.0
    %v1389 = vand.u32 %v79, 4294901760
    %1390 = vmatpush1.msra.mxu0 %v1389
    %1391 = vmatprep.subr.mxu0 0.0
    %1392 = vmatpush2.msra.mxu0 0.0
    %1393 = vmatprep.subr.mxu0 0.0
    %1394 = vmatpush2.msra.mxu0 0.0
    %1395 = vmatprep.subr.mxu0 0.0
    %1396 = vmatpush2.msra.mxu0 0.0
    %1397 = vmatprep.subr.mxu0 0.0
    %1398 = vmatpush2.msra.mxu0 0.0
    %1399 = vmatprep.subr.mxu0 0.0
    %1400 = vmatpush2.msra.mxu0 0.0
    %1401 = vmatprep.subr.mxu0 0.0
    %1402 = vmatpush2.msra.mxu0 0.0
    %1403 = vmatprep.subr.mxu0 0.0
    %1404 = vmatpush2.msra.mxu0 0.0
    %1405 = vmatprep.subr.mxu0 0.0
    %1406 = vmatpush2.msra.mxu0 0.0
    %1407 = vmatprep.subr.mxu0 0.0
    %1408 = vmatpush2.msra.mxu0 0.0
    %1409 = vmatprep.subr.mxu0 0.0
    %1410 = vmatpush2.msra.mxu0 0.0
    %1411 = vmatprep.subr.mxu0 0.0
    %1412 = vmatpush2.msra.mxu0 0.0
    %1413 = vmatprep.subr.mxu0 0.0
    %1414 = vmatpush2.msra.mxu0 0.0
    %1415 = vmatprep.subr.mxu0 0.0
    %1416 = vmatpush2.msra.mxu0 0.0
    %1417 = vmatprep.subr.mxu0 0.0
    %1418 = vmatpush2.msra.mxu0 0.0
    %1419 = vmatprep.subr.mxu0 0.0
    %1420 = vmatpush2.msra.mxu0 0.0
    %1421 = vmatprep.subr.mxu0 0.0
    %1422 = vmatpush2.msra.mxu0 0.0
    %1423 = vmatprep.mubr.f32.mxu0 0.0
    %v1424 = vand.u32 %v75, 4294901760
    %v1425 = vsub.f32 %v75, %v1424
    %v1426 = vand.u32 %v1425, 4294901760
    %1427 = vmatmul.mubr.f32.gmra.mxu0 %v1426
    %v1428 = vpop.f32.mrf.mxu0
    %v1429 = vadd.f32 %v1340, %v1428
    %v1430 = vpop.f32.mrf.mxu0
    %1431 = vdwg.mxu0
    %1432 = vmatprep.subr.mxu0 0.0
    %v1433 = vand.u32 %v124, 4294901760
    %v1434 = vsub.f32 %v124, %v1433
    %v1435 = vand.u32 %v1434, 4294901760
    %1436 = vmatpush1.msra.mxu0 %v1435
    %1437 = vmatprep.subr.mxu0 0.0
    %v1438 = vand.u32 %v121, 4294901760
    %v1439 = vsub.f32 %v121, %v1438
    %v1440 = vand.u32 %v1439, 4294901760
    %1441 = vmatpush1.msra.mxu0 %v1440
    %1442 = vmatprep.subr.mxu0 0.0
    %v1443 = vand.u32 %v118, 4294901760
    %v1444 = vsub.f32 %v118, %v1443
    %v1445 = vand.u32 %v1444, 4294901760
    %1446 = vmatpush1.msra.mxu0 %v1445
    %1447 = vmatprep.subr.mxu0 0.0
    %v1448 = vand.u32 %v115, 4294901760
    %v1449 = vsub.f32 %v115, %v1448
    %v1450 = vand.u32 %v1449, 4294901760
    %1451 = vmatpush1.msra.mxu0 %v1450
    %1452 = vmatprep.subr.mxu0 0.0
    %v1453 = vand.u32 %v112, 4294901760
    %v1454 = vsub.f32 %v112, %v1453
    %v1455 = vand.u32 %v1454, 4294901760
    %1456 = vmatpush1.msra.mxu0 %v1455
    %1457 = vmatprep.subr.mxu0 0.0
    %v1458 = vand.u32 %v109, 4294901760
    %v1459 = vsub.f32 %v109, %v1458
    %v1460 = vand.u32 %v1459, 4294901760
    %1461 = vmatpush1.msra.mxu0 %v1460
    %1462 = vmatprep.subr.mxu0 0.0
    %v1463 = vand.u32 %v106, 4294901760
    %v1464 = vsub.f32 %v106, %v1463
    %v1465 = vand.u32 %v1464, 4294901760
    %1466 = vmatpush1.msra.mxu0 %v1465
    %1467 = vmatprep.subr.mxu0 0.0
    %v1468 = vand.u32 %v103, 4294901760
    %v1469 = vsub.f32 %v103, %v1468
    %v1470 = vand.u32 %v1469, 4294901760
    %1471 = vmatpush1.msra.mxu0 %v1470
    %1472 = vmatprep.subr.mxu0 0.0
    %v1473 = vand.u32 %v100, 4294901760
    %v1474 = vsub.f32 %v100, %v1473
    %v1475 = vand.u32 %v1474, 4294901760
    %1476 = vmatpush1.msra.mxu0 %v1475
    %1477 = vmatprep.subr.mxu0 0.0
    %v1478 = vand.u32 %v97, 4294901760
    %v1479 = vsub.f32 %v97, %v1478
    %v1480 = vand.u32 %v1479, 4294901760
    %1481 = vmatpush1.msra.mxu0 %v1480
    %1482 = vmatprep.subr.mxu0 0.0
    %v1483 = vand.u32 %v94, 4294901760
    %v1484 = vsub.f32 %v94, %v1483
    %v1485 = vand.u32 %v1484, 4294901760
    %1486 = vmatpush1.msra.mxu0 %v1485
    %1487 = vmatprep.subr.mxu0 0.0
    %v1488 = vand.u32 %v91, 4294901760
    %v1489 = vsub.f32 %v91, %v1488
    %v1490 = vand.u32 %v1489, 4294901760
    %1491 = vmatpush1.msra.mxu0 %v1490
    %1492 = vmatprep.subr.mxu0 0.0
    %v1493 = vand.u32 %v88, 4294901760
    %v1494 = vsub.f32 %v88, %v1493
    %v1495 = vand.u32 %v1494, 4294901760
    %1496 = vmatpush1.msra.mxu0 %v1495
    %1497 = vmatprep.subr.mxu0 0.0
    %v1498 = vand.u32 %v85, 4294901760
    %v1499 = vsub.f32 %v85, %v1498
    %v1500 = vand.u32 %v1499, 4294901760
    %1501 = vmatpush1.msra.mxu0 %v1500
    %1502 = vmatprep.subr.mxu0 0.0
    %v1503 = vand.u32 %v82, 4294901760
    %v1504 = vsub.f32 %v82, %v1503
    %v1505 = vand.u32 %v1504, 4294901760
    %1506 = vmatpush1.msra.mxu0 %v1505
    %1507 = vmatprep.subr.mxu0 0.0
    %v1508 = vand.u32 %v79, 4294901760
    %v1509 = vsub.f32 %v79, %v1508
    %v1510 = vand.u32 %v1509, 4294901760
    %1511 = vmatpush1.msra.mxu0 %v1510
    %1512 = vmatprep.subr.mxu0 0.0
    %1513 = vmatpush2.msra.mxu0 0.0
    %1514 = vmatprep.subr.mxu0 0.0
    %1515 = vmatpush2.msra.mxu0 0.0
    %1516 = vmatprep.subr.mxu0 0.0
    %1517 = vmatpush2.msra.mxu0 0.0
    %1518 = vmatprep.subr.mxu0 0.0
    %1519 = vmatpush2.msra.mxu0 0.0
    %1520 = vmatprep.subr.mxu0 0.0
    %1521 = vmatpush2.msra.mxu0 0.0
    %1522 = vmatprep.subr.mxu0 0.0
    %1523 = vmatpush2.msra.mxu0 0.0
    %1524 = vmatprep.subr.mxu0 0.0
    %1525 = vmatpush2.msra.mxu0 0.0
    %1526 = vmatprep.subr.mxu0 0.0
    %1527 = vmatpush2.msra.mxu0 0.0
    %1528 = vmatprep.subr.mxu0 0.0
    %1529 = vmatpush2.msra.mxu0 0.0
    %1530 = vmatprep.subr.mxu0 0.0
    %1531 = vmatpush2.msra.mxu0 0.0
    %1532 = vmatprep.subr.mxu0 0.0
    %1533 = vmatpush2.msra.mxu0 0.0
    %1534 = vmatprep.subr.mxu0 0.0
    %1535 = vmatpush2.msra.mxu0 0.0
    %1536 = vmatprep.subr.mxu0 0.0
    %1537 = vmatpush2.msra.mxu0 0.0
    %1538 = vmatprep.subr.mxu0 0.0
    %1539 = vmatpush2.msra.mxu0 0.0
    %1540 = vmatprep.subr.mxu0 0.0
    %1541 = vmatpush2.msra.mxu0 0.0
    %1542 = vmatprep.subr.mxu0 0.0
    %1543 = vmatpush2.msra.mxu0 0.0
    %1544 = vmatprep.mubr.f32.mxu0 0.0
    %v1545 = vand.u32 %v75, 4294901760
    %1546 = vmatmul.mubr.f32.gmra.mxu0 %v1545
    %v1547 = vpop.f32.mrf.mxu0
    %v1548 = vadd.f32 %v1429, %v1547
    %v1549 = vpop.f32.mrf.mxu0
    %1550 = vdwg.mxu0
    %1551 = vmatprep.subr.mxu0 0.0
    %v1552 = vand.u32 %v124, 4294901760
    %1553 = vmatpush1.msra.mxu0 %v1552
    %1554 = vmatprep.subr.mxu0 0.0
    %v1555 = vand.u32 %v121, 4294901760
    %1556 = vmatpush1.msra.mxu0 %v1555
    %1557 = vmatprep.subr.mxu0 0.0
    %v1558 = vand.u32 %v118, 4294901760
    %1559 = vmatpush1.msra.mxu0 %v1558
    %1560 = vmatprep.subr.mxu0 0.0
    %v1561 = vand.u32 %v115, 4294901760
    %1562 = vmatpush1.msra.mxu0 %v1561
    %1563 = vmatprep.subr.mxu0 0.0
    %v1564 = vand.u32 %v112, 4294901760
    %1565 = vmatpush1.msra.mxu0 %v1564
    %1566 = vmatprep.subr.mxu0 0.0
    %v1567 = vand.u32 %v109, 4294901760
    %1568 = vmatpush1.msra.mxu0 %v1567
    %1569 = vmatprep.subr.mxu0 0.0
    %v1570 = vand.u32 %v106, 4294901760
    %1571 = vmatpush1.msra.mxu0 %v1570
    %1572 = vmatprep.subr.mxu0 0.0
    %v1573 = vand.u32 %v103, 4294901760
    %1574 = vmatpush1.msra.mxu0 %v1573
    %1575 = vmatprep.subr.mxu0 0.0
    %v1576 = vand.u32 %v100, 4294901760
    %1577 = vmatpush1.msra.mxu0 %v1576
    %1578 = vmatprep.subr.mxu0 0.0
    %v1579 = vand.u32 %v97, 4294901760
    %1580 = vmatpush1.msra.mxu0 %v1579
    %1581 = vmatprep.subr.mxu0 0.0
    %v1582 = vand.u32 %v94, 4294901760
    %1583 = vmatpush1.msra.mxu0 %v1582
    %1584 = vmatprep.subr.mxu0 0.0
    %v1585 = vand.u32 %v91, 4294901760
    %1586 = vmatpush1.msra.mxu0 %v1585
    %1587 = vmatprep.subr.mxu0 0.0
    %v1588 = vand.u32 %v88, 4294901760
    %1589 = vmatpush1.msra.mxu0 %v1588
    %1590 = vmatprep.subr.mxu0 0.0
    %v1591 = vand.u32 %v85, 4294901760
    %1592 = vmatpush1.msra.mxu0 %v1591
    %1593 = vmatprep.subr.mxu0 0.0
    %v1594 = vand.u32 %v82, 4294901760
    %1595 = vmatpush1.msra.mxu0 %v1594
    %1596 = vmatprep.subr.mxu0 0.0
    %v1597 = vand.u32 %v79, 4294901760
    %1598 = vmatpush1.msra.mxu0 %v1597
    %1599 = vmatprep.subr.mxu0 0.0
    %1600 = vmatpush2.msra.mxu0 0.0
    %1601 = vmatprep.subr.mxu0 0.0
    %1602 = vmatpush2.msra.mxu0 0.0
    %1603 = vmatprep.subr.mxu0 0.0
    %1604 = vmatpush2.msra.mxu0 0.0
    %1605 = vmatprep.subr.mxu0 0.0
    %1606 = vmatpush2.msra.mxu0 0.0
    %1607 = vmatprep.subr.mxu0 0.0
    %1608 = vmatpush2.msra.mxu0 0.0
    %1609 = vmatprep.subr.mxu0 0.0
    %1610 = vmatpush2.msra.mxu0 0.0
    %1611 = vmatprep.subr.mxu0 0.0
    %1612 = vmatpush2.msra.mxu0 0.0
    %1613 = vmatprep.subr.mxu0 0.0
    %1614 = vmatpush2.msra.mxu0 0.0
    %1615 = vmatprep.subr.mxu0 0.0
    %1616 = vmatpush2.msra.mxu0 0.0
    %1617 = vmatprep.subr.mxu0 0.0
    %1618 = vmatpush2.msra.mxu0 0.0
    %1619 = vmatprep.subr.mxu0 0.0
    %1620 = vmatpush2.msra.mxu0 0.0
    %1621 = vmatprep.subr.mxu0 0.0
    %1622 = vmatpush2.msra.mxu0 0.0
    %1623 = vmatprep.subr.mxu0 0.0
    %1624 = vmatpush2.msra.mxu0 0.0
    %1625 = vmatprep.subr.mxu0 0.0
    %1626 = vmatpush2.msra.mxu0 0.0
    %1627 = vmatprep.subr.mxu0 0.0
    %1628 = vmatpush2.msra.mxu0 0.0
    %1629 = vmatprep.subr.mxu0 0.0
    %1630 = vmatpush2.msra.mxu0 0.0
    %1631 = vmatprep.mubr.f32.mxu0 0.0
    %v1632 = vand.u32 %v75, 4294901760
    %1633 = vmatmul.mubr.f32.gmra.mxu0 %v1632
    %v1634 = vpop.f32.mrf.mxu0
    %v1635 = vadd.f32 %v1548, %v1634
    %v1636 = vpop.f32.mrf.mxu0
    %1637 = vdwg.mxu0
    %v1638 = vld [vmem:[#allocation8] sm:$0xff]
    %v1639 = vld [vmem:[#allocation8 + $0x8] sm:$0xff]
    %v1640 = vld [vmem:[#allocation8 + $0x10] sm:$0xff]
    %v1641 = vld [vmem:[#allocation8 + $0x18] sm:$0xff]
    %v1642 = vld [vmem:[#allocation8 + $0x20] sm:$0xff]
    %v1643 = vld [vmem:[#allocation8 + $0x28] sm:$0xff]
    %v1644 = vld [vmem:[#allocation8 + $0x30] sm:$0xff]
    %v1645 = vld [vmem:[#allocation8 + $0x38] sm:$0xff]
    %v1646 = vld [vmem:[#allocation8 + $0x40] sm:$0xff]
    %v1647 = vld [vmem:[#allocation8 + $0x48] sm:$0xff]
    %v1648 = vld [vmem:[#allocation8 + $0x50] sm:$0xff]
    %v1649 = vld [vmem:[#allocation8 + $0x58] sm:$0xff]
    %v1650 = vld [vmem:[#allocation8 + $0x60] sm:$0xff]
    %v1651 = vld [vmem:[#allocation8 + $0x68] sm:$0xff]
    %v1652 = vld [vmem:[#allocation8 + $0x70] sm:$0xff]
    %v1653 = vld [vmem:[#allocation8 + $0x78] sm:$0xff]
    %v1654 = vld [vmem:[#allocation8 + $0x80] sm:$0xff]
    %v1655 = vld [vmem:[#allocation8 + $0x88] sm:$0xff]
    %v1656 = vld [vmem:[#allocation8 + $0x90] sm:$0xff]
    %v1657 = vld [vmem:[#allocation8 + $0x98] sm:$0xff]
    %v1658 = vld [vmem:[#allocation8 + $0xa0] sm:$0xff]
    %v1659 = vld [vmem:[#allocation8 + $0xa8] sm:$0xff]
    %v1660 = vld [vmem:[#allocation8 + $0xb0] sm:$0xff]
    %v1661 = vld [vmem:[#allocation8 + $0xb8] sm:$0xff]
    %v1662 = vld [vmem:[#allocation8 + $0xc0] sm:$0xff]
    %v1663 = vld [vmem:[#allocation8 + $0xc8] sm:$0xff]
    %v1664 = vld [vmem:[#allocation8 + $0xd0] sm:$0xff]
    %v1665 = vld [vmem:[#allocation8 + $0xd8] sm:$0xff]
    %v1666 = vld [vmem:[#allocation8 + $0xe0] sm:$0xff]
    %v1667 = vld [vmem:[#allocation8 + $0xe8] sm:$0xff]
    %v1668 = vld [vmem:[#allocation8 + $0xf0] sm:$0xff]
    %v1669 = vld [vmem:[#allocation8 + $0xf8] sm:$0xff]
    %v1670 = vld [vmem:[#allocation8 + $0x100] sm:$0xff]
    %v1671 = vld [vmem:[#allocation8 + $0x108] sm:$0xff]
    %v1672 = vld [vmem:[#allocation8 + $0x110] sm:$0xff]
    %v1673 = vld [vmem:[#allocation8 + $0x118] sm:$0xff]
    %v1674 = vld [vmem:[#allocation8 + $0x120] sm:$0xff]
    %v1675 = vld [vmem:[#allocation8 + $0x128] sm:$0xff]
    %v1676 = vld [vmem:[#allocation8 + $0x130] sm:$0xff]
    %v1677 = vld [vmem:[#allocation8 + $0x138] sm:$0xff]
    %v1678 = vld [vmem:[#allocation8 + $0x140] sm:$0xff]
    %v1679 = vld [vmem:[#allocation8 + $0x148] sm:$0xff]
    %v1680 = vld [vmem:[#allocation8 + $0x150] sm:$0xff]
    %v1681 = vld [vmem:[#allocation8 + $0x158] sm:$0xff]
    %v1682 = vld [vmem:[#allocation8 + $0x160] sm:$0xff]
    %v1683 = vld [vmem:[#allocation8 + $0x168] sm:$0xff]
    %v1684 = vld [vmem:[#allocation8 + $0x170] sm:$0xff]
    %v1685 = vld [vmem:[#allocation8 + $0x178] sm:$0xff]
    %v1686 = vld [vmem:[%s5] sm:$0x7]
    %v1688 = vlaneseq
    %v1689 = vshrl.u32 %v1688, 7
    %v1690 = vsub.s32 0, %v1689
    %v1691 = vrot.slane %v1686, %v1690
    %v1692 = vlaneseq
    %v1693 = vshrl.u32 %v1692, 7
    %v1694 = vsub.s32 1, %v1693
    %v1695 = vrot.slane %v1686, %v1694
    %v1696 = vlaneseq
    %v1697 = vshrl.u32 %v1696, 7
    %v1698 = vsub.s32 2, %v1697
    %v1699 = vrot.slane %v1686, %v1698
    %v1703 = vand.u32 %v1684, 4294901760
    %1704 = vmatprep.subr.mxu0 %v1703
    %v1705 = vand.u32 %v1683, 4294901760
    %1706 = vmatpush1.msra.mxu0 %v1705
    %v1707 = vand.u32 %v1681, 4294901760
    %1708 = vmatprep.subr.mxu0 %v1707
    %v1709 = vand.u32 %v1680, 4294901760
    %1710 = vmatpush1.msra.mxu0 %v1709
    %v1711 = vand.u32 %v1678, 4294901760
    %1712 = vmatprep.subr.mxu0 %v1711
    %v1713 = vand.u32 %v1677, 4294901760
    %1714 = vmatpush1.msra.mxu0 %v1713
    %v1715 = vand.u32 %v1675, 4294901760
    %1716 = vmatprep.subr.mxu0 %v1715
    %v1717 = vand.u32 %v1674, 4294901760
    %1718 = vmatpush1.msra.mxu0 %v1717
    %v1719 = vand.u32 %v1672, 4294901760
    %1720 = vmatprep.subr.mxu0 %v1719
    %v1721 = vand.u32 %v1671, 4294901760
    %1722 = vmatpush1.msra.mxu0 %v1721
    %v1723 = vand.u32 %v1669, 4294901760
    %1724 = vmatprep.subr.mxu0 %v1723
    %v1725 = vand.u32 %v1668, 4294901760
    %1726 = vmatpush1.msra.mxu0 %v1725
    %v1727 = vand.u32 %v1666, 4294901760
    %1728 = vmatprep.subr.mxu0 %v1727
    %v1729 = vand.u32 %v1665, 4294901760
    %1730 = vmatpush1.msra.mxu0 %v1729
    %v1731 = vand.u32 %v1663, 4294901760
    %1732 = vmatprep.subr.mxu0 %v1731
    %v1733 = vand.u32 %v1662, 4294901760
    %1734 = vmatpush1.msra.mxu0 %v1733
    %v1735 = vand.u32 %v1660, 4294901760
    %1736 = vmatprep.subr.mxu0 %v1735
    %v1737 = vand.u32 %v1659, 4294901760
    %1738 = vmatpush1.msra.mxu0 %v1737
    %v1739 = vand.u32 %v1657, 4294901760
    %1740 = vmatprep.subr.mxu0 %v1739
    %v1741 = vand.u32 %v1656, 4294901760
    %1742 = vmatpush1.msra.mxu0 %v1741
    %v1743 = vand.u32 %v1654, 4294901760
    %1744 = vmatprep.subr.mxu0 %v1743
    %v1745 = vand.u32 %v1653, 4294901760
    %1746 = vmatpush1.msra.mxu0 %v1745
    %v1747 = vand.u32 %v1651, 4294901760
    %1748 = vmatprep.subr.mxu0 %v1747
    %v1749 = vand.u32 %v1650, 4294901760
    %1750 = vmatpush1.msra.mxu0 %v1749
    %v1751 = vand.u32 %v1648, 4294901760
    %1752 = vmatprep.subr.mxu0 %v1751
    %v1753 = vand.u32 %v1647, 4294901760
    %1754 = vmatpush1.msra.mxu0 %v1753
    %v1755 = vand.u32 %v1645, 4294901760
    %1756 = vmatprep.subr.mxu0 %v1755
    %v1757 = vand.u32 %v1644, 4294901760
    %1758 = vmatpush1.msra.mxu0 %v1757
    %v1759 = vand.u32 %v1642, 4294901760
    %1760 = vmatprep.subr.mxu0 %v1759
    %v1761 = vand.u32 %v1641, 4294901760
    %1762 = vmatpush1.msra.mxu0 %v1761
    %v1763 = vand.u32 %v1639, 4294901760
    %1764 = vmatprep.subr.mxu0 %v1763
    %v1765 = vand.u32 %v1638, 4294901760
    %1766 = vmatpush1.msra.mxu0 %v1765
    %1767 = vmatprep.subr.mxu0 0.0
    %1768 = vmatpush2.msra.mxu0 0.0
    %1769 = vmatprep.subr.mxu0 0.0
    %1770 = vmatpush2.msra.mxu0 0.0
    %1771 = vmatprep.subr.mxu0 0.0
    %1772 = vmatpush2.msra.mxu0 0.0
    %1773 = vmatprep.subr.mxu0 0.0
    %1774 = vmatpush2.msra.mxu0 0.0
    %1775 = vmatprep.subr.mxu0 0.0
    %1776 = vmatpush2.msra.mxu0 0.0
    %1777 = vmatprep.subr.mxu0 0.0
    %1778 = vmatpush2.msra.mxu0 0.0
    %1779 = vmatprep.subr.mxu0 0.0
    %1780 = vmatpush2.msra.mxu0 0.0
    %1781 = vmatprep.subr.mxu0 0.0
    %1782 = vmatpush2.msra.mxu0 0.0
    %1783 = vmatprep.subr.mxu0 0.0
    %1784 = vmatpush2.msra.mxu0 0.0
    %1785 = vmatprep.subr.mxu0 0.0
    %1786 = vmatpush2.msra.mxu0 0.0
    %1787 = vmatprep.subr.mxu0 0.0
    %1788 = vmatpush2.msra.mxu0 0.0
    %1789 = vmatprep.subr.mxu0 0.0
    %1790 = vmatpush2.msra.mxu0 0.0
    %1791 = vmatprep.subr.mxu0 0.0
    %1792 = vmatpush2.msra.mxu0 0.0
    %1793 = vmatprep.subr.mxu0 0.0
    %1794 = vmatpush2.msra.mxu0 0.0
    %1795 = vmatprep.subr.mxu0 0.0
    %1796 = vmatpush2.msra.mxu0 0.0
    %1797 = vmatprep.subr.mxu0 0.0
    %1798 = vmatpush2.msra.mxu0 0.0
    %1799 = vmatprep.mubr.f32.mxu0 0.0
    %v1800 = vand.u32 %v76, 4294901760
    %v1801 = vsub.f32 %v76, %v1800
    %v1802 = vand.u32 %v1801, 4294901760
    %v1803 = vsub.f32 %v1801, %v1802
    %v1804 = vand.u32 %v1803, 4294901760
    %1805 = vmatmul.mubr.f32.gmra.mxu0 %v1804
    %v1806 = vpop.f32.mrf.mxu0
    %v1807 = vadd.f32 %v1691, %v1806
    %v1808 = vpop.f32.mrf.mxu0
    %v1809 = vadd.f32 %v1695, %v1808
    %1810 = vdwg.mxu0
    %v1811 = vand.u32 %v1684, 4294901760
    %v1812 = vsub.f32 %v1684, %v1811
    %v1813 = vand.u32 %v1812, 4294901760
    %v1814 = vsub.f32 %v1812, %v1813
    %v1815 = vand.u32 %v1814, 4294901760
    %1816 = vmatprep.subr.mxu0 %v1815
    %v1817 = vand.u32 %v1683, 4294901760
    %v1818 = vsub.f32 %v1683, %v1817
    %v1819 = vand.u32 %v1818, 4294901760
    %v1820 = vsub.f32 %v1818, %v1819
    %v1821 = vand.u32 %v1820, 4294901760
    %1822 = vmatpush1.msra.mxu0 %v1821
    %v1823 = vand.u32 %v1681, 4294901760
    %v1824 = vsub.f32 %v1681, %v1823
    %v1825 = vand.u32 %v1824, 4294901760
    %v1826 = vsub.f32 %v1824, %v1825
    %v1827 = vand.u32 %v1826, 4294901760
    %1828 = vmatprep.subr.mxu0 %v1827
    %v1829 = vand.u32 %v1680, 4294901760
    %v1830 = vsub.f32 %v1680, %v1829
    %v1831 = vand.u32 %v1830, 4294901760
    %v1832 = vsub.f32 %v1830, %v1831
    %v1833 = vand.u32 %v1832, 4294901760
    %1834 = vmatpush1.msra.mxu0 %v1833
    %v1835 = vand.u32 %v1678, 4294901760
    %v1836 = vsub.f32 %v1678, %v1835
    %v1837 = vand.u32 %v1836, 4294901760
    %v1838 = vsub.f32 %v1836, %v1837
    %v1839 = vand.u32 %v1838, 4294901760
    %1840 = vmatprep.subr.mxu0 %v1839
    %v1841 = vand.u32 %v1677, 4294901760
    %v1842 = vsub.f32 %v1677, %v1841
    %v1843 = vand.u32 %v1842, 4294901760
    %v1844 = vsub.f32 %v1842, %v1843
    %v1845 = vand.u32 %v1844, 4294901760
    %1846 = vmatpush1.msra.mxu0 %v1845
    %v1847 = vand.u32 %v1675, 4294901760
    %v1848 = vsub.f32 %v1675, %v1847
    %v1849 = vand.u32 %v1848, 4294901760
    %v1850 = vsub.f32 %v1848, %v1849
    %v1851 = vand.u32 %v1850, 4294901760
    %1852 = vmatprep.subr.mxu0 %v1851
    %v1853 = vand.u32 %v1674, 4294901760
    %v1854 = vsub.f32 %v1674, %v1853
    %v1855 = vand.u32 %v1854, 4294901760
    %v1856 = vsub.f32 %v1854, %v1855
    %v1857 = vand.u32 %v1856, 4294901760
    %1858 = vmatpush1.msra.mxu0 %v1857
    %v1859 = vand.u32 %v1672, 4294901760
    %v1860 = vsub.f32 %v1672, %v1859
    %v1861 = vand.u32 %v1860, 4294901760
    %v1862 = vsub.f32 %v1860, %v1861
    %v1863 = vand.u32 %v1862, 4294901760
    %1864 = vmatprep.subr.mxu0 %v1863
    %v1865 = vand.u32 %v1671, 4294901760
    %v1866 = vsub.f32 %v1671, %v1865
    %v1867 = vand.u32 %v1866, 4294901760
    %v1868 = vsub.f32 %v1866, %v1867
    %v1869 = vand.u32 %v1868, 4294901760
    %1870 = vmatpush1.msra.mxu0 %v1869
    %v1871 = vand.u32 %v1669, 4294901760
    %v1872 = vsub.f32 %v1669, %v1871
    %v1873 = vand.u32 %v1872, 4294901760
    %v1874 = vsub.f32 %v1872, %v1873
    %v1875 = vand.u32 %v1874, 4294901760
    %1876 = vmatprep.subr.mxu0 %v1875
    %v1877 = vand.u32 %v1668, 4294901760
    %v1878 = vsub.f32 %v1668, %v1877
    %v1879 = vand.u32 %v1878, 4294901760
    %v1880 = vsub.f32 %v1878, %v1879
    %v1881 = vand.u32 %v1880, 4294901760
    %1882 = vmatpush1.msra.mxu0 %v1881
    %v1883 = vand.u32 %v1666, 4294901760
    %v1884 = vsub.f32 %v1666, %v1883
    %v1885 = vand.u32 %v1884, 4294901760
    %v1886 = vsub.f32 %v1884, %v1885
    %v1887 = vand.u32 %v1886, 4294901760
    %1888 = vmatprep.subr.mxu0 %v1887
    %v1889 = vand.u32 %v1665, 4294901760
    %v1890 = vsub.f32 %v1665, %v1889
    %v1891 = vand.u32 %v1890, 4294901760
    %v1892 = vsub.f32 %v1890, %v1891
    %v1893 = vand.u32 %v1892, 4294901760
    %1894 = vmatpush1.msra.mxu0 %v1893
    %v1895 = vand.u32 %v1663, 4294901760
    %v1896 = vsub.f32 %v1663, %v1895
    %v1897 = vand.u32 %v1896, 4294901760
    %v1898 = vsub.f32 %v1896, %v1897
    %v1899 = vand.u32 %v1898, 4294901760
    %1900 = vmatprep.subr.mxu0 %v1899
    %v1901 = vand.u32 %v1662, 4294901760
    %v1902 = vsub.f32 %v1662, %v1901
    %v1903 = vand.u32 %v1902, 4294901760
    %v1904 = vsub.f32 %v1902, %v1903
    %v1905 = vand.u32 %v1904, 4294901760
    %1906 = vmatpush1.msra.mxu0 %v1905
    %v1907 = vand.u32 %v1660, 4294901760
    %v1908 = vsub.f32 %v1660, %v1907
    %v1909 = vand.u32 %v1908, 4294901760
    %v1910 = vsub.f32 %v1908, %v1909
    %v1911 = vand.u32 %v1910, 4294901760
    %1912 = vmatprep.subr.mxu0 %v1911
    %v1913 = vand.u32 %v1659, 4294901760
    %v1914 = vsub.f32 %v1659, %v1913
    %v1915 = vand.u32 %v1914, 4294901760
    %v1916 = vsub.f32 %v1914, %v1915
    %v1917 = vand.u32 %v1916, 4294901760
    %1918 = vmatpush1.msra.mxu0 %v1917
    %v1919 = vand.u32 %v1657, 4294901760
    %v1920 = vsub.f32 %v1657, %v1919
    %v1921 = vand.u32 %v1920, 4294901760
    %v1922 = vsub.f32 %v1920, %v1921
    %v1923 = vand.u32 %v1922, 4294901760
    %1924 = vmatprep.subr.mxu0 %v1923
    %v1925 = vand.u32 %v1656, 4294901760
    %v1926 = vsub.f32 %v1656, %v1925
    %v1927 = vand.u32 %v1926, 4294901760
    %v1928 = vsub.f32 %v1926, %v1927
    %v1929 = vand.u32 %v1928, 4294901760
    %1930 = vmatpush1.msra.mxu0 %v1929
    %v1931 = vand.u32 %v1654, 4294901760
    %v1932 = vsub.f32 %v1654, %v1931
    %v1933 = vand.u32 %v1932, 4294901760
    %v1934 = vsub.f32 %v1932, %v1933
    %v1935 = vand.u32 %v1934, 4294901760
    %1936 = vmatprep.subr.mxu0 %v1935
    %v1937 = vand.u32 %v1653, 4294901760
    %v1938 = vsub.f32 %v1653, %v1937
    %v1939 = vand.u32 %v1938, 4294901760
    %v1940 = vsub.f32 %v1938, %v1939
    %v1941 = vand.u32 %v1940, 4294901760
    %1942 = vmatpush1.msra.mxu0 %v1941
    %v1943 = vand.u32 %v1651, 4294901760
    %v1944 = vsub.f32 %v1651, %v1943
    %v1945 = vand.u32 %v1944, 4294901760
    %v1946 = vsub.f32 %v1944, %v1945
    %v1947 = vand.u32 %v1946, 4294901760
    %1948 = vmatprep.subr.mxu0 %v1947
    %v1949 = vand.u32 %v1650, 4294901760
    %v1950 = vsub.f32 %v1650, %v1949
    %v1951 = vand.u32 %v1950, 4294901760
    %v1952 = vsub.f32 %v1950, %v1951
    %v1953 = vand.u32 %v1952, 4294901760
    %1954 = vmatpush1.msra.mxu0 %v1953
    %v1955 = vand.u32 %v1648, 4294901760
    %v1956 = vsub.f32 %v1648, %v1955
    %v1957 = vand.u32 %v1956, 4294901760
    %v1958 = vsub.f32 %v1956, %v1957
    %v1959 = vand.u32 %v1958, 4294901760
    %1960 = vmatprep.subr.mxu0 %v1959
    %v1961 = vand.u32 %v1647, 4294901760
    %v1962 = vsub.f32 %v1647, %v1961
    %v1963 = vand.u32 %v1962, 4294901760
    %v1964 = vsub.f32 %v1962, %v1963
    %v1965 = vand.u32 %v1964, 4294901760
    %1966 = vmatpush1.msra.mxu0 %v1965
    %v1967 = vand.u32 %v1645, 4294901760
    %v1968 = vsub.f32 %v1645, %v1967
    %v1969 = vand.u32 %v1968, 4294901760
    %v1970 = vsub.f32 %v1968, %v1969
    %v1971 = vand.u32 %v1970, 4294901760
    %1972 = vmatprep.subr.mxu0 %v1971
    %v1973 = vand.u32 %v1644, 4294901760
    %v1974 = vsub.f32 %v1644, %v1973
    %v1975 = vand.u32 %v1974, 4294901760
    %v1976 = vsub.f32 %v1974, %v1975
    %v1977 = vand.u32 %v1976, 4294901760
    %1978 = vmatpush1.msra.mxu0 %v1977
    %v1979 = vand.u32 %v1642, 4294901760
    %v1980 = vsub.f32 %v1642, %v1979
    %v1981 = vand.u32 %v1980, 4294901760
    %v1982 = vsub.f32 %v1980, %v1981
    %v1983 = vand.u32 %v1982, 4294901760
    %1984 = vmatprep.subr.mxu0 %v1983
    %v1985 = vand.u32 %v1641, 4294901760
    %v1986 = vsub.f32 %v1641, %v1985
    %v1987 = vand.u32 %v1986, 4294901760
    %v1988 = vsub.f32 %v1986, %v1987
    %v1989 = vand.u32 %v1988, 4294901760
    %1990 = vmatpush1.msra.mxu0 %v1989
    %v1991 = vand.u32 %v1639, 4294901760
    %v1992 = vsub.f32 %v1639, %v1991
    %v1993 = vand.u32 %v1992, 4294901760
    %v1994 = vsub.f32 %v1992, %v1993
    %v1995 = vand.u32 %v1994, 4294901760
    %1996 = vmatprep.subr.mxu0 %v1995
    %v1997 = vand.u32 %v1638, 4294901760
    %v1998 = vsub.f32 %v1638, %v1997
    %v1999 = vand.u32 %v1998, 4294901760
    %v2000 = vsub.f32 %v1998, %v1999
    %v2001 = vand.u32 %v2000, 4294901760
    %2002 = vmatpush1.msra.mxu0 %v2001
    %2003 = vmatprep.subr.mxu0 0.0
    %2004 = vmatpush2.msra.mxu0 0.0
    %2005 = vmatprep.subr.mxu0 0.0
    %2006 = vmatpush2.msra.mxu0 0.0
    %2007 = vmatprep.subr.mxu0 0.0
    %2008 = vmatpush2.msra.mxu0 0.0
    %2009 = vmatprep.subr.mxu0 0.0
    %2010 = vmatpush2.msra.mxu0 0.0
    %2011 = vmatprep.subr.mxu0 0.0
    %2012 = vmatpush2.msra.mxu0 0.0
    %2013 = vmatprep.subr.mxu0 0.0
    %2014 = vmatpush2.msra.mxu0 0.0
    %2015 = vmatprep.subr.mxu0 0.0
    %2016 = vmatpush2.msra.mxu0 0.0
    %2017 = vmatprep.subr.mxu0 0.0
    %2018 = vmatpush2.msra.mxu0 0.0
    %2019 = vmatprep.subr.mxu0 0.0
    %2020 = vmatpush2.msra.mxu0 0.0
    %2021 = vmatprep.subr.mxu0 0.0
    %2022 = vmatpush2.msra.mxu0 0.0
    %2023 = vmatprep.subr.mxu0 0.0
    %2024 = vmatpush2.msra.mxu0 0.0
    %2025 = vmatprep.subr.mxu0 0.0
    %2026 = vmatpush2.msra.mxu0 0.0
    %2027 = vmatprep.subr.mxu0 0.0
    %2028 = vmatpush2.msra.mxu0 0.0
    %2029 = vmatprep.subr.mxu0 0.0
    %2030 = vmatpush2.msra.mxu0 0.0
    %2031 = vmatprep.subr.mxu0 0.0
    %2032 = vmatpush2.msra.mxu0 0.0
    %2033 = vmatprep.subr.mxu0 0.0
    %2034 = vmatpush2.msra.mxu0 0.0
    %2035 = vmatprep.mubr.f32.mxu0 0.0
    %v2036 = vand.u32 %v76, 4294901760
    %2037 = vmatmul.mubr.f32.gmra.mxu0 %v2036
    %v2038 = vpop.f32.mrf.mxu0
    %v2039 = vadd.f32 %v1807, %v2038
    %v2040 = vpop.f32.mrf.mxu0
    %v2041 = vadd.f32 %v1809, %v2040
    %2042 = vdwg.mxu0
    %v2043 = vand.u32 %v1684, 4294901760
    %v2044 = vsub.f32 %v1684, %v2043
    %2045 = vmatprep.subr.mxu0 %v2044
    %v2046 = vand.u32 %v1683, 4294901760
    %v2047 = vsub.f32 %v1683, %v2046
    %2048 = vmatpush1.msra.mxu0 %v2047
    %v2049 = vand.u32 %v1681, 4294901760
    %v2050 = vsub.f32 %v1681, %v2049
    %2051 = vmatprep.subr.mxu0 %v2050
    %v2052 = vand.u32 %v1680, 4294901760
    %v2053 = vsub.f32 %v1680, %v2052
    %2054 = vmatpush1.msra.mxu0 %v2053
    %v2055 = vand.u32 %v1678, 4294901760
    %v2056 = vsub.f32 %v1678, %v2055
    %2057 = vmatprep.subr.mxu0 %v2056
    %v2058 = vand.u32 %v1677, 4294901760
    %v2059 = vsub.f32 %v1677, %v2058
    %2060 = vmatpush1.msra.mxu0 %v2059
    %v2061 = vand.u32 %v1675, 4294901760
    %v2062 = vsub.f32 %v1675, %v2061
    %2063 = vmatprep.subr.mxu0 %v2062
    %v2064 = vand.u32 %v1674, 4294901760
    %v2065 = vsub.f32 %v1674, %v2064
    %2066 = vmatpush1.msra.mxu0 %v2065
    %v2067 = vand.u32 %v1672, 4294901760
    %v2068 = vsub.f32 %v1672, %v2067
    %2069 = vmatprep.subr.mxu0 %v2068
    %v2070 = vand.u32 %v1671, 4294901760
    %v2071 = vsub.f32 %v1671, %v2070
    %2072 = vmatpush1.msra.mxu0 %v2071
    %v2073 = vand.u32 %v1669, 4294901760
    %v2074 = vsub.f32 %v1669, %v2073
    %2075 = vmatprep.subr.mxu0 %v2074
    %v2076 = vand.u32 %v1668, 4294901760
    %v2077 = vsub.f32 %v1668, %v2076
    %2078 = vmatpush1.msra.mxu0 %v2077
    %v2079 = vand.u32 %v1666, 4294901760
    %v2080 = vsub.f32 %v1666, %v2079
    %2081 = vmatprep.subr.mxu0 %v2080
    %v2082 = vand.u32 %v1665, 4294901760
    %v2083 = vsub.f32 %v1665, %v2082
    %2084 = vmatpush1.msra.mxu0 %v2083
    %v2085 = vand.u32 %v1663, 4294901760
    %v2086 = vsub.f32 %v1663, %v2085
    %2087 = vmatprep.subr.mxu0 %v2086
    %v2088 = vand.u32 %v1662, 4294901760
    %v2089 = vsub.f32 %v1662, %v2088
    %2090 = vmatpush1.msra.mxu0 %v2089
    %v2091 = vand.u32 %v1660, 4294901760
    %v2092 = vsub.f32 %v1660, %v2091
    %2093 = vmatprep.subr.mxu0 %v2092
    %v2094 = vand.u32 %v1659, 4294901760
    %v2095 = vsub.f32 %v1659, %v2094
    %2096 = vmatpush1.msra.mxu0 %v2095
    %v2097 = vand.u32 %v1657, 4294901760
    %v2098 = vsub.f32 %v1657, %v2097
    %2099 = vmatprep.subr.mxu0 %v2098
    %v2100 = vand.u32 %v1656, 4294901760
    %v2101 = vsub.f32 %v1656, %v2100
    %2102 = vmatpush1.msra.mxu0 %v2101
    %v2103 = vand.u32 %v1654, 4294901760
    %v2104 = vsub.f32 %v1654, %v2103
    %2105 = vmatprep.subr.mxu0 %v2104
    %v2106 = vand.u32 %v1653, 4294901760
    %v2107 = vsub.f32 %v1653, %v2106
    %2108 = vmatpush1.msra.mxu0 %v2107
    %v2109 = vand.u32 %v1651, 4294901760
    %v2110 = vsub.f32 %v1651, %v2109
    %2111 = vmatprep.subr.mxu0 %v2110
    %v2112 = vand.u32 %v1650, 4294901760
    %v2113 = vsub.f32 %v1650, %v2112
    %2114 = vmatpush1.msra.mxu0 %v2113
    %v2115 = vand.u32 %v1648, 4294901760
    %v2116 = vsub.f32 %v1648, %v2115
    %2117 = vmatprep.subr.mxu0 %v2116
    %v2118 = vand.u32 %v1647, 4294901760
    %v2119 = vsub.f32 %v1647, %v2118
    %2120 = vmatpush1.msra.mxu0 %v2119
    %v2121 = vand.u32 %v1645, 4294901760
    %v2122 = vsub.f32 %v1645, %v2121
    %2123 = vmatprep.subr.mxu0 %v2122
    %v2124 = vand.u32 %v1644, 4294901760
    %v2125 = vsub.f32 %v1644, %v2124
    %2126 = vmatpush1.msra.mxu0 %v2125
    %v2127 = vand.u32 %v1642, 4294901760
    %v2128 = vsub.f32 %v1642, %v2127
    %2129 = vmatprep.subr.mxu0 %v2128
    %v2130 = vand.u32 %v1641, 4294901760
    %v2131 = vsub.f32 %v1641, %v2130
    %2132 = vmatpush1.msra.mxu0 %v2131
    %v2133 = vand.u32 %v1639, 4294901760
    %v2134 = vsub.f32 %v1639, %v2133
    %2135 = vmatprep.subr.mxu0 %v2134
    %v2136 = vand.u32 %v1638, 4294901760
    %v2137 = vsub.f32 %v1638, %v2136
    %2138 = vmatpush1.msra.mxu0 %v2137
    %2139 = vmatprep.subr.mxu0 0.0
    %2140 = vmatpush2.msra.mxu0 0.0
    %2141 = vmatprep.subr.mxu0 0.0
    %2142 = vmatpush2.msra.mxu0 0.0
    %2143 = vmatprep.subr.mxu0 0.0
    %2144 = vmatpush2.msra.mxu0 0.0
    %2145 = vmatprep.subr.mxu0 0.0
    %2146 = vmatpush2.msra.mxu0 0.0
    %2147 = vmatprep.subr.mxu0 0.0
    %2148 = vmatpush2.msra.mxu0 0.0
    %2149 = vmatprep.subr.mxu0 0.0
    %2150 = vmatpush2.msra.mxu0 0.0
    %2151 = vmatprep.subr.mxu0 0.0
    %2152 = vmatpush2.msra.mxu0 0.0
    %2153 = vmatprep.subr.mxu0 0.0
    %2154 = vmatpush2.msra.mxu0 0.0
    %2155 = vmatprep.subr.mxu0 0.0
    %2156 = vmatpush2.msra.mxu0 0.0
    %2157 = vmatprep.subr.mxu0 0.0
    %2158 = vmatpush2.msra.mxu0 0.0
    %2159 = vmatprep.subr.mxu0 0.0
    %2160 = vmatpush2.msra.mxu0 0.0
    %2161 = vmatprep.subr.mxu0 0.0
    %2162 = vmatpush2.msra.mxu0 0.0
    %2163 = vmatprep.subr.mxu0 0.0
    %2164 = vmatpush2.msra.mxu0 0.0
    %2165 = vmatprep.subr.mxu0 0.0
    %2166 = vmatpush2.msra.mxu0 0.0
    %2167 = vmatprep.subr.mxu0 0.0
    %2168 = vmatpush2.msra.mxu0 0.0
    %2169 = vmatprep.subr.mxu0 0.0
    %2170 = vmatpush2.msra.mxu0 0.0
    %2171 = vmatprep.mubr.f32.mxu0 0.0
    %v2172 = vand.u32 %v76, 4294901760
    %v2173 = vsub.f32 %v76, %v2172
    %2174 = vmatmul.mubr.f32.gmra.mxu0 %v2173
    %v2175 = vpop.f32.mrf.mxu0
    %v2176 = vadd.f32 %v2039, %v2175
    %v2177 = vpop.f32.mrf.mxu0
    %v2178 = vadd.f32 %v2041, %v2177
    %2179 = vdwg.mxu0
    %v2180 = vand.u32 %v1684, 4294901760
    %2181 = vmatprep.subr.mxu0 %v2180
    %v2182 = vand.u32 %v1683, 4294901760
    %2183 = vmatpush1.msra.mxu0 %v2182
    %v2184 = vand.u32 %v1681, 4294901760
    %2185 = vmatprep.subr.mxu0 %v2184
    %v2186 = vand.u32 %v1680, 4294901760
    %2187 = vmatpush1.msra.mxu0 %v2186
    %v2188 = vand.u32 %v1678, 4294901760
    %2189 = vmatprep.subr.mxu0 %v2188
    %v2190 = vand.u32 %v1677, 4294901760
    %2191 = vmatpush1.msra.mxu0 %v2190
    %v2192 = vand.u32 %v1675, 4294901760
    %2193 = vmatprep.subr.mxu0 %v2192
    %v2194 = vand.u32 %v1674, 4294901760
    %2195 = vmatpush1.msra.mxu0 %v2194
    %v2196 = vand.u32 %v1672, 4294901760
    %2197 = vmatprep.subr.mxu0 %v2196
    %v2198 = vand.u32 %v1671, 4294901760
    %2199 = vmatpush1.msra.mxu0 %v2198
    %v2200 = vand.u32 %v1669, 4294901760
    %2201 = vmatprep.subr.mxu0 %v2200
    %v2202 = vand.u32 %v1668, 4294901760
    %2203 = vmatpush1.msra.mxu0 %v2202
    %v2204 = vand.u32 %v1666, 4294901760
    %2205 = vmatprep.subr.mxu0 %v2204
    %v2206 = vand.u32 %v1665, 4294901760
    %2207 = vmatpush1.msra.mxu0 %v2206
    %v2208 = vand.u32 %v1663, 4294901760
    %2209 = vmatprep.subr.mxu0 %v2208
    %v2210 = vand.u32 %v1662, 4294901760
    %2211 = vmatpush1.msra.mxu0 %v2210
    %v2212 = vand.u32 %v1660, 4294901760
    %2213 = vmatprep.subr.mxu0 %v2212
    %v2214 = vand.u32 %v1659, 4294901760
    %2215 = vmatpush1.msra.mxu0 %v2214
    %v2216 = vand.u32 %v1657, 4294901760
    %2217 = vmatprep.subr.mxu0 %v2216
    %v2218 = vand.u32 %v1656, 4294901760
    %2219 = vmatpush1.msra.mxu0 %v2218
    %v2220 = vand.u32 %v1654, 4294901760
    %2221 = vmatprep.subr.mxu0 %v2220
    %v2222 = vand.u32 %v1653, 4294901760
    %2223 = vmatpush1.msra.mxu0 %v2222
    %v2224 = vand.u32 %v1651, 4294901760
    %2225 = vmatprep.subr.mxu0 %v2224
    %v2226 = vand.u32 %v1650, 4294901760
    %2227 = vmatpush1.msra.mxu0 %v2226
    %v2228 = vand.u32 %v1648, 4294901760
    %2229 = vmatprep.subr.mxu0 %v2228
    %v2230 = vand.u32 %v1647, 4294901760
    %2231 = vmatpush1.msra.mxu0 %v2230
    %v2232 = vand.u32 %v1645, 4294901760
    %2233 = vmatprep.subr.mxu0 %v2232
    %v2234 = vand.u32 %v1644, 4294901760
    %2235 = vmatpush1.msra.mxu0 %v2234
    %v2236 = vand.u32 %v1642, 4294901760
    %2237 = vmatprep.subr.mxu0 %v2236
    %v2238 = vand.u32 %v1641, 4294901760
    %2239 = vmatpush1.msra.mxu0 %v2238
    %v2240 = vand.u32 %v1639, 4294901760
    %2241 = vmatprep.subr.mxu0 %v2240
    %v2242 = vand.u32 %v1638, 4294901760
    %2243 = vmatpush1.msra.mxu0 %v2242
    %2244 = vmatprep.subr.mxu0 0.0
    %2245 = vmatpush2.msra.mxu0 0.0
    %2246 = vmatprep.subr.mxu0 0.0
    %2247 = vmatpush2.msra.mxu0 0.0
    %2248 = vmatprep.subr.mxu0 0.0
    %2249 = vmatpush2.msra.mxu0 0.0
    %2250 = vmatprep.subr.mxu0 0.0
    %2251 = vmatpush2.msra.mxu0 0.0
    %2252 = vmatprep.subr.mxu0 0.0
    %2253 = vmatpush2.msra.mxu0 0.0
    %2254 = vmatprep.subr.mxu0 0.0
    %2255 = vmatpush2.msra.mxu0 0.0
    %2256 = vmatprep.subr.mxu0 0.0
    %2257 = vmatpush2.msra.mxu0 0.0
    %2258 = vmatprep.subr.mxu0 0.0
    %2259 = vmatpush2.msra.mxu0 0.0
    %2260 = vmatprep.subr.mxu0 0.0
    %2261 = vmatpush2.msra.mxu0 0.0
    %2262 = vmatprep.subr.mxu0 0.0
    %2263 = vmatpush2.msra.mxu0 0.0
    %2264 = vmatprep.subr.mxu0 0.0
    %2265 = vmatpush2.msra.mxu0 0.0
    %2266 = vmatprep.subr.mxu0 0.0
    %2267 = vmatpush2.msra.mxu0 0.0
    %2268 = vmatprep.subr.mxu0 0.0
    %2269 = vmatpush2.msra.mxu0 0.0
    %2270 = vmatprep.subr.mxu0 0.0
    %2271 = vmatpush2.msra.mxu0 0.0
    %2272 = vmatprep.subr.mxu0 0.0
    %2273 = vmatpush2.msra.mxu0 0.0
    %2274 = vmatprep.subr.mxu0 0.0
    %2275 = vmatpush2.msra.mxu0 0.0
    %2276 = vmatprep.mubr.f32.mxu0 0.0
    %v2277 = vand.u32 %v76, 4294901760
    %v2278 = vsub.f32 %v76, %v2277
    %v2279 = vand.u32 %v2278, 4294901760
    %2280 = vmatmul.mubr.f32.gmra.mxu0 %v2279
    %v2281 = vpop.f32.mrf.mxu0
    %v2282 = vadd.f32 %v2176, %v2281
    %v2283 = vpop.f32.mrf.mxu0
    %v2284 = vadd.f32 %v2178, %v2283
    %2285 = vdwg.mxu0
    %v2286 = vand.u32 %v1684, 4294901760
    %v2287 = vsub.f32 %v1684, %v2286
    %v2288 = vand.u32 %v2287, 4294901760
    %2289 = vmatprep.subr.mxu0 %v2288
    %v2290 = vand.u32 %v1683, 4294901760
    %v2291 = vsub.f32 %v1683, %v2290
    %v2292 = vand.u32 %v2291, 4294901760
    %2293 = vmatpush1.msra.mxu0 %v2292
    %v2294 = vand.u32 %v1681, 4294901760
    %v2295 = vsub.f32 %v1681, %v2294
    %v2296 = vand.u32 %v2295, 4294901760
    %2297 = vmatprep.subr.mxu0 %v2296
    %v2298 = vand.u32 %v1680, 4294901760
    %v2299 = vsub.f32 %v1680, %v2298
    %v2300 = vand.u32 %v2299, 4294901760
    %2301 = vmatpush1.msra.mxu0 %v2300
    %v2302 = vand.u32 %v1678, 4294901760
    %v2303 = vsub.f32 %v1678, %v2302
    %v2304 = vand.u32 %v2303, 4294901760
    %2305 = vmatprep.subr.mxu0 %v2304
    %v2306 = vand.u32 %v1677, 4294901760
    %v2307 = vsub.f32 %v1677, %v2306
    %v2308 = vand.u32 %v2307, 4294901760
    %2309 = vmatpush1.msra.mxu0 %v2308
    %v2310 = vand.u32 %v1675, 4294901760
    %v2311 = vsub.f32 %v1675, %v2310
    %v2312 = vand.u32 %v2311, 4294901760
    %2313 = vmatprep.subr.mxu0 %v2312
    %v2314 = vand.u32 %v1674, 4294901760
    %v2315 = vsub.f32 %v1674, %v2314
    %v2316 = vand.u32 %v2315, 4294901760
    %2317 = vmatpush1.msra.mxu0 %v2316
    %v2318 = vand.u32 %v1672, 4294901760
    %v2319 = vsub.f32 %v1672, %v2318
    %v2320 = vand.u32 %v2319, 4294901760
    %2321 = vmatprep.subr.mxu0 %v2320
    %v2322 = vand.u32 %v1671, 4294901760
    %v2323 = vsub.f32 %v1671, %v2322
    %v2324 = vand.u32 %v2323, 4294901760
    %2325 = vmatpush1.msra.mxu0 %v2324
    %v2326 = vand.u32 %v1669, 4294901760
    %v2327 = vsub.f32 %v1669, %v2326
    %v2328 = vand.u32 %v2327, 4294901760
    %2329 = vmatprep.subr.mxu0 %v2328
    %v2330 = vand.u32 %v1668, 4294901760
    %v2331 = vsub.f32 %v1668, %v2330
    %v2332 = vand.u32 %v2331, 4294901760
    %2333 = vmatpush1.msra.mxu0 %v2332
    %v2334 = vand.u32 %v1666, 4294901760
    %v2335 = vsub.f32 %v1666, %v2334
    %v2336 = vand.u32 %v2335, 4294901760
    %2337 = vmatprep.subr.mxu0 %v2336
    %v2338 = vand.u32 %v1665, 4294901760
    %v2339 = vsub.f32 %v1665, %v2338
    %v2340 = vand.u32 %v2339, 4294901760
    %2341 = vmatpush1.msra.mxu0 %v2340
    %v2342 = vand.u32 %v1663, 4294901760
    %v2343 = vsub.f32 %v1663, %v2342
    %v2344 = vand.u32 %v2343, 4294901760
    %2345 = vmatprep.subr.mxu0 %v2344
    %v2346 = vand.u32 %v1662, 4294901760
    %v2347 = vsub.f32 %v1662, %v2346
    %v2348 = vand.u32 %v2347, 4294901760
    %2349 = vmatpush1.msra.mxu0 %v2348
    %v2350 = vand.u32 %v1660, 4294901760
    %v2351 = vsub.f32 %v1660, %v2350
    %v2352 = vand.u32 %v2351, 4294901760
    %2353 = vmatprep.subr.mxu0 %v2352
    %v2354 = vand.u32 %v1659, 4294901760
    %v2355 = vsub.f32 %v1659, %v2354
    %v2356 = vand.u32 %v2355, 4294901760
    %2357 = vmatpush1.msra.mxu0 %v2356
    %v2358 = vand.u32 %v1657, 4294901760
    %v2359 = vsub.f32 %v1657, %v2358
    %v2360 = vand.u32 %v2359, 4294901760
    %2361 = vmatprep.subr.mxu0 %v2360
    %v2362 = vand.u32 %v1656, 4294901760
    %v2363 = vsub.f32 %v1656, %v2362
    %v2364 = vand.u32 %v2363, 4294901760
    %2365 = vmatpush1.msra.mxu0 %v2364
    %v2366 = vand.u32 %v1654, 4294901760
    %v2367 = vsub.f32 %v1654, %v2366
    %v2368 = vand.u32 %v2367, 4294901760
    %2369 = vmatprep.subr.mxu0 %v2368
    %v2370 = vand.u32 %v1653, 4294901760
    %v2371 = vsub.f32 %v1653, %v2370
    %v2372 = vand.u32 %v2371, 4294901760
    %2373 = vmatpush1.msra.mxu0 %v2372
    %v2374 = vand.u32 %v1651, 4294901760
    %v2375 = vsub.f32 %v1651, %v2374
    %v2376 = vand.u32 %v2375, 4294901760
    %2377 = vmatprep.subr.mxu0 %v2376
    %v2378 = vand.u32 %v1650, 4294901760
    %v2379 = vsub.f32 %v1650, %v2378
    %v2380 = vand.u32 %v2379, 4294901760
    %2381 = vmatpush1.msra.mxu0 %v2380
    %v2382 = vand.u32 %v1648, 4294901760
    %v2383 = vsub.f32 %v1648, %v2382
    %v2384 = vand.u32 %v2383, 4294901760
    %2385 = vmatprep.subr.mxu0 %v2384
    %v2386 = vand.u32 %v1647, 4294901760
    %v2387 = vsub.f32 %v1647, %v2386
    %v2388 = vand.u32 %v2387, 4294901760
    %2389 = vmatpush1.msra.mxu0 %v2388
    %v2390 = vand.u32 %v1645, 4294901760
    %v2391 = vsub.f32 %v1645, %v2390
    %v2392 = vand.u32 %v2391, 4294901760
    %2393 = vmatprep.subr.mxu0 %v2392
    %v2394 = vand.u32 %v1644, 4294901760
    %v2395 = vsub.f32 %v1644, %v2394
    %v2396 = vand.u32 %v2395, 4294901760
    %2397 = vmatpush1.msra.mxu0 %v2396
    %v2398 = vand.u32 %v1642, 4294901760
    %v2399 = vsub.f32 %v1642, %v2398
    %v2400 = vand.u32 %v2399, 4294901760
    %2401 = vmatprep.subr.mxu0 %v2400
    %v2402 = vand.u32 %v1641, 4294901760
    %v2403 = vsub.f32 %v1641, %v2402
    %v2404 = vand.u32 %v2403, 4294901760
    %2405 = vmatpush1.msra.mxu0 %v2404
    %v2406 = vand.u32 %v1639, 4294901760
    %v2407 = vsub.f32 %v1639, %v2406
    %v2408 = vand.u32 %v2407, 4294901760
    %2409 = vmatprep.subr.mxu0 %v2408
    %v2410 = vand.u32 %v1638, 4294901760
    %v2411 = vsub.f32 %v1638, %v2410
    %v2412 = vand.u32 %v2411, 4294901760
    %2413 = vmatpush1.msra.mxu0 %v2412
    %2414 = vmatprep.subr.mxu0 0.0
    %2415 = vmatpush2.msra.mxu0 0.0
    %2416 = vmatprep.subr.mxu0 0.0
    %2417 = vmatpush2.msra.mxu0 0.0
    %2418 = vmatprep.subr.mxu0 0.0
    %2419 = vmatpush2.msra.mxu0 0.0
    %2420 = vmatprep.subr.mxu0 0.0
    %2421 = vmatpush2.msra.mxu0 0.0
    %2422 = vmatprep.subr.mxu0 0.0
    %2423 = vmatpush2.msra.mxu0 0.0
    %2424 = vmatprep.subr.mxu0 0.0
    %2425 = vmatpush2.msra.mxu0 0.0
    %2426 = vmatprep.subr.mxu0 0.0
    %2427 = vmatpush2.msra.mxu0 0.0
    %2428 = vmatprep.subr.mxu0 0.0
    %2429 = vmatpush2.msra.mxu0 0.0
    %2430 = vmatprep.subr.mxu0 0.0
    %2431 = vmatpush2.msra.mxu0 0.0
    %2432 = vmatprep.subr.mxu0 0.0
    %2433 = vmatpush2.msra.mxu0 0.0
    %2434 = vmatprep.subr.mxu0 0.0
    %2435 = vmatpush2.msra.mxu0 0.0
    %2436 = vmatprep.subr.mxu0 0.0
    %2437 = vmatpush2.msra.mxu0 0.0
    %2438 = vmatprep.subr.mxu0 0.0
    %2439 = vmatpush2.msra.mxu0 0.0
    %2440 = vmatprep.subr.mxu0 0.0
    %2441 = vmatpush2.msra.mxu0 0.0
    %2442 = vmatprep.subr.mxu0 0.0
    %2443 = vmatpush2.msra.mxu0 0.0
    %2444 = vmatprep.subr.mxu0 0.0
    %2445 = vmatpush2.msra.mxu0 0.0
    %2446 = vmatprep.mubr.f32.mxu0 0.0
    %v2447 = vand.u32 %v76, 4294901760
    %2448 = vmatmul.mubr.f32.gmra.mxu0 %v2447
    %v2449 = vpop.f32.mrf.mxu0
    %v2450 = vadd.f32 %v2282, %v2449
    %v2451 = vpop.f32.mrf.mxu0
    %v2452 = vadd.f32 %v2284, %v2451
    %2453 = vdwg.mxu0
    %v2454 = vand.u32 %v1684, 4294901760
    %2455 = vmatprep.subr.mxu0 %v2454
    %v2456 = vand.u32 %v1683, 4294901760
    %2457 = vmatpush1.msra.mxu0 %v2456
    %v2458 = vand.u32 %v1681, 4294901760
    %2459 = vmatprep.subr.mxu0 %v2458
    %v2460 = vand.u32 %v1680, 4294901760
    %2461 = vmatpush1.msra.mxu0 %v2460
    %v2462 = vand.u32 %v1678, 4294901760
    %2463 = vmatprep.subr.mxu0 %v2462
    %v2464 = vand.u32 %v1677, 4294901760
    %2465 = vmatpush1.msra.mxu0 %v2464
    %v2466 = vand.u32 %v1675, 4294901760
    %2467 = vmatprep.subr.mxu0 %v2466
    %v2468 = vand.u32 %v1674, 4294901760
    %2469 = vmatpush1.msra.mxu0 %v2468
    %v2470 = vand.u32 %v1672, 4294901760
    %2471 = vmatprep.subr.mxu0 %v2470
    %v2472 = vand.u32 %v1671, 4294901760
    %2473 = vmatpush1.msra.mxu0 %v2472
    %v2474 = vand.u32 %v1669, 4294901760
    %2475 = vmatprep.subr.mxu0 %v2474
    %v2476 = vand.u32 %v1668, 4294901760
    %2477 = vmatpush1.msra.mxu0 %v2476
    %v2478 = vand.u32 %v1666, 4294901760
    %2479 = vmatprep.subr.mxu0 %v2478
    %v2480 = vand.u32 %v1665, 4294901760
    %2481 = vmatpush1.msra.mxu0 %v2480
    %v2482 = vand.u32 %v1663, 4294901760
    %2483 = vmatprep.subr.mxu0 %v2482
    %v2484 = vand.u32 %v1662, 4294901760
    %2485 = vmatpush1.msra.mxu0 %v2484
    %v2486 = vand.u32 %v1660, 4294901760
    %2487 = vmatprep.subr.mxu0 %v2486
    %v2488 = vand.u32 %v1659, 4294901760
    %2489 = vmatpush1.msra.mxu0 %v2488
    %v2490 = vand.u32 %v1657, 4294901760
    %2491 = vmatprep.subr.mxu0 %v2490
    %v2492 = vand.u32 %v1656, 4294901760
    %2493 = vmatpush1.msra.mxu0 %v2492
    %v2494 = vand.u32 %v1654, 4294901760
    %2495 = vmatprep.subr.mxu0 %v2494
    %v2496 = vand.u32 %v1653, 4294901760
    %2497 = vmatpush1.msra.mxu0 %v2496
    %v2498 = vand.u32 %v1651, 4294901760
    %2499 = vmatprep.subr.mxu0 %v2498
    %v2500 = vand.u32 %v1650, 4294901760
    %2501 = vmatpush1.msra.mxu0 %v2500
    %v2502 = vand.u32 %v1648, 4294901760
    %2503 = vmatprep.subr.mxu0 %v2502
    %v2504 = vand.u32 %v1647, 4294901760
    %2505 = vmatpush1.msra.mxu0 %v2504
    %v2506 = vand.u32 %v1645, 4294901760
    %2507 = vmatprep.subr.mxu0 %v2506
    %v2508 = vand.u32 %v1644, 4294901760
    %2509 = vmatpush1.msra.mxu0 %v2508
    %v2510 = vand.u32 %v1642, 4294901760
    %2511 = vmatprep.subr.mxu0 %v2510
    %v2512 = vand.u32 %v1641, 4294901760
    %2513 = vmatpush1.msra.mxu0 %v2512
    %v2514 = vand.u32 %v1639, 4294901760
    %2515 = vmatprep.subr.mxu0 %v2514
    %v2516 = vand.u32 %v1638, 4294901760
    %2517 = vmatpush1.msra.mxu0 %v2516
    %2518 = vmatprep.subr.mxu0 0.0
    %2519 = vmatpush2.msra.mxu0 0.0
    %2520 = vmatprep.subr.mxu0 0.0
    %2521 = vmatpush2.msra.mxu0 0.0
    %2522 = vmatprep.subr.mxu0 0.0
    %2523 = vmatpush2.msra.mxu0 0.0
    %2524 = vmatprep.subr.mxu0 0.0
    %2525 = vmatpush2.msra.mxu0 0.0
    %2526 = vmatprep.subr.mxu0 0.0
    %2527 = vmatpush2.msra.mxu0 0.0
    %2528 = vmatprep.subr.mxu0 0.0
    %2529 = vmatpush2.msra.mxu0 0.0
    %2530 = vmatprep.subr.mxu0 0.0
    %2531 = vmatpush2.msra.mxu0 0.0
    %2532 = vmatprep.subr.mxu0 0.0
    %2533 = vmatpush2.msra.mxu0 0.0
    %2534 = vmatprep.subr.mxu0 0.0
    %2535 = vmatpush2.msra.mxu0 0.0
    %2536 = vmatprep.subr.mxu0 0.0
    %2537 = vmatpush2.msra.mxu0 0.0
    %2538 = vmatprep.subr.mxu0 0.0
    %2539 = vmatpush2.msra.mxu0 0.0
    %2540 = vmatprep.subr.mxu0 0.0
    %2541 = vmatpush2.msra.mxu0 0.0
    %2542 = vmatprep.subr.mxu0 0.0
    %2543 = vmatpush2.msra.mxu0 0.0
    %2544 = vmatprep.subr.mxu0 0.0
    %2545 = vmatpush2.msra.mxu0 0.0
    %2546 = vmatprep.subr.mxu0 0.0
    %2547 = vmatpush2.msra.mxu0 0.0
    %2548 = vmatprep.subr.mxu0 0.0
    %2549 = vmatpush2.msra.mxu0 0.0
    %2550 = vmatprep.mubr.f32.mxu0 0.0
    %v2551 = vand.u32 %v76, 4294901760
    %2552 = vmatmul.mubr.f32.gmra.mxu0 %v2551
    %v2553 = vpop.f32.mrf.mxu0
    %v2554 = vadd.f32 %v2450, %v2553
    %v2555 = vpop.f32.mrf.mxu0
    %v2556 = vadd.f32 %v2452, %v2555
    %2557 = vdwg.mxu0
    %2558 = vmatprep.subr.mxu0 0.0
    %v2559 = vand.u32 %v1685, 4294901760
    %2560 = vmatpush1.msra.mxu0 %v2559
    %2561 = vmatprep.subr.mxu0 0.0
    %v2562 = vand.u32 %v1682, 4294901760
    %2563 = vmatpush1.msra.mxu0 %v2562
    %2564 = vmatprep.subr.mxu0 0.0
    %v2565 = vand.u32 %v1679, 4294901760
    %2566 = vmatpush1.msra.mxu0 %v2565
    %2567 = vmatprep.subr.mxu0 0.0
    %v2568 = vand.u32 %v1676, 4294901760
    %2569 = vmatpush1.msra.mxu0 %v2568
    %2570 = vmatprep.subr.mxu0 0.0
    %v2571 = vand.u32 %v1673, 4294901760
    %2572 = vmatpush1.msra.mxu0 %v2571
    %2573 = vmatprep.subr.mxu0 0.0
    %v2574 = vand.u32 %v1670, 4294901760
    %2575 = vmatpush1.msra.mxu0 %v2574
    %2576 = vmatprep.subr.mxu0 0.0
    %v2577 = vand.u32 %v1667, 4294901760
    %2578 = vmatpush1.msra.mxu0 %v2577
    %2579 = vmatprep.subr.mxu0 0.0
    %v2580 = vand.u32 %v1664, 4294901760
    %2581 = vmatpush1.msra.mxu0 %v2580
    %2582 = vmatprep.subr.mxu0 0.0
    %v2583 = vand.u32 %v1661, 4294901760
    %2584 = vmatpush1.msra.mxu0 %v2583
    %2585 = vmatprep.subr.mxu0 0.0
    %v2586 = vand.u32 %v1658, 4294901760
    %2587 = vmatpush1.msra.mxu0 %v2586
    %2588 = vmatprep.subr.mxu0 0.0
    %v2589 = vand.u32 %v1655, 4294901760
    %2590 = vmatpush1.msra.mxu0 %v2589
    %2591 = vmatprep.subr.mxu0 0.0
    %v2592 = vand.u32 %v1652, 4294901760
    %2593 = vmatpush1.msra.mxu0 %v2592
    %2594 = vmatprep.subr.mxu0 0.0
    %v2595 = vand.u32 %v1649, 4294901760
    %2596 = vmatpush1.msra.mxu0 %v2595
    %2597 = vmatprep.subr.mxu0 0.0
    %v2598 = vand.u32 %v1646, 4294901760
    %2599 = vmatpush1.msra.mxu0 %v2598
    %2600 = vmatprep.subr.mxu0 0.0
    %v2601 = vand.u32 %v1643, 4294901760
    %2602 = vmatpush1.msra.mxu0 %v2601
    %2603 = vmatprep.subr.mxu0 0.0
    %v2604 = vand.u32 %v1640, 4294901760
    %2605 = vmatpush1.msra.mxu0 %v2604
    %2606 = vmatprep.subr.mxu0 0.0
    %2607 = vmatpush2.msra.mxu0 0.0
    %2608 = vmatprep.subr.mxu0 0.0
    %2609 = vmatpush2.msra.mxu0 0.0
    %2610 = vmatprep.subr.mxu0 0.0
    %2611 = vmatpush2.msra.mxu0 0.0
    %2612 = vmatprep.subr.mxu0 0.0
    %2613 = vmatpush2.msra.mxu0 0.0
    %2614 = vmatprep.subr.mxu0 0.0
    %2615 = vmatpush2.msra.mxu0 0.0
    %2616 = vmatprep.subr.mxu0 0.0
    %2617 = vmatpush2.msra.mxu0 0.0
    %2618 = vmatprep.subr.mxu0 0.0
    %2619 = vmatpush2.msra.mxu0 0.0
    %2620 = vmatprep.subr.mxu0 0.0
    %2621 = vmatpush2.msra.mxu0 0.0
    %2622 = vmatprep.subr.mxu0 0.0
    %2623 = vmatpush2.msra.mxu0 0.0
    %2624 = vmatprep.subr.mxu0 0.0
    %2625 = vmatpush2.msra.mxu0 0.0
    %2626 = vmatprep.subr.mxu0 0.0
    %2627 = vmatpush2.msra.mxu0 0.0
    %2628 = vmatprep.subr.mxu0 0.0
    %2629 = vmatpush2.msra.mxu0 0.0
    %2630 = vmatprep.subr.mxu0 0.0
    %2631 = vmatpush2.msra.mxu0 0.0
    %2632 = vmatprep.subr.mxu0 0.0
    %2633 = vmatpush2.msra.mxu0 0.0
    %2634 = vmatprep.subr.mxu0 0.0
    %2635 = vmatpush2.msra.mxu0 0.0
    %2636 = vmatprep.subr.mxu0 0.0
    %2637 = vmatpush2.msra.mxu0 0.0
    %2638 = vmatprep.mubr.f32.mxu0 0.0
    %v2639 = vand.u32 %v76, 4294901760
    %v2640 = vsub.f32 %v76, %v2639
    %v2641 = vand.u32 %v2640, 4294901760
    %v2642 = vsub.f32 %v2640, %v2641
    %v2643 = vand.u32 %v2642, 4294901760
    %2644 = vmatmul.mubr.f32.gmra.mxu0 %v2643
    %v2645 = vpop.f32.mrf.mxu0
    %v2646 = vadd.f32 %v1699, %v2645
    %v2647 = vpop.f32.mrf.mxu0
    %2648 = vdwg.mxu0
    %2649 = vmatprep.subr.mxu0 0.0
    %v2650 = vand.u32 %v1685, 4294901760
    %v2651 = vsub.f32 %v1685, %v2650
    %v2652 = vand.u32 %v2651, 4294901760
    %v2653 = vsub.f32 %v2651, %v2652
    %v2654 = vand.u32 %v2653, 4294901760
    %2655 = vmatpush1.msra.mxu0 %v2654
    %2656 = vmatprep.subr.mxu0 0.0
    %v2657 = vand.u32 %v1682, 4294901760
    %v2658 = vsub.f32 %v1682, %v2657
    %v2659 = vand.u32 %v2658, 4294901760
    %v2660 = vsub.f32 %v2658, %v2659
    %v2661 = vand.u32 %v2660, 4294901760
    %2662 = vmatpush1.msra.mxu0 %v2661
    %2663 = vmatprep.subr.mxu0 0.0
    %v2664 = vand.u32 %v1679, 4294901760
    %v2665 = vsub.f32 %v1679, %v2664
    %v2666 = vand.u32 %v2665, 4294901760
    %v2667 = vsub.f32 %v2665, %v2666
    %v2668 = vand.u32 %v2667, 4294901760
    %2669 = vmatpush1.msra.mxu0 %v2668
    %2670 = vmatprep.subr.mxu0 0.0
    %v2671 = vand.u32 %v1676, 4294901760
    %v2672 = vsub.f32 %v1676, %v2671
    %v2673 = vand.u32 %v2672, 4294901760
    %v2674 = vsub.f32 %v2672, %v2673
    %v2675 = vand.u32 %v2674, 4294901760
    %2676 = vmatpush1.msra.mxu0 %v2675
    %2677 = vmatprep.subr.mxu0 0.0
    %v2678 = vand.u32 %v1673, 4294901760
    %v2679 = vsub.f32 %v1673, %v2678
    %v2680 = vand.u32 %v2679, 4294901760
    %v2681 = vsub.f32 %v2679, %v2680
    %v2682 = vand.u32 %v2681, 4294901760
    %2683 = vmatpush1.msra.mxu0 %v2682
    %2684 = vmatprep.subr.mxu0 0.0
    %v2685 = vand.u32 %v1670, 4294901760
    %v2686 = vsub.f32 %v1670, %v2685
    %v2687 = vand.u32 %v2686, 4294901760
    %v2688 = vsub.f32 %v2686, %v2687
    %v2689 = vand.u32 %v2688, 4294901760
    %2690 = vmatpush1.msra.mxu0 %v2689
    %2691 = vmatprep.subr.mxu0 0.0
    %v2692 = vand.u32 %v1667, 4294901760
    %v2693 = vsub.f32 %v1667, %v2692
    %v2694 = vand.u32 %v2693, 4294901760
    %v2695 = vsub.f32 %v2693, %v2694
    %v2696 = vand.u32 %v2695, 4294901760
    %2697 = vmatpush1.msra.mxu0 %v2696
    %2698 = vmatprep.subr.mxu0 0.0
    %v2699 = vand.u32 %v1664, 4294901760
    %v2700 = vsub.f32 %v1664, %v2699
    %v2701 = vand.u32 %v2700, 4294901760
    %v2702 = vsub.f32 %v2700, %v2701
    %v2703 = vand.u32 %v2702, 4294901760
    %2704 = vmatpush1.msra.mxu0 %v2703
    %2705 = vmatprep.subr.mxu0 0.0
    %v2706 = vand.u32 %v1661, 4294901760
    %v2707 = vsub.f32 %v1661, %v2706
    %v2708 = vand.u32 %v2707, 4294901760
    %v2709 = vsub.f32 %v2707, %v2708
    %v2710 = vand.u32 %v2709, 4294901760
    %2711 = vmatpush1.msra.mxu0 %v2710
    %2712 = vmatprep.subr.mxu0 0.0
    %v2713 = vand.u32 %v1658, 4294901760
    %v2714 = vsub.f32 %v1658, %v2713
    %v2715 = vand.u32 %v2714, 4294901760
    %v2716 = vsub.f32 %v2714, %v2715
    %v2717 = vand.u32 %v2716, 4294901760
    %2718 = vmatpush1.msra.mxu0 %v2717
    %2719 = vmatprep.subr.mxu0 0.0
    %v2720 = vand.u32 %v1655, 4294901760
    %v2721 = vsub.f32 %v1655, %v2720
    %v2722 = vand.u32 %v2721, 4294901760
    %v2723 = vsub.f32 %v2721, %v2722
    %v2724 = vand.u32 %v2723, 4294901760
    %2725 = vmatpush1.msra.mxu0 %v2724
    %2726 = vmatprep.subr.mxu0 0.0
    %v2727 = vand.u32 %v1652, 4294901760
    %v2728 = vsub.f32 %v1652, %v2727
    %v2729 = vand.u32 %v2728, 4294901760
    %v2730 = vsub.f32 %v2728, %v2729
    %v2731 = vand.u32 %v2730, 4294901760
    %2732 = vmatpush1.msra.mxu0 %v2731
    %2733 = vmatprep.subr.mxu0 0.0
    %v2734 = vand.u32 %v1649, 4294901760
    %v2735 = vsub.f32 %v1649, %v2734
    %v2736 = vand.u32 %v2735, 4294901760
    %v2737 = vsub.f32 %v2735, %v2736
    %v2738 = vand.u32 %v2737, 4294901760
    %2739 = vmatpush1.msra.mxu0 %v2738
    %2740 = vmatprep.subr.mxu0 0.0
    %v2741 = vand.u32 %v1646, 4294901760
    %v2742 = vsub.f32 %v1646, %v2741
    %v2743 = vand.u32 %v2742, 4294901760
    %v2744 = vsub.f32 %v2742, %v2743
    %v2745 = vand.u32 %v2744, 4294901760
    %2746 = vmatpush1.msra.mxu0 %v2745
    %2747 = vmatprep.subr.mxu0 0.0
    %v2748 = vand.u32 %v1643, 4294901760
    %v2749 = vsub.f32 %v1643, %v2748
    %v2750 = vand.u32 %v2749, 4294901760
    %v2751 = vsub.f32 %v2749, %v2750
    %v2752 = vand.u32 %v2751, 4294901760
    %2753 = vmatpush1.msra.mxu0 %v2752
    %2754 = vmatprep.subr.mxu0 0.0
    %v2755 = vand.u32 %v1640, 4294901760
    %v2756 = vsub.f32 %v1640, %v2755
    %v2757 = vand.u32 %v2756, 4294901760
    %v2758 = vsub.f32 %v2756, %v2757
    %v2759 = vand.u32 %v2758, 4294901760
    %2760 = vmatpush1.msra.mxu0 %v2759
    %2761 = vmatprep.subr.mxu0 0.0
    %2762 = vmatpush2.msra.mxu0 0.0
    %2763 = vmatprep.subr.mxu0 0.0
    %2764 = vmatpush2.msra.mxu0 0.0
    %2765 = vmatprep.subr.mxu0 0.0
    %2766 = vmatpush2.msra.mxu0 0.0
    %2767 = vmatprep.subr.mxu0 0.0
    %2768 = vmatpush2.msra.mxu0 0.0
    %2769 = vmatprep.subr.mxu0 0.0
    %2770 = vmatpush2.msra.mxu0 0.0
    %2771 = vmatprep.subr.mxu0 0.0
    %2772 = vmatpush2.msra.mxu0 0.0
    %2773 = vmatprep.subr.mxu0 0.0
    %2774 = vmatpush2.msra.mxu0 0.0
    %2775 = vmatprep.subr.mxu0 0.0
    %2776 = vmatpush2.msra.mxu0 0.0
    %2777 = vmatprep.subr.mxu0 0.0
    %2778 = vmatpush2.msra.mxu0 0.0
    %2779 = vmatprep.subr.mxu0 0.0
    %2780 = vmatpush2.msra.mxu0 0.0
    %2781 = vmatprep.subr.mxu0 0.0
    %2782 = vmatpush2.msra.mxu0 0.0
    %2783 = vmatprep.subr.mxu0 0.0
    %2784 = vmatpush2.msra.mxu0 0.0
    %2785 = vmatprep.subr.mxu0 0.0
    %2786 = vmatpush2.msra.mxu0 0.0
    %2787 = vmatprep.subr.mxu0 0.0
    %2788 = vmatpush2.msra.mxu0 0.0
    %2789 = vmatprep.subr.mxu0 0.0
    %2790 = vmatpush2.msra.mxu0 0.0
    %2791 = vmatprep.subr.mxu0 0.0
    %2792 = vmatpush2.msra.mxu0 0.0
    %2793 = vmatprep.mubr.f32.mxu0 0.0
    %v2794 = vand.u32 %v76, 4294901760
    %2795 = vmatmul.mubr.f32.gmra.mxu0 %v2794
    %v2796 = vpop.f32.mrf.mxu0
    %v2797 = vadd.f32 %v2646, %v2796
    %v2798 = vpop.f32.mrf.mxu0
    %2799 = vdwg.mxu0
    %2800 = vmatprep.subr.mxu0 0.0
    %v2801 = vand.u32 %v1685, 4294901760
    %v2802 = vsub.f32 %v1685, %v2801
    %2803 = vmatpush1.msra.mxu0 %v2802
    %2804 = vmatprep.subr.mxu0 0.0
    %v2805 = vand.u32 %v1682, 4294901760
    %v2806 = vsub.f32 %v1682, %v2805
    %2807 = vmatpush1.msra.mxu0 %v2806
    %2808 = vmatprep.subr.mxu0 0.0
    %v2809 = vand.u32 %v1679, 4294901760
    %v2810 = vsub.f32 %v1679, %v2809
    %2811 = vmatpush1.msra.mxu0 %v2810
    %2812 = vmatprep.subr.mxu0 0.0
    %v2813 = vand.u32 %v1676, 4294901760
    %v2814 = vsub.f32 %v1676, %v2813
    %2815 = vmatpush1.msra.mxu0 %v2814
    %2816 = vmatprep.subr.mxu0 0.0
    %v2817 = vand.u32 %v1673, 4294901760
    %v2818 = vsub.f32 %v1673, %v2817
    %2819 = vmatpush1.msra.mxu0 %v2818
    %2820 = vmatprep.subr.mxu0 0.0
    %v2821 = vand.u32 %v1670, 4294901760
    %v2822 = vsub.f32 %v1670, %v2821
    %2823 = vmatpush1.msra.mxu0 %v2822
    %2824 = vmatprep.subr.mxu0 0.0
    %v2825 = vand.u32 %v1667, 4294901760
    %v2826 = vsub.f32 %v1667, %v2825
    %2827 = vmatpush1.msra.mxu0 %v2826
    %2828 = vmatprep.subr.mxu0 0.0
    %v2829 = vand.u32 %v1664, 4294901760
    %v2830 = vsub.f32 %v1664, %v2829
    %2831 = vmatpush1.msra.mxu0 %v2830
    %2832 = vmatprep.subr.mxu0 0.0
    %v2833 = vand.u32 %v1661, 4294901760
    %v2834 = vsub.f32 %v1661, %v2833
    %2835 = vmatpush1.msra.mxu0 %v2834
    %2836 = vmatprep.subr.mxu0 0.0
    %v2837 = vand.u32 %v1658, 4294901760
    %v2838 = vsub.f32 %v1658, %v2837
    %2839 = vmatpush1.msra.mxu0 %v2838
    %2840 = vmatprep.subr.mxu0 0.0
    %v2841 = vand.u32 %v1655, 4294901760
    %v2842 = vsub.f32 %v1655, %v2841
    %2843 = vmatpush1.msra.mxu0 %v2842
    %2844 = vmatprep.subr.mxu0 0.0
    %v2845 = vand.u32 %v1652, 4294901760
    %v2846 = vsub.f32 %v1652, %v2845
    %2847 = vmatpush1.msra.mxu0 %v2846
    %2848 = vmatprep.subr.mxu0 0.0
    %v2849 = vand.u32 %v1649, 4294901760
    %v2850 = vsub.f32 %v1649, %v2849
    %2851 = vmatpush1.msra.mxu0 %v2850
    %2852 = vmatprep.subr.mxu0 0.0
    %v2853 = vand.u32 %v1646, 4294901760
    %v2854 = vsub.f32 %v1646, %v2853
    %2855 = vmatpush1.msra.mxu0 %v2854
    %2856 = vmatprep.subr.mxu0 0.0
    %v2857 = vand.u32 %v1643, 4294901760
    %v2858 = vsub.f32 %v1643, %v2857
    %2859 = vmatpush1.msra.mxu0 %v2858
    %2860 = vmatprep.subr.mxu0 0.0
    %v2861 = vand.u32 %v1640, 4294901760
    %v2862 = vsub.f32 %v1640, %v2861
    %2863 = vmatpush1.msra.mxu0 %v2862
    %2864 = vmatprep.subr.mxu0 0.0
    %2865 = vmatpush2.msra.mxu0 0.0
    %2866 = vmatprep.subr.mxu0 0.0
    %2867 = vmatpush2.msra.mxu0 0.0
    %2868 = vmatprep.subr.mxu0 0.0
    %2869 = vmatpush2.msra.mxu0 0.0
    %2870 = vmatprep.subr.mxu0 0.0
    %2871 = vmatpush2.msra.mxu0 0.0
    %2872 = vmatprep.subr.mxu0 0.0
    %2873 = vmatpush2.msra.mxu0 0.0
    %2874 = vmatprep.subr.mxu0 0.0
    %2875 = vmatpush2.msra.mxu0 0.0
    %2876 = vmatprep.subr.mxu0 0.0
    %2877 = vmatpush2.msra.mxu0 0.0
    %2878 = vmatprep.subr.mxu0 0.0
    %2879 = vmatpush2.msra.mxu0 0.0
    %2880 = vmatprep.subr.mxu0 0.0
    %2881 = vmatpush2.msra.mxu0 0.0
    %2882 = vmatprep.subr.mxu0 0.0
    %2883 = vmatpush2.msra.mxu0 0.0
    %2884 = vmatprep.subr.mxu0 0.0
    %2885 = vmatpush2.msra.mxu0 0.0
    %2886 = vmatprep.subr.mxu0 0.0
    %2887 = vmatpush2.msra.mxu0 0.0
    %2888 = vmatprep.subr.mxu0 0.0
    %2889 = vmatpush2.msra.mxu0 0.0
    %2890 = vmatprep.subr.mxu0 0.0
    %2891 = vmatpush2.msra.mxu0 0.0
    %2892 = vmatprep.subr.mxu0 0.0
    %2893 = vmatpush2.msra.mxu0 0.0
    %2894 = vmatprep.subr.mxu0 0.0
    %2895 = vmatpush2.msra.mxu0 0.0
    %2896 = vmatprep.mubr.f32.mxu0 0.0
    %v2897 = vand.u32 %v76, 4294901760
    %v2898 = vsub.f32 %v76, %v2897
    %2899 = vmatmul.mubr.f32.gmra.mxu0 %v2898
    %v2900 = vpop.f32.mrf.mxu0
    %v2901 = vadd.f32 %v2797, %v2900
    %v2902 = vpop.f32.mrf.mxu0
    %2903 = vdwg.mxu0
    %2904 = vmatprep.subr.mxu0 0.0
    %v2905 = vand.u32 %v1685, 4294901760
    %2906 = vmatpush1.msra.mxu0 %v2905
    %2907 = vmatprep.subr.mxu0 0.0
    %v2908 = vand.u32 %v1682, 4294901760
    %2909 = vmatpush1.msra.mxu0 %v2908
    %2910 = vmatprep.subr.mxu0 0.0
    %v2911 = vand.u32 %v1679, 4294901760
    %2912 = vmatpush1.msra.mxu0 %v2911
    %2913 = vmatprep.subr.mxu0 0.0
    %v2914 = vand.u32 %v1676, 4294901760
    %2915 = vmatpush1.msra.mxu0 %v2914
    %2916 = vmatprep.subr.mxu0 0.0
    %v2917 = vand.u32 %v1673, 4294901760
    %2918 = vmatpush1.msra.mxu0 %v2917
    %2919 = vmatprep.subr.mxu0 0.0
    %v2920 = vand.u32 %v1670, 4294901760
    %2921 = vmatpush1.msra.mxu0 %v2920
    %2922 = vmatprep.subr.mxu0 0.0
    %v2923 = vand.u32 %v1667, 4294901760
    %2924 = vmatpush1.msra.mxu0 %v2923
    %2925 = vmatprep.subr.mxu0 0.0
    %v2926 = vand.u32 %v1664, 4294901760
    %2927 = vmatpush1.msra.mxu0 %v2926
    %2928 = vmatprep.subr.mxu0 0.0
    %v2929 = vand.u32 %v1661, 4294901760
    %2930 = vmatpush1.msra.mxu0 %v2929
    %2931 = vmatprep.subr.mxu0 0.0
    %v2932 = vand.u32 %v1658, 4294901760
    %2933 = vmatpush1.msra.mxu0 %v2932
    %2934 = vmatprep.subr.mxu0 0.0
    %v2935 = vand.u32 %v1655, 4294901760
    %2936 = vmatpush1.msra.mxu0 %v2935
    %2937 = vmatprep.subr.mxu0 0.0
    %v2938 = vand.u32 %v1652, 4294901760
    %2939 = vmatpush1.msra.mxu0 %v2938
    %2940 = vmatprep.subr.mxu0 0.0
    %v2941 = vand.u32 %v1649, 4294901760
    %2942 = vmatpush1.msra.mxu0 %v2941
    %2943 = vmatprep.subr.mxu0 0.0
    %v2944 = vand.u32 %v1646, 4294901760
    %2945 = vmatpush1.msra.mxu0 %v2944
    %2946 = vmatprep.subr.mxu0 0.0
    %v2947 = vand.u32 %v1643, 4294901760
    %2948 = vmatpush1.msra.mxu0 %v2947
    %2949 = vmatprep.subr.mxu0 0.0
    %v2950 = vand.u32 %v1640, 4294901760
    %2951 = vmatpush1.msra.mxu0 %v2950
    %2952 = vmatprep.subr.mxu0 0.0
    %2953 = vmatpush2.msra.mxu0 0.0
    %2954 = vmatprep.subr.mxu0 0.0
    %2955 = vmatpush2.msra.mxu0 0.0
    %2956 = vmatprep.subr.mxu0 0.0
    %2957 = vmatpush2.msra.mxu0 0.0
    %2958 = vmatprep.subr.mxu0 0.0
    %2959 = vmatpush2.msra.mxu0 0.0
    %2960 = vmatprep.subr.mxu0 0.0
    %2961 = vmatpush2.msra.mxu0 0.0
    %2962 = vmatprep.subr.mxu0 0.0
    %2963 = vmatpush2.msra.mxu0 0.0
    %2964 = vmatprep.subr.mxu0 0.0
    %2965 = vmatpush2.msra.mxu0 0.0
    %2966 = vmatprep.subr.mxu0 0.0
    %2967 = vmatpush2.msra.mxu0 0.0
    %2968 = vmatprep.subr.mxu0 0.0
    %2969 = vmatpush2.msra.mxu0 0.0
    %2970 = vmatprep.subr.mxu0 0.0
    %2971 = vmatpush2.msra.mxu0 0.0
    %2972 = vmatprep.subr.mxu0 0.0
    %2973 = vmatpush2.msra.mxu0 0.0
    %2974 = vmatprep.subr.mxu0 0.0
    %2975 = vmatpush2.msra.mxu0 0.0
    %2976 = vmatprep.subr.mxu0 0.0
    %2977 = vmatpush2.msra.mxu0 0.0
    %2978 = vmatprep.subr.mxu0 0.0
    %2979 = vmatpush2.msra.mxu0 0.0
    %2980 = vmatprep.subr.mxu0 0.0
    %2981 = vmatpush2.msra.mxu0 0.0
    %2982 = vmatprep.subr.mxu0 0.0
    %2983 = vmatpush2.msra.mxu0 0.0
    %2984 = vmatprep.mubr.f32.mxu0 0.0
    %v2985 = vand.u32 %v76, 4294901760
    %v2986 = vsub.f32 %v76, %v2985
    %v2987 = vand.u32 %v2986, 4294901760
    %2988 = vmatmul.mubr.f32.gmra.mxu0 %v2987
    %v2989 = vpop.f32.mrf.mxu0
    %v2990 = vadd.f32 %v2901, %v2989
    %v2991 = vpop.f32.mrf.mxu0
    %2992 = vdwg.mxu0
    %2993 = vmatprep.subr.mxu0 0.0
    %v2994 = vand.u32 %v1685, 4294901760
    %v2995 = vsub.f32 %v1685, %v2994
    %v2996 = vand.u32 %v2995, 4294901760
    %2997 = vmatpush1.msra.mxu0 %v2996
    %2998 = vmatprep.subr.mxu0 0.0
    %v2999 = vand.u32 %v1682, 4294901760
    %v3000 = vsub.f32 %v1682, %v2999
    %v3001 = vand.u32 %v3000, 4294901760
    %3002 = vmatpush1.msra.mxu0 %v3001
    %3003 = vmatprep.subr.mxu0 0.0
    %v3004 = vand.u32 %v1679, 4294901760
    %v3005 = vsub.f32 %v1679, %v3004
    %v3006 = vand.u32 %v3005, 4294901760
    %3007 = vmatpush1.msra.mxu0 %v3006
    %3008 = vmatprep.subr.mxu0 0.0
    %v3009 = vand.u32 %v1676, 4294901760
    %v3010 = vsub.f32 %v1676, %v3009
    %v3011 = vand.u32 %v3010, 4294901760
    %3012 = vmatpush1.msra.mxu0 %v3011
    %3013 = vmatprep.subr.mxu0 0.0
    %v3014 = vand.u32 %v1673, 4294901760
    %v3015 = vsub.f32 %v1673, %v3014
    %v3016 = vand.u32 %v3015, 4294901760
    %3017 = vmatpush1.msra.mxu0 %v3016
    %3018 = vmatprep.subr.mxu0 0.0
    %v3019 = vand.u32 %v1670, 4294901760
    %v3020 = vsub.f32 %v1670, %v3019
    %v3021 = vand.u32 %v3020, 4294901760
    %3022 = vmatpush1.msra.mxu0 %v3021
    %3023 = vmatprep.subr.mxu0 0.0
    %v3024 = vand.u32 %v1667, 4294901760
    %v3025 = vsub.f32 %v1667, %v3024
    %v3026 = vand.u32 %v3025, 4294901760
    %3027 = vmatpush1.msra.mxu0 %v3026
    %3028 = vmatprep.subr.mxu0 0.0
    %v3029 = vand.u32 %v1664, 4294901760
    %v3030 = vsub.f32 %v1664, %v3029
    %v3031 = vand.u32 %v3030, 4294901760
    %3032 = vmatpush1.msra.mxu0 %v3031
    %3033 = vmatprep.subr.mxu0 0.0
    %v3034 = vand.u32 %v1661, 4294901760
    %v3035 = vsub.f32 %v1661, %v3034
    %v3036 = vand.u32 %v3035, 4294901760
    %3037 = vmatpush1.msra.mxu0 %v3036
    %3038 = vmatprep.subr.mxu0 0.0
    %v3039 = vand.u32 %v1658, 4294901760
    %v3040 = vsub.f32 %v1658, %v3039
    %v3041 = vand.u32 %v3040, 4294901760
    %3042 = vmatpush1.msra.mxu0 %v3041
    %3043 = vmatprep.subr.mxu0 0.0
    %v3044 = vand.u32 %v1655, 4294901760
    %v3045 = vsub.f32 %v1655, %v3044
    %v3046 = vand.u32 %v3045, 4294901760
    %3047 = vmatpush1.msra.mxu0 %v3046
    %3048 = vmatprep.subr.mxu0 0.0
    %v3049 = vand.u32 %v1652, 4294901760
    %v3050 = vsub.f32 %v1652, %v3049
    %v3051 = vand.u32 %v3050, 4294901760
    %3052 = vmatpush1.msra.mxu0 %v3051
    %3053 = vmatprep.subr.mxu0 0.0
    %v3054 = vand.u32 %v1649, 4294901760
    %v3055 = vsub.f32 %v1649, %v3054
    %v3056 = vand.u32 %v3055, 4294901760
    %3057 = vmatpush1.msra.mxu0 %v3056
    %3058 = vmatprep.subr.mxu0 0.0
    %v3059 = vand.u32 %v1646, 4294901760
    %v3060 = vsub.f32 %v1646, %v3059
    %v3061 = vand.u32 %v3060, 4294901760
    %3062 = vmatpush1.msra.mxu0 %v3061
    %3063 = vmatprep.subr.mxu0 0.0
    %v3064 = vand.u32 %v1643, 4294901760
    %v3065 = vsub.f32 %v1643, %v3064
    %v3066 = vand.u32 %v3065, 4294901760
    %3067 = vmatpush1.msra.mxu0 %v3066
    %3068 = vmatprep.subr.mxu0 0.0
    %v3069 = vand.u32 %v1640, 4294901760
    %v3070 = vsub.f32 %v1640, %v3069
    %v3071 = vand.u32 %v3070, 4294901760
    %3072 = vmatpush1.msra.mxu0 %v3071
    %3073 = vmatprep.subr.mxu0 0.0
    %3074 = vmatpush2.msra.mxu0 0.0
    %3075 = vmatprep.subr.mxu0 0.0
    %3076 = vmatpush2.msra.mxu0 0.0
    %3077 = vmatprep.subr.mxu0 0.0
    %3078 = vmatpush2.msra.mxu0 0.0
    %3079 = vmatprep.subr.mxu0 0.0
    %3080 = vmatpush2.msra.mxu0 0.0
    %3081 = vmatprep.subr.mxu0 0.0
    %3082 = vmatpush2.msra.mxu0 0.0
    %3083 = vmatprep.subr.mxu0 0.0
    %3084 = vmatpush2.msra.mxu0 0.0
    %3085 = vmatprep.subr.mxu0 0.0
    %3086 = vmatpush2.msra.mxu0 0.0
    %3087 = vmatprep.subr.mxu0 0.0
    %3088 = vmatpush2.msra.mxu0 0.0
    %3089 = vmatprep.subr.mxu0 0.0
    %3090 = vmatpush2.msra.mxu0 0.0
    %3091 = vmatprep.subr.mxu0 0.0
    %3092 = vmatpush2.msra.mxu0 0.0
    %3093 = vmatprep.subr.mxu0 0.0
    %3094 = vmatpush2.msra.mxu0 0.0
    %3095 = vmatprep.subr.mxu0 0.0
    %3096 = vmatpush2.msra.mxu0 0.0
    %3097 = vmatprep.subr.mxu0 0.0
    %3098 = vmatpush2.msra.mxu0 0.0
    %3099 = vmatprep.subr.mxu0 0.0
    %3100 = vmatpush2.msra.mxu0 0.0
    %3101 = vmatprep.subr.mxu0 0.0
    %3102 = vmatpush2.msra.mxu0 0.0
    %3103 = vmatprep.subr.mxu0 0.0
    %3104 = vmatpush2.msra.mxu0 0.0
    %3105 = vmatprep.mubr.f32.mxu0 0.0
    %v3106 = vand.u32 %v76, 4294901760
    %3107 = vmatmul.mubr.f32.gmra.mxu0 %v3106
    %v3108 = vpop.f32.mrf.mxu0
    %v3109 = vadd.f32 %v2990, %v3108
    %v3110 = vpop.f32.mrf.mxu0
    %3111 = vdwg.mxu0
    %3112 = vmatprep.subr.mxu0 0.0
    %v3113 = vand.u32 %v1685, 4294901760
    %3114 = vmatpush1.msra.mxu0 %v3113
    %3115 = vmatprep.subr.mxu0 0.0
    %v3116 = vand.u32 %v1682, 4294901760
    %3117 = vmatpush1.msra.mxu0 %v3116
    %3118 = vmatprep.subr.mxu0 0.0
    %v3119 = vand.u32 %v1679, 4294901760
    %3120 = vmatpush1.msra.mxu0 %v3119
    %3121 = vmatprep.subr.mxu0 0.0
    %v3122 = vand.u32 %v1676, 4294901760
    %3123 = vmatpush1.msra.mxu0 %v3122
    %3124 = vmatprep.subr.mxu0 0.0
    %v3125 = vand.u32 %v1673, 4294901760
    %3126 = vmatpush1.msra.mxu0 %v3125
    %3127 = vmatprep.subr.mxu0 0.0
    %v3128 = vand.u32 %v1670, 4294901760
    %3129 = vmatpush1.msra.mxu0 %v3128
    %3130 = vmatprep.subr.mxu0 0.0
    %v3131 = vand.u32 %v1667, 4294901760
    %3132 = vmatpush1.msra.mxu0 %v3131
    %3133 = vmatprep.subr.mxu0 0.0
    %v3134 = vand.u32 %v1664, 4294901760
    %3135 = vmatpush1.msra.mxu0 %v3134
    %3136 = vmatprep.subr.mxu0 0.0
    %v3137 = vand.u32 %v1661, 4294901760
    %3138 = vmatpush1.msra.mxu0 %v3137
    %3139 = vmatprep.subr.mxu0 0.0
    %v3140 = vand.u32 %v1658, 4294901760
    %3141 = vmatpush1.msra.mxu0 %v3140
    %3142 = vmatprep.subr.mxu0 0.0
    %v3143 = vand.u32 %v1655, 4294901760
    %3144 = vmatpush1.msra.mxu0 %v3143
    %3145 = vmatprep.subr.mxu0 0.0
    %v3146 = vand.u32 %v1652, 4294901760
    %3147 = vmatpush1.msra.mxu0 %v3146
    %3148 = vmatprep.subr.mxu0 0.0
    %v3149 = vand.u32 %v1649, 4294901760
    %3150 = vmatpush1.msra.mxu0 %v3149
    %3151 = vmatprep.subr.mxu0 0.0
    %v3152 = vand.u32 %v1646, 4294901760
    %3153 = vmatpush1.msra.mxu0 %v3152
    %3154 = vmatprep.subr.mxu0 0.0
    %v3155 = vand.u32 %v1643, 4294901760
    %3156 = vmatpush1.msra.mxu0 %v3155
    %3157 = vmatprep.subr.mxu0 0.0
    %v3158 = vand.u32 %v1640, 4294901760
    %3159 = vmatpush1.msra.mxu0 %v3158
    %3160 = vmatprep.subr.mxu0 0.0
    %3161 = vmatpush2.msra.mxu0 0.0
    %3162 = vmatprep.subr.mxu0 0.0
    %3163 = vmatpush2.msra.mxu0 0.0
    %3164 = vmatprep.subr.mxu0 0.0
    %3165 = vmatpush2.msra.mxu0 0.0
    %3166 = vmatprep.subr.mxu0 0.0
    %3167 = vmatpush2.msra.mxu0 0.0
    %3168 = vmatprep.subr.mxu0 0.0
    %3169 = vmatpush2.msra.mxu0 0.0
    %3170 = vmatprep.subr.mxu0 0.0
    %3171 = vmatpush2.msra.mxu0 0.0
    %3172 = vmatprep.subr.mxu0 0.0
    %3173 = vmatpush2.msra.mxu0 0.0
    %3174 = vmatprep.subr.mxu0 0.0
    %3175 = vmatpush2.msra.mxu0 0.0
    %3176 = vmatprep.subr.mxu0 0.0
    %3177 = vmatpush2.msra.mxu0 0.0
    %3178 = vmatprep.subr.mxu0 0.0
    %3179 = vmatpush2.msra.mxu0 0.0
    %3180 = vmatprep.subr.mxu0 0.0
    %3181 = vmatpush2.msra.mxu0 0.0
    %3182 = vmatprep.subr.mxu0 0.0
    %3183 = vmatpush2.msra.mxu0 0.0
    %3184 = vmatprep.subr.mxu0 0.0
    %3185 = vmatpush2.msra.mxu0 0.0
    %3186 = vmatprep.subr.mxu0 0.0
    %3187 = vmatpush2.msra.mxu0 0.0
    %3188 = vmatprep.subr.mxu0 0.0
    %3189 = vmatpush2.msra.mxu0 0.0
    %3190 = vmatprep.subr.mxu0 0.0
    %3191 = vmatpush2.msra.mxu0 0.0
    %3192 = vmatprep.mubr.f32.mxu0 0.0
    %v3193 = vand.u32 %v76, 4294901760
    %3194 = vmatmul.mubr.f32.gmra.mxu0 %v3193
    %v3195 = vpop.f32.mrf.mxu0
    %v3196 = vadd.f32 %v3109, %v3195
    %v3197 = vpop.f32.mrf.mxu0
    %3198 = vdwg.mxu0
    %v3199 = vadd.f32 %v993, %v2554
    %v3200 = vxor.u32 %v3199, 2147483648
    %v3201 = vmul.f32 %v3200, 1.442695
    %v3202 = vpow.pop %v3201
    %v3203 = vadd.f32 %v3202, 1.0
    %v3204 = vrcp.pop %v3203
    %v3205 = vmul.f32 1.0, %v3204
    %v3206 = vadd.f32 %v995, %v2556
    %v3207 = vxor.u32 %v3206, 2147483648
    %v3208 = vmul.f32 %v3207, 1.442695
    %v3209 = vpow.pop %v3208
    %v3210 = vadd.f32 %v3209, 1.0
    %v3211 = vrcp.pop %v3210
    %v3212 = vmul.f32 1.0, %v3211
    %v3213 = vmul.f32 %v3205, %v3196
    %v3214 = vadd.f32 %v1635, %v3213
    %v3215 = vtanh.pop %v3214
    %v3216 = vsub.f32 1.0, %v3212
    %v3217 = vmul.f32 %v3216, %v3215
    %v3218 = vmul.f32 %v3212, %v76
    %v3219 = vadd.f32 %v3217, %v3218
    %3220 = vst [vmem:[#allocation10] sm:$0xff] %v3219
    // Predicated region
    $region42: #{tpu_custom_call.1} parent=1 // pred_check
      _
    $region43: #{tpu_custom_call.1} parent=1 // pred_check_branch
      %3222 = sbr.rel (0) target = $region45
    $region44: #{tpu_custom_call.1} parent=1 // pred_region
      %s3224 = ssub.s32 128, 128
      %3225 = vsyncadd [#allocation4], %s3224
      %s3227 = sshll.u32 [#allocation10], 4
      %s3228 = int_to_ptr.vmem [resolvable:$true] %s3227
      %3230 = dma.vmem_to_hbm [thread:$0]  %s3228, 128, %s6, [#allocation4]
    $region45: #{tpu_custom_call.1} parent=1 // pred_fallthru
      _
    // Predicated region
    $region46: #{tpu_custom_call.1} parent=1 // pred_check
      _
    $region47: #{tpu_custom_call.1} parent=1 // pred_check_branch
      %3232 = sbr.rel (0) target = $region49
    $region48: #{tpu_custom_call.1} parent=1 // pred_region
      %3233 = dma.done [#allocation4], 128
    $region49: #{tpu_custom_call.1} parent=1 // pred_fallthru
      _
    %3234 = vsyncpa [#allocation3], 1
    %3235 = vsyncpa [#allocation6], 1
    %3236 = vsyncpa [#allocation9], 1
    %3237 = vsyncpa [#allocation4], 1

</llo_original>
